<compile_context>
chip_gen: v5e
topology: v5e:2x2
jax: 0.10.0
libtpu: 0.0.40
codegen_flags: <defaults>
</compile_context>

<pallas_src>
import functools
import numpy as np

import jax
import jax.numpy as jnp
from jax.experimental import pallas as pl
from jax.experimental.pallas import tpu as pltpu

EPS = 1e-05

AGGREGATORS = ("mean", "max", "min", "std")               # 4 aggregators
SCALERS = ("identity", "amplification", "attenuation")    # 3 scalers
READOUT_AGGREGATORS = ("sum", "mean", "max")              # 3 readouts
NUM_POST_BLOCKS = len(AGGREGATORS) * len(SCALERS) + 1     # 13 (PNALayer.posttrans in_dim / H)


# ---------------------------------------------------------------------------
# generation-aware VMEM budgeting & tile/chunk selection
# ---------------------------------------------------------------------------
def _vmem_budget_bytes():
    try:
        cap = int(pltpu.get_tpu_info().vmem_capacity_bytes)
    except Exception:
        cap = None
    if cap is None:                              # safe everywhere (v7x has 64 MiB / TC)
        return 44 * 1024 * 1024
    if cap >= 96 * 1024 * 1024:                  # v5e / v6e: 128 MiB physical
        return min(int(cap * 0.85), 110 * 1024 * 1024)
    return min(int(cap * 0.70), 46 * 1024 * 1024)  # v7x: 64 MiB per TensorCore


def _vmem_estimate(tile, chunk, H, ef_itemsize):
    edge = 3 * tile * chunk * H * ef_itemsize      # up-to-triple-buffered bf16 edge chunk
    temps = 3 * tile * chunk * H * 4               # f32 message tensor + elementwise headroom
    vecs = (2 * chunk * H + 12 * tile * H) * 4     # term_src chunk, term_dst/h/out, 4 accumulators
    weights = 2 * 6 * H * H * 2 + 2 * H * 4        # bf16 weights (w_ef + 5H posttrans) + bias
    return edge + temps + vecs + weights


def _divisors_desc(n, cap, mult):
    cands = set()
    if n <= cap:
        cands.add(n)                               # full extent is always legal
    d = (min(cap, n) // mult) * mult
    while d >= mult:
        if n % d == 0:
            cands.add(d)
        d -= mult
    if not cands:
        cands.add(n)
    return sorted(cands, reverse=True)


def _choose_tiles(N, H, ef_itemsize, budget):
    chunk_mult = 16 if ef_itemsize < 4 else 8      # bf16 sublane packing prefers 16
    tiles = _divisors_desc(N, 128, 8)
    chunks = _divisors_desc(N, 1024, chunk_mult)
    best = None
    for t in tiles:
        for c in chunks:                           # descending: first fit = largest chunk
            if _vmem_estimate(t, c, H, ef_itemsize) <= budget:
                cand = (t * c, c, t)
                if best is None or cand > best:
                    best = cand
                break
    if best is None:
        return tiles[-1], chunks[-1]
    return best[2], best[1]


# ---------------------------------------------------------------------------
# PNA layer kernel (pretrans + chunked aggregation + scalers + posttrans + residual)
# ---------------------------------------------------------------------------
def _pna_layer_kernel(h_ref, ts_ref, td_ref, ef_ref, wef_ref, wpost_ref, bpost_ref,
                      out_ref, sum_ref, sq_ref, max_ref, min_ref,
                      *, n_src, hidden, tile, chunk, fused_post):
    H = hidden
    c = pl.program_id(1)
    nc = pl.num_programs(1)

    @pl.when(c == 0)
    def _init():
        sum_ref[...] = jnp.zeros(sum_ref.shape, sum_ref.dtype)
        sq_ref[...] = jnp.zeros(sq_ref.shape, sq_ref.dtype)
        max_ref[...] = jnp.full(max_ref.shape, -jnp.inf, max_ref.dtype)
        min_ref[...] = jnp.full(min_ref.shape, jnp.inf, min_ref.dtype)

    # pretrans edge term: ONE bf16 MXU matmul over all tile*chunk messages of this step.
    e = jnp.dot(ef_ref[...].reshape(tile * chunk, H), wef_ref[...],
                preferred_element_type=jnp.float32)                 # [tile*chunk, H] f32
    e = e.reshape(tile, chunk, H)
    e = e + ts_ref[...][None, :, :] + td_ref[...][:, None, :]       # + src + dst terms

    # online aggregators over the neighbour axis (no full-N temporaries, no e*e slab)
    sum_ref[...] = sum_ref[...] + jnp.sum(e, axis=1)
    sq_ref[...] = sq_ref[...] + jnp.sum(e * e, axis=1)
    max_ref[...] = jnp.maximum(max_ref[...], jnp.max(e, axis=1))
    min_ref[...] = jnp.minimum(min_ref[...], jnp.min(e, axis=1))

    @pl.when(c == nc - 1)
    def _finalize():
        inv_d = 1.0 / float(n_src)                                  # dense graph: in-degree = N
        mean = sum_ref[...] * inv_d
        ex2 = sq_ref[...] * inv_d
        std = jnp.sqrt(jnp.maximum(ex2 - mean * mean, 0.0) + EPS)
        mx = max_ref[...]
        mn = min_ref[...]
        h_dst = h_ref[...].astype(jnp.float32)

        bf = jnp.bfloat16
        if fused_post:
            # single [tile, 5H] x [5H, H] MXU call (lane-aligned concat, H % 128 == 0)
            x = jnp.concatenate(
                [h_dst.astype(bf), mean.astype(bf), mx.astype(bf),
                 mn.astype(bf), std.astype(bf)], axis=-1)
            out = jnp.dot(x, wpost_ref[...], preferred_element_type=jnp.float32)
        else:
            out = jnp.dot(h_dst.astype(bf), wpost_ref[0 * H:1 * H, :],
                          preferred_element_type=jnp.float32)
            out = out + jnp.dot(mean.astype(bf), wpost_ref[1 * H:2 * H, :],
                                preferred_element_type=jnp.float32)
            out = out + jnp.dot(mx.astype(bf), wpost_ref[2 * H:3 * H, :],
                                preferred_element_type=jnp.float32)
            out = out + jnp.dot(mn.astype(bf), wpost_ref[3 * H:4 * H, :],
                                preferred_element_type=jnp.float32)
            out = out + jnp.dot(std.astype(bf), wpost_ref[4 * H:5 * H, :],
                                preferred_element_type=jnp.float32)

        # bias + residual in f32 (in_dim == out_dim)
        out_ref[...] = (out + bpost_ref[...] + h_dst).astype(out_ref.dtype)


def _prep_layer_weights(w_pre, w_post, N, H, avg_d_log):
    """Split pretrans weight and fold the (constant) degree scalers into posttrans."""
    w_src = w_pre[0:H, :]
    w_dst = w_pre[H:2 * H, :]
    w_ef = w_pre[2 * H:3 * H, :].astype(jnp.bfloat16)
    nA = len(AGGREGATORS)
    log_d1 = float(np.log(N + 1))
    scales = (1.0, log_d1 / avg_d_log, avg_d_log / log_d1)  # identity, amplification, attenuation
    blocks = [w_post[0:H, :].astype(jnp.float32)]
    for a in range(nA):
        wb = jnp.zeros((H, H), jnp.float32)
        for s, sc in enumerate(scales):
            k = 1 + s * nA + a                    # scaler-major, aggregator-minor concat order
            wb = wb + sc * w_post[k * H:(k + 1) * H, :].astype(jnp.float32)
        blocks.append(wb)
    w_post5 = jnp.concatenate(blocks, axis=0).astype(jnp.bfloat16)   # [5H, H]
    return w_src, w_dst, w_ef, w_post5


def pna_layer(h, ef3, w_pre, b_pre, w_post, b_post, *, avg_d_log=1.0, tile=None, chunk=None):
    N, H = h.shape
    assert ef3.shape == (N, N, H)
    assert N % 8 == 0, "node count must be a multiple of 8 (sublane tiling)"

    w_src, w_dst, w_ef, w_post5 = _prep_layer_weights(w_pre, w_post, N, H, avg_d_log)

    # hoist both pretrans node terms out of the kernel (identical for every grid step)
    hf = h.astype(jnp.float32)
    term_src = jnp.dot(hf, w_src, preferred_element_type=jnp.float32) + b_pre   # [N, H]
    term_dst = jnp.dot(hf, w_dst, preferred_element_type=jnp.float32)           # [N, H]

    budget = _vmem_budget_bytes()
    if tile is None or chunk is None:
        t_auto, c_auto = _choose_tiles(N, H, ef3.dtype.itemsize, budget)
        tile = tile if tile is not None else t_auto
        chunk = chunk if chunk is not None else c_auto
    assert N % tile == 0 and N % chunk == 0
    num_tiles, num_chunks = N // tile, N // chunk
    fused_post = (H % 128 == 0)                      # lane-aligned concat -> single MXU call

    # dominant HBM stream: deepen its pipeline once the reduction axis is long enough
    if num_chunks >= 3:
        ef_spec = pl.BlockSpec((tile, chunk, H), lambda i, c: (i, c, 0),
                               pipeline_mode=pl.Buffered(3))
    else:
        ef_spec = pl.BlockSpec((tile, chunk, H), lambda i, c: (i, c, 0))

    kernel = functools.partial(_pna_layer_kernel, n_src=N, hidden=H,
                               tile=tile, chunk=chunk, fused_post=fused_post)

    return pl.pallas_call(
        kernel,
        out_shape=jax.ShapeDtypeStruct((N, H), h.dtype),
        grid=(num_tiles, num_chunks),
        in_specs=[
            pl.BlockSpec((tile, H), lambda i, c: (i, 0)),        # destination features (residual)
            pl.BlockSpec((chunk, H), lambda i, c: (c, 0)),       # hoisted source term (chunk)
            pl.BlockSpec((tile, H), lambda i, c: (i, 0)),        # hoisted destination term
            ef_spec,                                             # edge features (bf16 chunk)
            pl.BlockSpec((H, H), lambda i, c: (0, 0)),           # w_ef (bf16)
            pl.BlockSpec((5 * H, H), lambda i, c: (0, 0)),       # fused posttrans weight (bf16)
            pl.BlockSpec((1, H), lambda i, c: (0, 0)),           # posttrans bias
        ],
        out_specs=pl.BlockSpec((tile, H), lambda i, c: (i, 0)),
        scratch_shapes=[pltpu.VMEM((tile, H), jnp.float32),      # running sum
                        pltpu.VMEM((tile, H), jnp.float32),      # running sum of squares
                        pltpu.VMEM((tile, H), jnp.float32),      # running max
                        pltpu.VMEM((tile, H), jnp.float32)],     # running min
        compiler_params=pltpu.CompilerParams(
            dimension_semantics=("parallel", "arbitrary"),       # dst tiles parallel, chunks reduce
            vmem_limit_bytes=int(budget)),
    )(h, term_src, term_dst, ef3, w_ef, w_post5, b_post)


# ---------------------------------------------------------------------------
# Graph readout kernel (dgl.readout_nodes over a single graph) — single store
# ---------------------------------------------------------------------------
def _readout_kernel(h_ref, out_ref, *, n_nodes):
    h = h_ref[...].astype(jnp.float32)
    s = jnp.sum(h, axis=0, keepdims=True)               # [1, H]
    m = s * (1.0 / n_nodes)
    mx = jnp.max(h, axis=0, keepdims=True)
    row = jax.lax.broadcasted_iota(jnp.int32, (len(READOUT_AGGREGATORS), h.shape[1]), 0)
    out_ref[...] = jnp.where(row == 0, s, jnp.where(row == 1, m, mx))   # one [3, H] store


def readout(h):
    N, H = h.shape
    R = len(READOUT_AGGREGATORS)
    ro = pl.pallas_call(
        functools.partial(_readout_kernel, n_nodes=N),
        out_shape=jax.ShapeDtypeStruct((R, H), jnp.float32),
        grid=(1,),
        in_specs=[pl.BlockSpec((N, H), lambda i: (0, 0))],
        out_specs=pl.BlockSpec((R, H), lambda i: (0, 0)),
    )(h)
    # rows are [sum, mean, max]; row-major flatten == torch.cat(readouts, dim=-1)
    return ro.reshape(1, R * H)


# ---------------------------------------------------------------------------
# Plain-JAX glue: OGB-style Atom/Bond encoders (sum of per-feature embeddings)
# ---------------------------------------------------------------------------
def encode(int_feats, tables):
    # int_feats: [..., F] int32, tables: [F, V, H] -> sum_f tables[f][int_feats[..., f]]
    F = int_feats.shape[-1]
    out = tables[0][int_feats[..., 0]]
    for f in range(1, F):
        out = out + tables[f][int_feats[..., f]]
    return out.astype(jnp.float32)


def init_params(key, H, depth, f_atom, v_atom, f_bond, v_bond):
    keys = jax.random.split(key, 2 + depth)
    params = {
        "atom": 0.1 * jax.random.normal(keys[0], (f_atom, v_atom, H), jnp.float32),
        "bond": 0.1 * jax.random.normal(keys[1], (f_bond, v_bond, H), jnp.float32),
        "layers": [],
    }
    for d in range(depth):
        k1, k2 = jax.random.split(keys[2 + d], 2)
        params["layers"].append({
            "w_pre": jax.random.normal(k1, (3 * H, H), jnp.float32) / np.sqrt(3 * H),
            "b_pre": jnp.zeros((1, H), jnp.float32),
            "w_post": jax.random.normal(k2, (NUM_POST_BLOCKS * H, H), jnp.float32)
                      / np.sqrt(NUM_POST_BLOCKS * H),
            "b_post": jnp.zeros((1, H), jnp.float32),
        })
    return params


def pna_forward(node_ints, edge_ints, params):
    # PNAGNN: encode nodes / edges once, then propagation_depth PNA layers.
    h = encode(node_ints, params["atom"])                    # [N, H] f32
    ef = encode(edge_ints, params["bond"])                   # [N, N, H] f32
    # the dense edge tensor is the dominant HBM traffic -> stream it in bf16
    ef3 = ef.astype(jnp.bfloat16)
    for lp in params["layers"]:
        h = pna_layer(h, ef3, lp["w_pre"], lp["b_pre"], lp["w_post"], lp["b_post"])
    # PNA.forward returns the concatenated graph readouts (self.output MLP is
    # constructed in __init__ but never applied in the reference forward).
    return readout(h)


# ---------------------------------------------------------------------------
# Pure-JAX reference for one PNA layer (correctness check)
# ---------------------------------------------------------------------------
def _pna_layer_ref(h, ef, w_pre, b_pre, w_post, b_post, avg_d_log=1.0):
    N, H = h.shape
    src = jnp.broadcast_to(h[None, :, :], (N, N, H))         # e[i, j]: src = h[j]
    dst = jnp.broadcast_to(h[:, None, :], (N, N, H))         #          dst = h[i]
    z = jnp.concatenate([src, dst, ef], axis=-1)              # [N, N, 3H]
    e = jnp.einsum("ijk,kl->ijl", z, w_pre) + b_pre            # pretrans (single Linear)
    mean = jnp.mean(e, axis=1)
    mx = jnp.max(e, axis=1)
    mn = jnp.min(e, axis=1)
    var = jnp.maximum(jnp.mean(e * e, axis=1) - mean * mean, 0.0)
    std = jnp.sqrt(var + EPS)
    agg = jnp.concatenate([mean, mx, mn, std], axis=-1)        # aggregator-concat [N, 4H]
    logd = float(np.log(N + 1))
    scaled = jnp.concatenate([agg, agg * (logd / avg_d_log), agg * (avg_d_log / logd)], axis=-1)
    x = jnp.concatenate([h, scaled], axis=-1)                  # [N, 13H]
    return jnp.dot(x, w_post) + b_post + h                     # posttrans + residual


if __name__ == "__main__":
    N, H = 32, 128         # nodes, hidden_dim
    DEPTH = 5              # propagation_depth
    F_ATOM, V_ATOM = 4, 16
    F_BOND, V_BOND = 3, 8

    key = jax.random.PRNGKey(0)
    kp, kn, ke = jax.random.split(key, 3)
    params = init_params(kp, H, DEPTH, F_ATOM, V_ATOM, F_BOND, V_BOND)
    node_ints = jax.random.randint(kn, (N, F_ATOM), 0, V_ATOM, dtype=jnp.int32)
    edge_ints = jax.random.randint(ke, (N, N, F_BOND), 0, V_BOND, dtype=jnp.int32)

    # full forward pass
    out = jax.jit(pna_forward)(node_ints, edge_ints, params)
    out = jax.block_until_ready(out)
    assert out.shape == (1, H * len(READOUT_AGGREGATORS)), out.shape
    assert bool(jnp.all(jnp.isfinite(out)))

    # correctness: kernel vs pure-JAX reference on layer 0, and the chunked
    # (multi-step reduction grid) path vs the single-chunk path.
    lp = params["layers"][0]
    h0 = encode(node_ints, params["atom"])
    ef0 = encode(edge_ints, params["bond"]).astype(jnp.bfloat16)
    ref0 = _pna_layer_ref(h0, ef0.astype(jnp.float32), lp["w_pre"], lp["b_pre"],
                          lp["w_post"], lp["b_post"])
    got_full = pna_layer(h0, ef0, lp["w_pre"], lp["b_pre"], lp["w_post"], lp["b_post"],
                         tile=N, chunk=N)
    got_chunk = pna_layer(h0, ef0, lp["w_pre"], lp["b_pre"], lp["w_post"], lp["b_post"],
                          tile=8, chunk=16)
    jax.block_until_ready((got_full, got_chunk))
    scale = float(jnp.max(jnp.abs(ref0))) + 1.0
    assert float(jnp.max(jnp.abs(got_full - ref0))) < 0.05 * scale
    assert float(jnp.max(jnp.abs(got_chunk - got_full))) < 0.01 * scale

    # small-H path (unfused posttrans branch, H not a multiple of 128)
    Hs = 32
    k1, k2, k3, k4 = jax.random.split(jax.random.PRNGKey(1), 4)
    hs = 0.2 * jax.random.normal(k1, (N, Hs), jnp.float32)
    efs = (0.2 * jax.random.normal(k2, (N, N, Hs), jnp.float32)).astype(jnp.bfloat16)
    wps = jax.random.normal(k3, (3 * Hs, Hs), jnp.float32) / np.sqrt(3 * Hs)
    wos = jax.random.normal(k4, (NUM_POST_BLOCKS * Hs, Hs), jnp.float32) / np.sqrt(NUM_POST_BLOCKS * Hs)
    bps = jnp.zeros((1, Hs), jnp.float32)
    bos = jnp.zeros((1, Hs), jnp.float32)
    ref_s = _pna_layer_ref(hs, efs.astype(jnp.float32), wps, bps, wos, bos)
    got_s = pna_layer(hs, efs, wps, bps, wos, bos, tile=8, chunk=16)
    jax.block_until_ready(got_s)
    scale_s = float(jnp.max(jnp.abs(ref_s))) + 1.0
    assert float(jnp.max(jnp.abs(got_s - ref_s))) < 0.05 * scale_s

    print("KERNEL_OK")
</pallas_src>

<mosaic_0001>
module attributes {stable_mosaic.version = 11 : i64} {
  func.func @_readout_kernel(%arg0: i32, %arg1: memref<32x128xf32, #tpu.memory_space<vmem>>, %arg2: memref<3x128xf32, #tpu.memory_space<vmem>>) attributes {dimension_semantics = [#tpu.dimension_semantics<arbitrary>], iteration_bounds = array<i64: 1>, scalar_prefetch = 0 : i64, scratch_operands = 0 : i64, tpu.core_type = #tpu.core_type<tc>, window_params = [{pipeline_mode = #tpu.pipeline_mode<synchronous>, transform_indices = @transform_0, window_bounds = array<i64: 32, 128>}, {pipeline_mode = #tpu.pipeline_mode<synchronous>, transform_indices = @transform_1, window_bounds = array<i64: 3, 128>}]} {
    %c0 = arith.constant 0 : index
    %c0_0 = arith.constant 0 : index
    %0 = vector.load %arg1[%c0, %c0_0] : memref<32x128xf32, #tpu.memory_space<vmem>>, vector<32x128xf32>
    %cst = arith.constant dense<0.000000e+00> : vector<128xf32>
    %1 = vector.multi_reduction <add>, %0, %cst [0] : vector<32x128xf32> to vector<128xf32>
    %2 = vector.shape_cast %1 : vector<128xf32> to vector<1x128xf32>
    %cst_1 = arith.constant 3.125000e-02 : f32
    %3 = vector.broadcast %cst_1 : f32 to vector<1x128xf32>
    %4 = arith.mulf %2, %3 : vector<1x128xf32>
    %cst_2 = arith.constant dense<0xFF800000> : vector<128xf32>
    %5 = vector.multi_reduction <maximumf>, %0, %cst_2 [0] : vector<32x128xf32> to vector<128xf32>
    %6 = vector.shape_cast %5 : vector<128xf32> to vector<1x128xf32>
    %7 = tpu.iota {dimensions = array<i32: 0>} : vector<3x128xi32>
    %c0_i32 = arith.constant 0 : i32
    %8 = vector.broadcast %c0_i32 : i32 to vector<3x128xi32>
    %9 = arith.cmpi eq, %7, %8 : vector<3x128xi32>
    %c1_i32 = arith.constant 1 : i32
    %10 = vector.broadcast %c1_i32 : i32 to vector<3x128xi32>
    %11 = arith.cmpi eq, %7, %10 : vector<3x128xi32>
    %12 = vector.shape_cast %4 : vector<1x128xf32> to vector<1x128xf32>
    %13 = vector.broadcast %12 : vector<1x128xf32> to vector<3x128xf32>
    %14 = vector.shape_cast %6 : vector<1x128xf32> to vector<1x128xf32>
    %15 = vector.broadcast %14 : vector<1x128xf32> to vector<3x128xf32>
    %16 = arith.select %11, %13, %15 : vector<3x128xi1>, vector<3x128xf32>
    %17 = vector.shape_cast %2 : vector<1x128xf32> to vector<1x128xf32>
    %18 = vector.broadcast %17 : vector<1x128xf32> to vector<3x128xf32>
    %19 = arith.select %9, %18, %16 : vector<3x128xi1>, vector<3x128xf32>
    %c0_3 = arith.constant 0 : index
    %c0_4 = arith.constant 0 : index
    %20 = vector.load %arg2[%c0_3, %c0_4] : memref<3x128xf32, #tpu.memory_space<vmem>>, vector<3x128xf32>
    tpu.vector_store %arg2[%c0_3, %c0_4], %19 {strides = array<i32>} : memref<3x128xf32, #tpu.memory_space<vmem>>, vector<3x128xf32>,
    return
  }
  func.func @transform_0(%arg0: i32) -> (i32, i32) {
    %c0_i32 = arith.constant 0 : i32
    %c0_i32_0 = arith.constant 0 : i32
    %c0_i32_1 = arith.constant 0 : i32
    return %c0_i32, %c0_i32_0 : i32, i32
  }
  func.func @transform_1(%arg0: i32) -> (i32, i32) {
    %c0_i32 = arith.constant 0 : i32
    %c0_i32_0 = arith.constant 0 : i32
    %c0_i32_1 = arith.constant 0 : i32
    return %c0_i32, %c0_i32_0 : i32, i32
  }
}

module attributes {stable_mosaic.version = 11 : i64} {
  func.func @_pna_layer_kernel(%arg0: i32, %arg1: i32, %arg2: memref<32x128xf32, #tpu.memory_space<vmem>>, %arg3: memref<32x128xf32, #tpu.memory_space<vmem>>, %arg4: memref<32x128xf32, #tpu.memory_space<vmem>>, %arg5: memref<32x32x128xbf16, #tpu.memory_space<vmem>>, %arg6: memref<128x128xbf16, #tpu.memory_space<vmem>>, %arg7: memref<640x128xbf16, #tpu.memory_space<vmem>>, %arg8: memref<1x128xf32, #tpu.memory_space<vmem>>, %arg9: memref<32x128xf32, #tpu.memory_space<vmem>>, %arg10: memref<32x128xf32, #tpu.memory_space<vmem>>, %arg11: memref<32x128xf32, #tpu.memory_space<vmem>>, %arg12: memref<32x128xf32, #tpu.memory_space<vmem>>, %arg13: memref<32x128xf32, #tpu.memory_space<vmem>>) attributes {dimension_semantics = [#tpu.dimension_semantics<parallel>, #tpu.dimension_semantics<arbitrary>], iteration_bounds = array<i64: 1, 1>, scalar_prefetch = 0 : i64, scratch_operands = 4 : i64, tpu.core_type = #tpu.core_type<tc>, window_params = [{transform_indices = @transform_0, window_bounds = array<i64: 32, 128>}, {transform_indices = @transform_1, window_bounds = array<i64: 32, 128>}, {transform_indices = @transform_2, window_bounds = array<i64: 32, 128>}, {transform_indices = @transform_3, window_bounds = array<i64: 32, 32, 128>}, {pipeline_mode = #tpu.pipeline_mode<synchronous>, transform_indices = @transform_4, window_bounds = array<i64: 128, 128>}, {pipeline_mode = #tpu.pipeline_mode<synchronous>, transform_indices = @transform_5, window_bounds = array<i64: 640, 128>}, {pipeline_mode = #tpu.pipeline_mode<synchronous>, transform_indices = @transform_6, window_bounds = array<i64: 1, 128>}, {transform_indices = @transform_7, window_bounds = array<i64: 32, 128>}]} {
    %c0_i32 = arith.constant 0 : i32
    %0 = arith.cmpi eq, %arg1, %c0_i32 : i32
    %1 = arith.extui %0 : i1 to i32
    %c0_i32_0 = arith.constant 0 : i32
    %2 = arith.cmpi ne, %1, %c0_i32_0 : i32
    scf.if %2 {
      %cst_31 = arith.constant 0.000000e+00 : f32
      %36 = vector.broadcast %cst_31 : f32 to vector<32x128xf32>
      %c0_32 = arith.constant 0 : index
      %c0_33 = arith.constant 0 : index
      %37 = vector.load %arg10[%c0_32, %c0_33] : memref<32x128xf32, #tpu.memory_space<vmem>>, vector<32x128xf32>
      tpu.vector_store %arg10[%c0_32, %c0_33], %36 {strides = array<i32>} : memref<32x128xf32, #tpu.memory_space<vmem>>, vector<32x128xf32>,
      %cst_34 = arith.constant 0.000000e+00 : f32
      %38 = vector.broadcast %cst_34 : f32 to vector<32x128xf32>
      %c0_35 = arith.constant 0 : index
      %c0_36 = arith.constant 0 : index
      %39 = vector.load %arg11[%c0_35, %c0_36] : memref<32x128xf32, #tpu.memory_space<vmem>>, vector<32x128xf32>
      tpu.vector_store %arg11[%c0_35, %c0_36], %38 {strides = array<i32>} : memref<32x128xf32, #tpu.memory_space<vmem>>, vector<32x128xf32>,
      %cst_37 = arith.constant 0xFF800000 : f32
      %40 = vector.broadcast %cst_37 : f32 to vector<32x128xf32>
      %c0_38 = arith.constant 0 : index
      %c0_39 = arith.constant 0 : index
      %41 = vector.load %arg12[%c0_38, %c0_39] : memref<32x128xf32, #tpu.memory_space<vmem>>, vector<32x128xf32>
      tpu.vector_store %arg12[%c0_38, %c0_39], %40 {strides = array<i32>} : memref<32x128xf32, #tpu.memory_space<vmem>>, vector<32x128xf32>,
      %cst_40 = arith.constant 0x7F800000 : f32
      %42 = vector.broadcast %cst_40 : f32 to vector<32x128xf32>
      %c0_41 = arith.constant 0 : index
      %c0_42 = arith.constant 0 : index
      %43 = vector.load %arg13[%c0_41, %c0_42] : memref<32x128xf32, #tpu.memory_space<vmem>>, vector<32x128xf32>
      tpu.vector_store %arg13[%c0_41, %c0_42], %42 {strides = array<i32>} : memref<32x128xf32, #tpu.memory_space<vmem>>, vector<32x128xf32>,
    } else {
    }
    %c0 = arith.constant 0 : index
    %c0_1 = arith.constant 0 : index
    %c0_2 = arith.constant 0 : index
    %3 = vector.load %arg5[%c0, %c0_1, %c0_2] : memref<32x32x128xbf16, #tpu.memory_space<vmem>>, vector<32x32x128xbf16>
    %4 = vector.shape_cast %3 : vector<32x32x128xbf16> to vector<1024x128xbf16>
    %c0_3 = arith.constant 0 : index
    %c0_4 = arith.constant 0 : index
    %5 = vector.load %arg6[%c0_3, %c0_4] : memref<128x128xbf16, #tpu.memory_space<vmem>>, vector<128x128xbf16>
    %cst = arith.constant dense<0.000000e+00> : vector<1024x128xf32>
    %6 = tpu.matmul %4, %5, %cst {dimension_numbers = #tpu.dot_dimension_numbers<[1], [0], [0], [1], [0, 0, 1, 1], [], []>} : vector<1024x128xbf16>, vector<128x128xbf16>, vector<1024x128xf32> -> vector<1024x128xf32>
    %7 = vector.shape_cast %6 : vector<1024x128xf32> to vector<32x32x128xf32>
    %c0_5 = arith.constant 0 : index
    %c0_6 = arith.constant 0 : index
    %8 = vector.load %arg3[%c0_5, %c0_6] : memref<32x128xf32, #tpu.memory_space<vmem>>, vector<32x128xf32>
    %9 = vector.shape_cast %8 : vector<32x128xf32> to vector<1x32x128xf32>
    %10 = vector.broadcast %9 : vector<1x32x128xf32> to vector<32x32x128xf32>
    %11 = arith.addf %7, %10 : vector<32x32x128xf32>
    %c0_7 = arith.constant 0 : index
    %c0_8 = arith.constant 0 : index
    %12 = vector.load %arg4[%c0_7, %c0_8] : memref<32x128xf32, #tpu.memory_space<vmem>>, vector<32x128xf32>
    %13 = vector.shape_cast %12 : vector<32x128xf32> to vector<32x1x128xf32>
    %14 = vector.broadcast %13 : vector<32x1x128xf32> to vector<32x32x128xf32>
    %15 = arith.addf %11, %14 : vector<32x32x128xf32>
    %c0_9 = arith.constant 0 : index
    %c0_10 = arith.constant 0 : index
    %16 = vector.load %arg10[%c0_9, %c0_10] : memref<32x128xf32, #tpu.memory_space<vmem>>, vector<32x128xf32>
    %cst_11 = arith.constant dense<0.000000e+00> : vector<32x128xf32>
    %17 = vector.multi_reduction <add>, %15, %cst_11 [1] : vector<32x32x128xf32> to vector<32x128xf32>
    %18 = arith.addf %16, %17 : vector<32x128xf32>
    %c0_12 = arith.constant 0 : index
    %c0_13 = arith.constant 0 : index
    %19 = vector.load %arg10[%c0_12, %c0_13] : memref<32x128xf32, #tpu.memory_space<vmem>>, vector<32x128xf32>
    tpu.vector_store %arg10[%c0_12, %c0_13], %18 {strides = array<i32>} : memref<32x128xf32, #tpu.memory_space<vmem>>, vector<32x128xf32>,
    %c0_14 = arith.constant 0 : index
    %c0_15 = arith.constant 0 : index
    %20 = vector.load %arg11[%c0_14, %c0_15] : memref<32x128xf32, #tpu.memory_space<vmem>>, vector<32x128xf32>
    %21 = arith.mulf %15, %15 : vector<32x32x128xf32>
    %cst_16 = arith.constant dense<0.000000e+00> : vector<32x128xf32>
    %22 = vector.multi_reduction <add>, %21, %cst_16 [1] : vector<32x32x128xf32> to vector<32x128xf32>
    %23 = arith.addf %20, %22 : vector<32x128xf32>
    %c0_17 = arith.constant 0 : index
    %c0_18 = arith.constant 0 : index
    %24 = vector.load %arg11[%c0_17, %c0_18] : memref<32x128xf32, #tpu.memory_space<vmem>>, vector<32x128xf32>
    tpu.vector_store %arg11[%c0_17, %c0_18], %23 {strides = array<i32>} : memref<32x128xf32, #tpu.memory_space<vmem>>, vector<32x128xf32>,
    %c0_19 = arith.constant 0 : index
    %c0_20 = arith.constant 0 : index
    %25 = vector.load %arg12[%c0_19, %c0_20] : memref<32x128xf32, #tpu.memory_space<vmem>>, vector<32x128xf32>
    %cst_21 = arith.constant dense<0xFF800000> : vector<32x128xf32>
    %26 = vector.multi_reduction <maximumf>, %15, %cst_21 [1] : vector<32x32x128xf32> to vector<32x128xf32>
    %27 = arith.maximumf %25, %26 : vector<32x128xf32>
    %c0_22 = arith.constant 0 : index
    %c0_23 = arith.constant 0 : index
    %28 = vector.load %arg12[%c0_22, %c0_23] : memref<32x128xf32, #tpu.memory_space<vmem>>, vector<32x128xf32>
    tpu.vector_store %arg12[%c0_22, %c0_23], %27 {strides = array<i32>} : memref<32x128xf32, #tpu.memory_space<vmem>>, vector<32x128xf32>,
    %c0_24 = arith.constant 0 : index
    %c0_25 = arith.constant 0 : index
    %29 = vector.load %arg13[%c0_24, %c0_25] : memref<32x128xf32, #tpu.memory_space<vmem>>, vector<32x128xf32>
    %cst_26 = arith.constant dense<0x7F800000> : vector<32x128xf32>
    %30 = vector.multi_reduction <minimumf>, %15, %cst_26 [1] : vector<32x32x128xf32> to vector<32x128xf32>
    %31 = arith.minimumf %29, %30 : vector<32x128xf32>
    %c0_27 = arith.constant 0 : index
    %c0_28 = arith.constant 0 : index
    %32 = vector.load %arg13[%c0_27, %c0_28] : memref<32x128xf32, #tpu.memory_space<vmem>>, vector<32x128xf32>
    tpu.vector_store %arg13[%c0_27, %c0_28], %31 {strides = array<i32>} : memref<32x128xf32, #tpu.memory_space<vmem>>, vector<32x128xf32>,
    %c0_i32_29 = arith.constant 0 : i32
    %33 = arith.cmpi eq, %arg1, %c0_i32_29 : i32
    %34 = arith.extui %33 : i1 to i32
    %c0_i32_30 = arith.constant 0 : i32
    %35 = arith.cmpi ne, %34, %c0_i32_30 : i32
    scf.if %35 {
      %c0_31 = arith.constant 0 : index
      %c0_32 = arith.constant 0 : index
      %36 = vector.load %arg10[%c0_31, %c0_32] : memref<32x128xf32, #tpu.memory_space<vmem>>, vector<32x128xf32>
      %cst_33 = arith.constant 3.125000e-02 : f32
      %37 = vector.broadcast %cst_33 : f32 to vector<32x128xf32>
      %38 = arith.mulf %36, %37 : vector<32x128xf32>
      %c0_34 = arith.constant 0 : index
      %c0_35 = arith.constant 0 : index
      %39 = vector.load %arg11[%c0_34, %c0_35] : memref<32x128xf32, #tpu.memory_space<vmem>>, vector<32x128xf32>
      %cst_36 = arith.constant 3.125000e-02 : f32
      %40 = vector.broadcast %cst_36 : f32 to vector<32x128xf32>
      %41 = arith.mulf %39, %40 : vector<32x128xf32>
      %42 = arith.mulf %38, %38 : vector<32x128xf32>
      %43 = arith.subf %41, %42 : vector<32x128xf32>
      %cst_37 = arith.constant 0.000000e+00 : f32
      %44 = vector.broadcast %cst_37 : f32 to vector<32x128xf32>
      %45 = arith.maximumf %43, %44 : vector<32x128xf32>
      %cst_38 = arith.constant 9.99999974E-6 : f32
      %46 = vector.broadcast %cst_38 : f32 to vector<32x128xf32>
      %47 = arith.addf %45, %46 : vector<32x128xf32>
      %48 = math.sqrt %47 : vector<32x128xf32>
      %c0_39 = arith.constant 0 : index
      %c0_40 = arith.constant 0 : index
      %49 = vector.load %arg12[%c0_39, %c0_40] : memref<32x128xf32, #tpu.memory_space<vmem>>, vector<32x128xf32>
      %c0_41 = arith.constant 0 : index
      %c0_42 = arith.constant 0 : index
      %50 = vector.load %arg13[%c0_41, %c0_42] : memref<32x128xf32, #tpu.memory_space<vmem>>, vector<32x128xf32>
      %c0_43 = arith.constant 0 : index
      %c0_44 = arith.constant 0 : index
      %51 = vector.load %arg2[%c0_43, %c0_44] : memref<32x128xf32, #tpu.memory_space<vmem>>, vector<32x128xf32>
      %52 = arith.truncf %51 : vector<32x128xf32> to vector<32x128xbf16>
      %53 = arith.truncf %38 : vector<32x128xf32> to vector<32x128xbf16>
      %54 = arith.truncf %49 : vector<32x128xf32> to vector<32x128xbf16>
      %55 = arith.truncf %50 : vector<32x128xf32> to vector<32x128xbf16>
      %56 = arith.truncf %48 : vector<32x128xf32> to vector<32x128xbf16>
      %57 = tpu.concatenate %52, %53, %54, %55, %56 in 1 : vector<32x128xbf16>, vector<32x128xbf16>, vector<32x128xbf16>, vector<32x128xbf16>, vector<32x128xbf16> -> vector<32x640xbf16>
      %c0_45 = arith.constant 0 : index
      %c0_46 = arith.constant 0 : index
      %58 = vector.load %arg7[%c0_45, %c0_46] : memref<640x128xbf16, #tpu.memory_space<vmem>>, vector<640x128xbf16>
      %cst_47 = arith.constant dense<0.000000e+00> : vector<32x128xf32>
      %59 = tpu.matmul %57, %58, %cst_47 {dimension_numbers = #tpu.dot_dimension_numbers<[1], [0], [0], [1], [0, 0, 1, 1], [], []>} : vector<32x640xbf16>, vector<640x128xbf16>, vector<32x128xf32> -> vector<32x128xf32>
      %c0_48 = arith.constant 0 : index
      %c0_49 = arith.constant 0 : index
      %60 = vector.load %arg8[%c0_48, %c0_49] : memref<1x128xf32, #tpu.memory_space<vmem>>, vector<1x128xf32>
      %61 = vector.broadcast %60 : vector<1x128xf32> to vector<32x128xf32>
      %62 = arith.addf %59, %61 : vector<32x128xf32>
      %63 = arith.addf %62, %51 : vector<32x128xf32>
      %c0_50 = arith.constant 0 : index
      %c0_51 = arith.constant 0 : index
      %64 = vector.load %arg9[%c0_50, %c0_51] : memref<32x128xf32, #tpu.memory_space<vmem>>, vector<32x128xf32>
      tpu.vector_store %arg9[%c0_50, %c0_51], %63 {strides = array<i32>} : memref<32x128xf32, #tpu.memory_space<vmem>>, vector<32x128xf32>,
    } else {
    }
    return
  }
  func.func @transform_0(%arg0: i32, %arg1: i32) -> (i32, i32) {
    %c0_i32 = arith.constant 0 : i32
    %c0_i32_0 = arith.constant 0 : i32
    return %arg0, %c0_i32 : i32, i32
  }
  func.func @transform_1(%arg0: i32, %arg1: i32) -> (i32, i32) {
    %c0_i32 = arith.constant 0 : i32
    %c0_i32_0 = arith.constant 0 : i32
    return %arg1, %c0_i32 : i32, i32
  }
  func.func @transform_2(%arg0: i32, %arg1: i32) -> (i32, i32) {
    %c0_i32 = arith.constant 0 : i32
    %c0_i32_0 = arith.constant 0 : i32
    return %arg0, %c0_i32 : i32, i32
  }
  func.func @transform_3(%arg0: i32, %arg1: i32) -> (i32, i32, i32) {
    %c0_i32 = arith.constant 0 : i32
    %c0_i32_0 = arith.constant 0 : i32
    return %arg0, %arg1, %c0_i32 : i32, i32, i32
  }
  func.func @transform_4(%arg0: i32, %arg1: i32) -> (i32, i32) {
    %c0_i32 = arith.constant 0 : i32
    %c0_i32_0 = arith.constant 0 : i32
    %c0_i32_1 = arith.constant 0 : i32
    return %c0_i32, %c0_i32_0 : i32, i32
  }
  func.func @transform_5(%arg0: i32, %arg1: i32) -> (i32, i32) {
    %c0_i32 = arith.constant 0 : i32
    %c0_i32_0 = arith.constant 0 : i32
    %c0_i32_1 = arith.constant 0 : i32
    return %c0_i32, %c0_i32_0 : i32, i32
  }
  func.func @transform_6(%arg0: i32, %arg1: i32) -> (i32, i32) {
    %c0_i32 = arith.constant 0 : i32
    %c0_i32_0 = arith.constant 0 : i32
    %c0_i32_1 = arith.constant 0 : i32
    return %c0_i32, %c0_i32_0 : i32, i32
  }
  func.func @transform_7(%arg0: i32, %arg1: i32) -> (i32, i32) {
    %c0_i32 = arith.constant 0 : i32
    %c0_i32_0 = arith.constant 0 : i32
    return %arg0, %c0_i32 : i32, i32
  }
}

</mosaic_0001>

<llo_original>
// kernel: pna_forward.11
$region0: #{pna_forward.11}
  #allocation0 [shape = 'u32[]', space=smem, size = 0x4, offset = 0x4, fixed_abs, tag = 'smem constant byte address 0x4 - core index']
  #allocation1 [shape = 'u32[72,128]{1,0:T(1,128)}', space=vmem, size = 0x9000, scoped, tag = 'internal scratch']
  %s0 = inlined_call_operand.vmem [shape: f32[32,128], index: 0, kind: input, shape index: {}]
  %s1 = inlined_call_operand.vmem [shape: f32[3,128], index: 1, kind: output, shape index: {}]
  %s2 = sld [smem:[#allocation0]]
  $region14: #{pna_forward.11} parent=0
    _
  %s4 = ssub.s32 1, %s2
  %s5 = scalar_select 0, %s4, %s2
  // Predicated region
  $region2: #{pna_forward.11} parent=0 // pred_check
    _
  $region3: #{pna_forward.11} parent=0 // pred_check_branch
    %7 = sbr.rel (0) target = $region5
  $region4: #{pna_forward.11} parent=0 // pred_region
    _
  $region5: #{pna_forward.11} parent=0 // pred_fallthru
    _
  %v8 = vld [vmem:[%s0] sm:$0xff]
  %v9 = vld [vmem:[%s0 + $0x8] sm:$0xff]
  %v10 = vld [vmem:[%s0 + $0x10] sm:$0xff]
  %v11 = vld [vmem:[%s0 + $0x18] sm:$0xff]
  %v12 = vadd.f32 %v8, %v9
  %v13 = vadd.f32 %v12, %v10
  %v14 = vadd.f32 %v13, %v11
  %v15 = vrot.slane %v14, 4
  %v16 = vadd.f32 %v14, %v15
  %v17 = vrot.slane %v16, 2
  %v18 = vadd.f32 %v16, %v17
  %v19 = vrot.slane %v18, 1
  %v20 = vadd.f32 %v18, %v19
  %v21 = vmul.f32 %v20, 0.03125
  %v22 = vmax.f32 %v8, %v9
  %v23 = vmax.f32 %v10, %v11
  %v24 = vmax.f32 %v22, %v23
  %v25 = vrot.slane %v24, 4
  %v26 = vmax.f32 %v24, %v25
  %v27 = vrot.slane %v26, 2
  %v28 = vmax.f32 %v26, %v27
  %v29 = vrot.slane %v28, 1
  %v30 = vmax.f32 %v28, %v29
  %v31 = vlaneseq
  %v32 = vshrl.u32 %v31, 7
  %vm33 = vcmp.eq.s32.totalorder %v32, 0
  %vm34 = vcmp.eq.s32.totalorder %v32, 1
  %v35 = vsel %vm34, %v21, %v30
  %v36 = vsel %vm33, %v20, %v35
  %37 = vst [vmem:[%s1] sm:$0x7] %v36
  // Predicated region
  $region6: #{pna_forward.11} parent=0 // pred_check
    _
  $region7: #{pna_forward.11} parent=0 // pred_check_branch
    %39 = sbr.rel (0) target = $region9
  $region8: #{pna_forward.11} parent=0 // pred_region
    _
  $region9: #{pna_forward.11} parent=0 // pred_fallthru
    _
  // Predicated region
  $region10: #{pna_forward.11} parent=0 // pred_check
    _
  $region11: #{pna_forward.11} parent=0 // pred_check_branch
    %41 = sbr.rel (0) target = $region13
  $region12: #{pna_forward.11} parent=0 // pred_region
    _
  $region13: #{pna_forward.11} parent=0 // pred_fallthru
    _

// kernel: pna_forward.6
$region0: #{pna_forward.6}
  #allocation0 [shape = 'u32[]', space=smem, size = 0x4, offset = 0x4, fixed_abs, tag = 'smem constant byte address 0x4 - core index']
  #allocation1 [shape = 'u32[72,128]{1,0:T(1,128)}', space=vmem, size = 0x9000, scoped, tag = 'internal scratch']
  #allocation2 [shape = 'f32[32,128]{1,0:T(8,128)}', space=vmem, size = 0x4000, scoped, tag = 'scratch operand']
  #allocation3 [shape = 'f32[32,128]{1,0:T(8,128)}', space=vmem, size = 0x4000, scoped, tag = 'scratch operand']
  #allocation4 [shape = 'f32[32,128]{1,0:T(8,128)}', space=vmem, size = 0x4000, scoped, tag = 'scratch operand']
  #allocation5 [shape = 'f32[32,128]{1,0:T(8,128)}', space=vmem, size = 0x4000, scoped, tag = 'scratch operand']
  %s0 = inlined_call_operand.vmem [shape: f32[32,128], index: 0, kind: input, shape index: {}]
  %s1 = inlined_call_operand.vmem [shape: f32[32,128], index: 1, kind: input, shape index: {}]
  %s2 = inlined_call_operand.vmem [shape: f32[32,128], index: 2, kind: input, shape index: {}]
  %s3 = inlined_call_operand.vmem [shape: bf16[32,32,128], index: 3, kind: input, shape index: {}]
  %s4 = inlined_call_operand.vmem [shape: bf16[128,128], index: 4, kind: input, shape index: {}]
  %s5 = inlined_call_operand.vmem [shape: bf16[640,128], index: 5, kind: input, shape index: {}]
  %s6 = inlined_call_operand.vmem [shape: f32[1,128], index: 6, kind: input, shape index: {}]
  %s7 = inlined_call_operand.vmem [shape: f32[32,128], index: 7, kind: output, shape index: {}]
  %s8 = sld [smem:[#allocation0]]
  $region46: #{pna_forward.6} parent=0
    _
  %s10 = ssub.s32 1, %s8
  %s11 = scalar_select 0, %s10, %s8
  // Predicated region
  $region2: #{pna_forward.6} parent=0 // pred_check
    _
  $region3: #{pna_forward.6} parent=0 // pred_check_branch
    %13 = sbr.rel (0) target = $region5
  $region4: #{pna_forward.6} parent=0 // pred_region
    _
  $region5: #{pna_forward.6} parent=0 // pred_fallthru
    _
  // Predicated region
  $region6: #{pna_forward.6} parent=0 // pred_check
    _
  $region7: #{pna_forward.6} parent=0 // pred_check_branch
    %15 = sbr.rel (0) target = $region9
  $region8: #{pna_forward.6} parent=0 // pred_region
    _
  $region9: #{pna_forward.6} parent=0 // pred_fallthru
    _
  // Predicated region
  $region10: #{pna_forward.6} parent=0 // pred_check
    _
  $region11: #{pna_forward.6} parent=0 // pred_check_branch
    %17 = sbr.rel (0) target = $region13
  $region12: #{pna_forward.6} parent=0 // pred_region
    _
  $region13: #{pna_forward.6} parent=0 // pred_fallthru
    _
  // Predicated region
  $region14: #{pna_forward.6} parent=0 // pred_check
    _
  $region15: #{pna_forward.6} parent=0 // pred_check_branch
    %19 = sbr.rel (0) target = $region17
  $region16: #{pna_forward.6} parent=0 // pred_region
    _
  $region17: #{pna_forward.6} parent=0 // pred_fallthru
    _
  // Predicated region
  $region18: #{pna_forward.6} parent=0 // pred_check
    _
  $region19: #{pna_forward.6} parent=0 // pred_check_branch
    %21 = sbr.rel (0) target = $region21
  $region20: #{pna_forward.6} parent=0 // pred_region
    _
  $region21: #{pna_forward.6} parent=0 // pred_fallthru
    _
  // Predicated region
  $region22: #{pna_forward.6} parent=0 // pred_check
    _
  $region23: #{pna_forward.6} parent=0 // pred_check_branch
    %23 = sbr.rel (0) target = $region25
  $region24: #{pna_forward.6} parent=0 // pred_region
    _
  $region25: #{pna_forward.6} parent=0 // pred_fallthru
    _
  // Predicated region
  $region26: #{pna_forward.6} parent=0 // pred_check
    _
  $region27: #{pna_forward.6} parent=0 // pred_check_branch
    %25 = sbr.rel (0) target = $region29
  $region28: #{pna_forward.6} parent=0 // pred_region
    _
  $region29: #{pna_forward.6} parent=0 // pred_fallthru
    _
  %p26 = scmp.eq.s32.totalorder 0, 0
  // Predicated region
  $region30: #{pna_forward.6} parent=0 // pred_check
    %p27 = pneg %p26
  $region31: #{pna_forward.6} parent=0 // pred_check_branch
    %29 = sbr.rel (%p27) target = $region33
  $region32: #{pna_forward.6} parent=0 // pred_region
    %30 = vst [vmem:[#allocation2] sm:$0xff] 0.0
    %31 = vst [vmem:[#allocation2 + $0x8] sm:$0xff] 0.0
    %32 = vst [vmem:[#allocation2 + $0x10] sm:$0xff] 0.0
    %33 = vst [vmem:[#allocation2 + $0x18] sm:$0xff] 0.0
    %34 = vst [vmem:[#allocation3] sm:$0xff] 0.0
    %35 = vst [vmem:[#allocation3 + $0x8] sm:$0xff] 0.0
    %36 = vst [vmem:[#allocation3 + $0x10] sm:$0xff] 0.0
    %37 = vst [vmem:[#allocation3 + $0x18] sm:$0xff] 0.0
    %38 = vst [vmem:[#allocation4] sm:$0xff] -inf
    %39 = vst [vmem:[#allocation4 + $0x8] sm:$0xff] -inf
    %40 = vst [vmem:[#allocation4 + $0x10] sm:$0xff] -inf
    %41 = vst [vmem:[#allocation4 + $0x18] sm:$0xff] -inf
    %42 = vst [vmem:[#allocation5] sm:$0xff] inf
    %43 = vst [vmem:[#allocation5 + $0x8] sm:$0xff] inf
    %44 = vst [vmem:[#allocation5 + $0x10] sm:$0xff] inf
    %45 = vst [vmem:[#allocation5 + $0x18] sm:$0xff] inf
  $region33: #{pna_forward.6} parent=0 // pred_fallthru
    _
  %v46 = vld [vmem:[%s3] sm:$0xf]
  %v47 = vld [vmem:[%s3 + $0x4] sm:$0xf]
  %v48 = vld [vmem:[%s3 + $0x8] sm:$0xf]
  %v49 = vld [vmem:[%s3 + $0xc] sm:$0xf]
  %v50 = vld [vmem:[%s3 + $0x10] sm:$0xf]
  %v51 = vld [vmem:[%s3 + $0x14] sm:$0xf]
  %v52 = vld [vmem:[%s3 + $0x18] sm:$0xf]
  %v53 = vld [vmem:[%s3 + $0x1c] sm:$0xf]
  %v54 = vld [vmem:[%s3 + $0x20] sm:$0xf]
  %v55 = vld [vmem:[%s3 + $0x24] sm:$0xf]
  %v56 = vld [vmem:[%s3 + $0x28] sm:$0xf]
  %v57 = vld [vmem:[%s3 + $0x2c] sm:$0xf]
  %v58 = vld [vmem:[%s3 + $0x30] sm:$0xf]
  %v59 = vld [vmem:[%s3 + $0x34] sm:$0xf]
  %v60 = vld [vmem:[%s3 + $0x38] sm:$0xf]
  %v61 = vld [vmem:[%s3 + $0x3c] sm:$0xf]
  %v62 = vld [vmem:[%s3 + $0x40] sm:$0xf]
  %v63 = vld [vmem:[%s3 + $0x44] sm:$0xf]
  %v64 = vld [vmem:[%s3 + $0x48] sm:$0xf]
  %v65 = vld [vmem:[%s3 + $0x4c] sm:$0xf]
  %v66 = vld [vmem:[%s3 + $0x50] sm:$0xf]
  %v67 = vld [vmem:[%s3 + $0x54] sm:$0xf]
  %v68 = vld [vmem:[%s3 + $0x58] sm:$0xf]
  %v69 = vld [vmem:[%s3 + $0x5c] sm:$0xf]
  %v70 = vld [vmem:[%s3 + $0x60] sm:$0xf]
  %v71 = vld [vmem:[%s3 + $0x64] sm:$0xf]
  %v72 = vld [vmem:[%s3 + $0x68] sm:$0xf]
  %v73 = vld [vmem:[%s3 + $0x6c] sm:$0xf]
  %v74 = vld [vmem:[%s3 + $0x70] sm:$0xf]
  %v75 = vld [vmem:[%s3 + $0x74] sm:$0xf]
  %v76 = vld [vmem:[%s3 + $0x78] sm:$0xf]
  %v77 = vld [vmem:[%s3 + $0x7c] sm:$0xf]
  %v78 = vld [vmem:[%s3 + $0x80] sm:$0xf]
  %v79 = vld [vmem:[%s3 + $0x84] sm:$0xf]
  %v80 = vld [vmem:[%s3 + $0x88] sm:$0xf]
  %v81 = vld [vmem:[%s3 + $0x8c] sm:$0xf]
  %v82 = vld [vmem:[%s3 + $0x90] sm:$0xf]
  %v83 = vld [vmem:[%s3 + $0x94] sm:$0xf]
  %v84 = vld [vmem:[%s3 + $0x98] sm:$0xf]
  %v85 = vld [vmem:[%s3 + $0x9c] sm:$0xf]
  %v86 = vld [vmem:[%s3 + $0xa0] sm:$0xf]
  %v87 = vld [vmem:[%s3 + $0xa4] sm:$0xf]
  %v88 = vld [vmem:[%s3 + $0xa8] sm:$0xf]
  %v89 = vld [vmem:[%s3 + $0xac] sm:$0xf]
  %v90 = vld [vmem:[%s3 + $0xb0] sm:$0xf]
  %v91 = vld [vmem:[%s3 + $0xb4] sm:$0xf]
  %v92 = vld [vmem:[%s3 + $0xb8] sm:$0xf]
  %v93 = vld [vmem:[%s3 + $0xbc] sm:$0xf]
  %v94 = vld [vmem:[%s3 + $0xc0] sm:$0xf]
  %v95 = vld [vmem:[%s3 + $0xc4] sm:$0xf]
  %v96 = vld [vmem:[%s3 + $0xc8] sm:$0xf]
  %v97 = vld [vmem:[%s3 + $0xcc] sm:$0xf]
  %v98 = vld [vmem:[%s3 + $0xd0] sm:$0xf]
  %v99 = vld [vmem:[%s3 + $0xd4] sm:$0xf]
  %v100 = vld [vmem:[%s3 + $0xd8] sm:$0xf]
  %v101 = vld [vmem:[%s3 + $0xdc] sm:$0xf]
  %v102 = vld [vmem:[%s3 + $0xe0] sm:$0xf]
  %v103 = vld [vmem:[%s3 + $0xe4] sm:$0xf]
  %v104 = vld [vmem:[%s3 + $0xe8] sm:$0xf]
  %v105 = vld [vmem:[%s3 + $0xec] sm:$0xf]
  %v106 = vld [vmem:[%s3 + $0xf0] sm:$0xf]
  %v107 = vld [vmem:[%s3 + $0xf4] sm:$0xf]
  %v108 = vld [vmem:[%s3 + $0xf8] sm:$0xf]
  %v109 = vld [vmem:[%s3 + $0xfc] sm:$0xf]
  %v110 = vld [vmem:[%s3 + $0x100] sm:$0xf]
  %v111 = vld [vmem:[%s3 + $0x104] sm:$0xf]
  %v112 = vld [vmem:[%s3 + $0x108] sm:$0xf]
  %v113 = vld [vmem:[%s3 + $0x10c] sm:$0xf]
  %v114 = vld [vmem:[%s3 + $0x110] sm:$0xf]
  %v115 = vld [vmem:[%s3 + $0x114] sm:$0xf]
  %v116 = vld [vmem:[%s3 + $0x118] sm:$0xf]
  %v117 = vld [vmem:[%s3 + $0x11c] sm:$0xf]
  %v118 = vld [vmem:[%s3 + $0x120] sm:$0xf]
  %v119 = vld [vmem:[%s3 + $0x124] sm:$0xf]
  %v120 = vld [vmem:[%s3 + $0x128] sm:$0xf]
  %v121 = vld [vmem:[%s3 + $0x12c] sm:$0xf]
  %v122 = vld [vmem:[%s3 + $0x130] sm:$0xf]
  %v123 = vld [vmem:[%s3 + $0x134] sm:$0xf]
  %v124 = vld [vmem:[%s3 + $0x138] sm:$0xf]
  %v125 = vld [vmem:[%s3 + $0x13c] sm:$0xf]
  %v126 = vld [vmem:[%s3 + $0x140] sm:$0xf]
  %v127 = vld [vmem:[%s3 + $0x144] sm:$0xf]
  %v128 = vld [vmem:[%s3 + $0x148] sm:$0xf]
  %v129 = vld [vmem:[%s3 + $0x14c] sm:$0xf]
  %v130 = vld [vmem:[%s3 + $0x150] sm:$0xf]
  %v131 = vld [vmem:[%s3 + $0x154] sm:$0xf]
  %v132 = vld [vmem:[%s3 + $0x158] sm:$0xf]
  %v133 = vld [vmem:[%s3 + $0x15c] sm:$0xf]
  %v134 = vld [vmem:[%s3 + $0x160] sm:$0xf]
  %v135 = vld [vmem:[%s3 + $0x164] sm:$0xf]
  %v136 = vld [vmem:[%s3 + $0x168] sm:$0xf]
  %v137 = vld [vmem:[%s3 + $0x16c] sm:$0xf]
  %v138 = vld [vmem:[%s3 + $0x170] sm:$0xf]
  %v139 = vld [vmem:[%s3 + $0x174] sm:$0xf]
  %v140 = vld [vmem:[%s3 + $0x178] sm:$0xf]
  %v141 = vld [vmem:[%s3 + $0x17c] sm:$0xf]
  %v142 = vld [vmem:[%s3 + $0x180] sm:$0xf]
  %v143 = vld [vmem:[%s3 + $0x184] sm:$0xf]
  %v144 = vld [vmem:[%s3 + $0x188] sm:$0xf]
  %v145 = vld [vmem:[%s3 + $0x18c] sm:$0xf]
  %v146 = vld [vmem:[%s3 + $0x190] sm:$0xf]
  %v147 = vld [vmem:[%s3 + $0x194] sm:$0xf]
  %v148 = vld [vmem:[%s3 + $0x198] sm:$0xf]
  %v149 = vld [vmem:[%s3 + $0x19c] sm:$0xf]
  %v150 = vld [vmem:[%s3 + $0x1a0] sm:$0xf]
  %v151 = vld [vmem:[%s3 + $0x1a4] sm:$0xf]
  %v152 = vld [vmem:[%s3 + $0x1a8] sm:$0xf]
  %v153 = vld [vmem:[%s3 + $0x1ac] sm:$0xf]
  %v154 = vld [vmem:[%s3 + $0x1b0] sm:$0xf]
  %v155 = vld [vmem:[%s3 + $0x1b4] sm:$0xf]
  %v156 = vld [vmem:[%s3 + $0x1b8] sm:$0xf]
  %v157 = vld [vmem:[%s3 + $0x1bc] sm:$0xf]
  %v158 = vld [vmem:[%s3 + $0x1c0] sm:$0xf]
  %v159 = vld [vmem:[%s3 + $0x1c4] sm:$0xf]
  %v160 = vld [vmem:[%s3 + $0x1c8] sm:$0xf]
  %v161 = vld [vmem:[%s3 + $0x1cc] sm:$0xf]
  %v162 = vld [vmem:[%s3 + $0x1d0] sm:$0xf]
  %v163 = vld [vmem:[%s3 + $0x1d4] sm:$0xf]
  %v164 = vld [vmem:[%s3 + $0x1d8] sm:$0xf]
  %v165 = vld [vmem:[%s3 + $0x1dc] sm:$0xf]
  %v166 = vld [vmem:[%s3 + $0x1e0] sm:$0xf]
  %v167 = vld [vmem:[%s3 + $0x1e4] sm:$0xf]
  %v168 = vld [vmem:[%s3 + $0x1e8] sm:$0xf]
  %v169 = vld [vmem:[%s3 + $0x1ec] sm:$0xf]
  %v170 = vld [vmem:[%s3 + $0x1f0] sm:$0xf]
  %v171 = vld [vmem:[%s3 + $0x1f4] sm:$0xf]
  %v172 = vld [vmem:[%s3 + $0x1f8] sm:$0xf]
  %v173 = vld [vmem:[%s3 + $0x1fc] sm:$0xf]
  %v174 = vld [vmem:[%s4] sm:$0xf]
  %v175 = vld [vmem:[%s4 + $0x4] sm:$0xf]
  %v176 = vld [vmem:[%s4 + $0x8] sm:$0xf]
  %v177 = vld [vmem:[%s4 + $0xc] sm:$0xf]
  %v178 = vld [vmem:[%s4 + $0x10] sm:$0xf]
  %v179 = vld [vmem:[%s4 + $0x14] sm:$0xf]
  %v180 = vld [vmem:[%s4 + $0x18] sm:$0xf]
  %v181 = vld [vmem:[%s4 + $0x1c] sm:$0xf]
  %v182 = vld [vmem:[%s4 + $0x20] sm:$0xf]
  %v183 = vld [vmem:[%s4 + $0x24] sm:$0xf]
  %v184 = vld [vmem:[%s4 + $0x28] sm:$0xf]
  %v185 = vld [vmem:[%s4 + $0x2c] sm:$0xf]
  %v186 = vld [vmem:[%s4 + $0x30] sm:$0xf]
  %v187 = vld [vmem:[%s4 + $0x34] sm:$0xf]
  %v188 = vld [vmem:[%s4 + $0x38] sm:$0xf]
  %v189 = vld [vmem:[%s4 + $0x3c] sm:$0xf]
  %v318 = vunpack.c.l.b16 %v46
  %v319 = vunpack.c.l.b16 %v47
  %v320 = vunpack.c.l.b16 %v48
  %v321 = vunpack.c.l.b16 %v49
  %v322 = vunpack.c.l.b16 %v50
  %v323 = vunpack.c.l.b16 %v51
  %v324 = vunpack.c.l.b16 %v52
  %v325 = vunpack.c.l.b16 %v53
  %v326 = vunpack.c.l.b16 %v54
  %v327 = vunpack.c.l.b16 %v55
  %v328 = vunpack.c.l.b16 %v56
  %v329 = vunpack.c.l.b16 %v57
  %v330 = vunpack.c.l.b16 %v58
  %v331 = vunpack.c.l.b16 %v59
  %v332 = vunpack.c.l.b16 %v60
  %v333 = vunpack.c.l.b16 %v61
  %v334 = vunpack.c.l.b16 %v62
  %v335 = vunpack.c.l.b16 %v63
  %v336 = vunpack.c.l.b16 %v64
  %v337 = vunpack.c.l.b16 %v65
  %v338 = vunpack.c.l.b16 %v66
  %v339 = vunpack.c.l.b16 %v67
  %v340 = vunpack.c.l.b16 %v68
  %v341 = vunpack.c.l.b16 %v69
  %v342 = vunpack.c.l.b16 %v70
  %v343 = vunpack.c.l.b16 %v71
  %v344 = vunpack.c.l.b16 %v72
  %v345 = vunpack.c.l.b16 %v73
  %v346 = vunpack.c.l.b16 %v74
  %v347 = vunpack.c.l.b16 %v75
  %v348 = vunpack.c.l.b16 %v76
  %v349 = vunpack.c.l.b16 %v77
  %v350 = vunpack.c.l.b16 %v78
  %v351 = vunpack.c.l.b16 %v79
  %v352 = vunpack.c.l.b16 %v80
  %v353 = vunpack.c.l.b16 %v81
  %v354 = vunpack.c.l.b16 %v82
  %v355 = vunpack.c.l.b16 %v83
  %v356 = vunpack.c.l.b16 %v84
  %v357 = vunpack.c.l.b16 %v85
  %v358 = vunpack.c.l.b16 %v86
  %v359 = vunpack.c.l.b16 %v87
  %v360 = vunpack.c.l.b16 %v88
  %v361 = vunpack.c.l.b16 %v89
  %v362 = vunpack.c.l.b16 %v90
  %v363 = vunpack.c.l.b16 %v91
  %v364 = vunpack.c.l.b16 %v92
  %v365 = vunpack.c.l.b16 %v93
  %v366 = vunpack.c.l.b16 %v94
  %v367 = vunpack.c.l.b16 %v95
  %v368 = vunpack.c.l.b16 %v96
  %v369 = vunpack.c.l.b16 %v97
  %v370 = vunpack.c.l.b16 %v98
  %v371 = vunpack.c.l.b16 %v99
  %v372 = vunpack.c.l.b16 %v100
  %v373 = vunpack.c.l.b16 %v101
  %v374 = vunpack.c.l.b16 %v102
  %v375 = vunpack.c.l.b16 %v103
  %v376 = vunpack.c.l.b16 %v104
  %v377 = vunpack.c.l.b16 %v105
  %v378 = vunpack.c.l.b16 %v106
  %v379 = vunpack.c.l.b16 %v107
  %v380 = vunpack.c.l.b16 %v108
  %v381 = vunpack.c.l.b16 %v109
  %v382 = vunpack.c.l.b16 %v110
  %v383 = vunpack.c.l.b16 %v111
  %v384 = vunpack.c.l.b16 %v112
  %v385 = vunpack.c.l.b16 %v113
  %v386 = vunpack.c.l.b16 %v114
  %v387 = vunpack.c.l.b16 %v115
  %v388 = vunpack.c.l.b16 %v116
  %v389 = vunpack.c.l.b16 %v117
  %v390 = vunpack.c.l.b16 %v118
  %v391 = vunpack.c.l.b16 %v119
  %v392 = vunpack.c.l.b16 %v120
  %v393 = vunpack.c.l.b16 %v121
  %v394 = vunpack.c.l.b16 %v122
  %v395 = vunpack.c.l.b16 %v123
  %v396 = vunpack.c.l.b16 %v124
  %v397 = vunpack.c.l.b16 %v125
  %v398 = vunpack.c.l.b16 %v126
  %v399 = vunpack.c.l.b16 %v127
  %v400 = vunpack.c.l.b16 %v128
  %v401 = vunpack.c.l.b16 %v129
  %v402 = vunpack.c.l.b16 %v130
  %v403 = vunpack.c.l.b16 %v131
  %v404 = vunpack.c.l.b16 %v132
  %v405 = vunpack.c.l.b16 %v133
  %v406 = vunpack.c.l.b16 %v134
  %v407 = vunpack.c.l.b16 %v135
  %v408 = vunpack.c.l.b16 %v136
  %v409 = vunpack.c.l.b16 %v137
  %v410 = vunpack.c.l.b16 %v138
  %v411 = vunpack.c.l.b16 %v139
  %v412 = vunpack.c.l.b16 %v140
  %v413 = vunpack.c.l.b16 %v141
  %v414 = vunpack.c.l.b16 %v142
  %v415 = vunpack.c.l.b16 %v143
  %v416 = vunpack.c.l.b16 %v144
  %v417 = vunpack.c.l.b16 %v145
  %v418 = vunpack.c.l.b16 %v146
  %v419 = vunpack.c.l.b16 %v147
  %v420 = vunpack.c.l.b16 %v148
  %v421 = vunpack.c.l.b16 %v149
  %v422 = vunpack.c.l.b16 %v150
  %v423 = vunpack.c.l.b16 %v151
  %v424 = vunpack.c.l.b16 %v152
  %v425 = vunpack.c.l.b16 %v153
  %v426 = vunpack.c.l.b16 %v154
  %v427 = vunpack.c.l.b16 %v155
  %v428 = vunpack.c.l.b16 %v156
  %v429 = vunpack.c.l.b16 %v157
  %v430 = vunpack.c.l.b16 %v158
  %v431 = vunpack.c.l.b16 %v159
  %v432 = vunpack.c.l.b16 %v160
  %v433 = vunpack.c.l.b16 %v161
  %v434 = vunpack.c.l.b16 %v162
  %v435 = vunpack.c.l.b16 %v163
  %v436 = vunpack.c.l.b16 %v164
  %v437 = vunpack.c.l.b16 %v165
  %v438 = vunpack.c.l.b16 %v166
  %v439 = vunpack.c.l.b16 %v167
  %v440 = vunpack.c.l.b16 %v168
  %v441 = vunpack.c.l.b16 %v169
  %v442 = vunpack.c.l.b16 %v170
  %v443 = vunpack.c.l.b16 %v171
  %v444 = vunpack.c.l.b16 %v172
  %v445 = vunpack.c.l.b16 %v173
  %v446 = vpack.c.b16 %v319, %v318
  %v447 = vpack.c.b16 %v321, %v320
  %v448 = vpack.c.b16 %v323, %v322
  %v449 = vpack.c.b16 %v325, %v324
  %v450 = vpack.c.b16 %v327, %v326
  %v451 = vpack.c.b16 %v329, %v328
  %v452 = vpack.c.b16 %v331, %v330
  %v453 = vpack.c.b16 %v333, %v332
  %v454 = vpack.c.b16 %v335, %v334
  %v455 = vpack.c.b16 %v337, %v336
  %v456 = vpack.c.b16 %v339, %v338
  %v457 = vpack.c.b16 %v341, %v340
  %v458 = vpack.c.b16 %v343, %v342
  %v459 = vpack.c.b16 %v345, %v344
  %v460 = vpack.c.b16 %v347, %v346
  %v461 = vpack.c.b16 %v349, %v348
  %v462 = vpack.c.b16 %v351, %v350
  %v463 = vpack.c.b16 %v353, %v352
  %v464 = vpack.c.b16 %v355, %v354
  %v465 = vpack.c.b16 %v357, %v356
  %v466 = vpack.c.b16 %v359, %v358
  %v467 = vpack.c.b16 %v361, %v360
  %v468 = vpack.c.b16 %v363, %v362
  %v469 = vpack.c.b16 %v365, %v364
  %v470 = vpack.c.b16 %v367, %v366
  %v471 = vpack.c.b16 %v369, %v368
  %v472 = vpack.c.b16 %v371, %v370
  %v473 = vpack.c.b16 %v373, %v372
  %v474 = vpack.c.b16 %v375, %v374
  %v475 = vpack.c.b16 %v377, %v376
  %v476 = vpack.c.b16 %v379, %v378
  %v477 = vpack.c.b16 %v381, %v380
  %v478 = vpack.c.b16 %v383, %v382
  %v479 = vpack.c.b16 %v385, %v384
  %v480 = vpack.c.b16 %v387, %v386
  %v481 = vpack.c.b16 %v389, %v388
  %v482 = vpack.c.b16 %v391, %v390
  %v483 = vpack.c.b16 %v393, %v392
  %v484 = vpack.c.b16 %v395, %v394
  %v485 = vpack.c.b16 %v397, %v396
  %v486 = vpack.c.b16 %v399, %v398
  %v487 = vpack.c.b16 %v401, %v400
  %v488 = vpack.c.b16 %v403, %v402
  %v489 = vpack.c.b16 %v405, %v404
  %v490 = vpack.c.b16 %v407, %v406
  %v491 = vpack.c.b16 %v409, %v408
  %v492 = vpack.c.b16 %v411, %v410
  %v493 = vpack.c.b16 %v413, %v412
  %v494 = vpack.c.b16 %v415, %v414
  %v495 = vpack.c.b16 %v417, %v416
  %v496 = vpack.c.b16 %v419, %v418
  %v497 = vpack.c.b16 %v421, %v420
  %v498 = vpack.c.b16 %v423, %v422
  %v499 = vpack.c.b16 %v425, %v424
  %v500 = vpack.c.b16 %v427, %v426
  %v501 = vpack.c.b16 %v429, %v428
  %v502 = vpack.c.b16 %v431, %v430
  %v503 = vpack.c.b16 %v433, %v432
  %v504 = vpack.c.b16 %v435, %v434
  %v505 = vpack.c.b16 %v437, %v436
  %v506 = vpack.c.b16 %v439, %v438
  %v507 = vpack.c.b16 %v441, %v440
  %v508 = vpack.c.b16 %v443, %v442
  %v509 = vpack.c.b16 %v445, %v444
  %v590 = vunpack.c.l.b16 %v174
  %v591 = vunpack.c.l.b16 %v175
  %v592 = vunpack.c.l.b16 %v176
  %v593 = vunpack.c.l.b16 %v177
  %v594 = vunpack.c.l.b16 %v178
  %v595 = vunpack.c.l.b16 %v179
  %v596 = vunpack.c.l.b16 %v180
  %v597 = vunpack.c.l.b16 %v181
  %v598 = vunpack.c.l.b16 %v182
  %v599 = vunpack.c.l.b16 %v183
  %v600 = vunpack.c.l.b16 %v184
  %v601 = vunpack.c.l.b16 %v185
  %v602 = vunpack.c.l.b16 %v186
  %v603 = vunpack.c.l.b16 %v187
  %v604 = vunpack.c.l.b16 %v188
  %v605 = vunpack.c.l.b16 %v189
  %v606 = vpack.c.b16 %v591, %v590
  %v607 = vpack.c.b16 %v593, %v592
  %v608 = vpack.c.b16 %v595, %v594
  %v609 = vpack.c.b16 %v597, %v596
  %v610 = vpack.c.b16 %v599, %v598
  %v611 = vpack.c.b16 %v601, %v600
  %v612 = vpack.c.b16 %v603, %v602
  %v613 = vpack.c.b16 %v605, %v604
  %622 = vmatpush.bf16.msra.mxu0 %v613
  %623 = vmatpush.bf16.msra.mxu0 %v612
  %624 = vmatpush.bf16.msra.mxu0 %v611
  %625 = vmatpush.bf16.msra.mxu0 %v610
  %626 = vmatpush.bf16.msra.mxu0 %v609
  %627 = vmatpush.bf16.msra.mxu0 %v608
  %628 = vmatpush.bf16.msra.mxu0 %v607
  %629 = vmatpush.bf16.msra.mxu0 %v606
  %630 = vmatmul.bf16.gmra.mxu0 %v446
  %v631 = vpop.f32.mrf.mxu0
  %v632 = vadd.f32 0.0, %v631
  %v633 = vpop.f32.mrf.mxu0
  %v634 = vadd.f32 0.0, %v633
  %635 = vmatmul.bf16.gmra.mxu0 %v447
  %v636 = vpop.f32.mrf.mxu0
  %v637 = vadd.f32 0.0, %v636
  %v638 = vpop.f32.mrf.mxu0
  %v639 = vadd.f32 0.0, %v638
  %640 = vmatmul.bf16.gmra.mxu0 %v448
  %v641 = vpop.f32.mrf.mxu0
  %v642 = vadd.f32 0.0, %v641
  %v643 = vpop.f32.mrf.mxu0
  %v644 = vadd.f32 0.0, %v643
  %645 = vmatmul.bf16.gmra.mxu0 %v449
  %v646 = vpop.f32.mrf.mxu0
  %v647 = vadd.f32 0.0, %v646
  %v648 = vpop.f32.mrf.mxu0
  %v649 = vadd.f32 0.0, %v648
  %650 = vmatmul.bf16.gmra.mxu0 %v450
  %v651 = vpop.f32.mrf.mxu0
  %v652 = vadd.f32 0.0, %v651
  %v653 = vpop.f32.mrf.mxu0
  %v654 = vadd.f32 0.0, %v653
  %655 = vmatmul.bf16.gmra.mxu0 %v451
  %v656 = vpop.f32.mrf.mxu0
  %v657 = vadd.f32 0.0, %v656
  %v658 = vpop.f32.mrf.mxu0
  %v659 = vadd.f32 0.0, %v658
  %660 = vmatmul.bf16.gmra.mxu0 %v452
  %v661 = vpop.f32.mrf.mxu0
  %v662 = vadd.f32 0.0, %v661
  %v663 = vpop.f32.mrf.mxu0
  %v664 = vadd.f32 0.0, %v663
  %665 = vmatmul.bf16.gmra.mxu0 %v453
  %v666 = vpop.f32.mrf.mxu0
  %v667 = vadd.f32 0.0, %v666
  %v668 = vpop.f32.mrf.mxu0
  %v669 = vadd.f32 0.0, %v668
  %670 = vmatmul.bf16.gmra.mxu0 %v454
  %v671 = vpop.f32.mrf.mxu0
  %v672 = vadd.f32 0.0, %v671
  %v673 = vpop.f32.mrf.mxu0
  %v674 = vadd.f32 0.0, %v673
  %675 = vmatmul.bf16.gmra.mxu0 %v455
  %v676 = vpop.f32.mrf.mxu0
  %v677 = vadd.f32 0.0, %v676
  %v678 = vpop.f32.mrf.mxu0
  %v679 = vadd.f32 0.0, %v678
  %680 = vmatmul.bf16.gmra.mxu0 %v456
  %v681 = vpop.f32.mrf.mxu0
  %v682 = vadd.f32 0.0, %v681
  %v683 = vpop.f32.mrf.mxu0
  %v684 = vadd.f32 0.0, %v683
  %685 = vmatmul.bf16.gmra.mxu0 %v457
  %v686 = vpop.f32.mrf.mxu0
  %v687 = vadd.f32 0.0, %v686
  %v688 = vpop.f32.mrf.mxu0
  %v689 = vadd.f32 0.0, %v688
  %690 = vmatmul.bf16.gmra.mxu0 %v458
  %v691 = vpop.f32.mrf.mxu0
  %v692 = vadd.f32 0.0, %v691
  %v693 = vpop.f32.mrf.mxu0
  %v694 = vadd.f32 0.0, %v693
  %695 = vmatmul.bf16.gmra.mxu0 %v459
  %v696 = vpop.f32.mrf.mxu0
  %v697 = vadd.f32 0.0, %v696
  %v698 = vpop.f32.mrf.mxu0
  %v699 = vadd.f32 0.0, %v698
  %700 = vmatmul.bf16.gmra.mxu0 %v460
  %v701 = vpop.f32.mrf.mxu0
  %v702 = vadd.f32 0.0, %v701
  %v703 = vpop.f32.mrf.mxu0
  %v704 = vadd.f32 0.0, %v703
  %705 = vmatmul.bf16.gmra.mxu0 %v461
  %v706 = vpop.f32.mrf.mxu0
  %v707 = vadd.f32 0.0, %v706
  %v708 = vpop.f32.mrf.mxu0
  %v709 = vadd.f32 0.0, %v708
  %710 = vmatmul.bf16.gmra.mxu0 %v462
  %v711 = vpop.f32.mrf.mxu0
  %v712 = vadd.f32 0.0, %v711
  %v713 = vpop.f32.mrf.mxu0
  %v714 = vadd.f32 0.0, %v713
  %715 = vmatmul.bf16.gmra.mxu0 %v463
  %v716 = vpop.f32.mrf.mxu0
  %v717 = vadd.f32 0.0, %v716
  %v718 = vpop.f32.mrf.mxu0
  %v719 = vadd.f32 0.0, %v718
  %720 = vmatmul.bf16.gmra.mxu0 %v464
  %v721 = vpop.f32.mrf.mxu0
  %v722 = vadd.f32 0.0, %v721
  %v723 = vpop.f32.mrf.mxu0
  %v724 = vadd.f32 0.0, %v723
  %725 = vmatmul.bf16.gmra.mxu0 %v465
  %v726 = vpop.f32.mrf.mxu0
  %v727 = vadd.f32 0.0, %v726
  %v728 = vpop.f32.mrf.mxu0
  %v729 = vadd.f32 0.0, %v728
  %730 = vmatmul.bf16.gmra.mxu0 %v466
  %v731 = vpop.f32.mrf.mxu0
  %v732 = vadd.f32 0.0, %v731
  %v733 = vpop.f32.mrf.mxu0
  %v734 = vadd.f32 0.0, %v733
  %735 = vmatmul.bf16.gmra.mxu0 %v467
  %v736 = vpop.f32.mrf.mxu0
  %v737 = vadd.f32 0.0, %v736
  %v738 = vpop.f32.mrf.mxu0
  %v739 = vadd.f32 0.0, %v738
  %740 = vmatmul.bf16.gmra.mxu0 %v468
  %v741 = vpop.f32.mrf.mxu0
  %v742 = vadd.f32 0.0, %v741
  %v743 = vpop.f32.mrf.mxu0
  %v744 = vadd.f32 0.0, %v743
  %745 = vmatmul.bf16.gmra.mxu0 %v469
  %v746 = vpop.f32.mrf.mxu0
  %v747 = vadd.f32 0.0, %v746
  %v748 = vpop.f32.mrf.mxu0
  %v749 = vadd.f32 0.0, %v748
  %750 = vmatmul.bf16.gmra.mxu0 %v470
  %v751 = vpop.f32.mrf.mxu0
  %v752 = vadd.f32 0.0, %v751
  %v753 = vpop.f32.mrf.mxu0
  %v754 = vadd.f32 0.0, %v753
  %755 = vmatmul.bf16.gmra.mxu0 %v471
  %v756 = vpop.f32.mrf.mxu0
  %v757 = vadd.f32 0.0, %v756
  %v758 = vpop.f32.mrf.mxu0
  %v759 = vadd.f32 0.0, %v758
  %760 = vmatmul.bf16.gmra.mxu0 %v472
  %v761 = vpop.f32.mrf.mxu0
  %v762 = vadd.f32 0.0, %v761
  %v763 = vpop.f32.mrf.mxu0
  %v764 = vadd.f32 0.0, %v763
  %765 = vmatmul.bf16.gmra.mxu0 %v473
  %v766 = vpop.f32.mrf.mxu0
  %v767 = vadd.f32 0.0, %v766
  %v768 = vpop.f32.mrf.mxu0
  %v769 = vadd.f32 0.0, %v768
  %770 = vmatmul.bf16.gmra.mxu0 %v474
  %v771 = vpop.f32.mrf.mxu0
  %v772 = vadd.f32 0.0, %v771
  %v773 = vpop.f32.mrf.mxu0
  %v774 = vadd.f32 0.0, %v773
  %775 = vmatmul.bf16.gmra.mxu0 %v475
  %v776 = vpop.f32.mrf.mxu0
  %v777 = vadd.f32 0.0, %v776
  %v778 = vpop.f32.mrf.mxu0
  %v779 = vadd.f32 0.0, %v778
  %780 = vmatmul.bf16.gmra.mxu0 %v476
  %v781 = vpop.f32.mrf.mxu0
  %v782 = vadd.f32 0.0, %v781
  %v783 = vpop.f32.mrf.mxu0
  %v784 = vadd.f32 0.0, %v783
  %785 = vmatmul.bf16.gmra.mxu0 %v477
  %v786 = vpop.f32.mrf.mxu0
  %v787 = vadd.f32 0.0, %v786
  %v788 = vpop.f32.mrf.mxu0
  %v789 = vadd.f32 0.0, %v788
  %790 = vmatmul.bf16.gmra.mxu0 %v478
  %v791 = vpop.f32.mrf.mxu0
  %v792 = vadd.f32 0.0, %v791
  %v793 = vpop.f32.mrf.mxu0
  %v794 = vadd.f32 0.0, %v793
  %795 = vmatmul.bf16.gmra.mxu0 %v479
  %v796 = vpop.f32.mrf.mxu0
  %v797 = vadd.f32 0.0, %v796
  %v798 = vpop.f32.mrf.mxu0
  %v799 = vadd.f32 0.0, %v798
  %800 = vmatmul.bf16.gmra.mxu0 %v480
  %v801 = vpop.f32.mrf.mxu0
  %v802 = vadd.f32 0.0, %v801
  %v803 = vpop.f32.mrf.mxu0
  %v804 = vadd.f32 0.0, %v803
  %805 = vmatmul.bf16.gmra.mxu0 %v481
  %v806 = vpop.f32.mrf.mxu0
  %v807 = vadd.f32 0.0, %v806
  %v808 = vpop.f32.mrf.mxu0
  %v809 = vadd.f32 0.0, %v808
  %810 = vmatmul.bf16.gmra.mxu0 %v482
  %v811 = vpop.f32.mrf.mxu0
  %v812 = vadd.f32 0.0, %v811
  %v813 = vpop.f32.mrf.mxu0
  %v814 = vadd.f32 0.0, %v813
  %815 = vmatmul.bf16.gmra.mxu0 %v483
  %v816 = vpop.f32.mrf.mxu0
  %v817 = vadd.f32 0.0, %v816
  %v818 = vpop.f32.mrf.mxu0
  %v819 = vadd.f32 0.0, %v818
  %820 = vmatmul.bf16.gmra.mxu0 %v484
  %v821 = vpop.f32.mrf.mxu0
  %v822 = vadd.f32 0.0, %v821
  %v823 = vpop.f32.mrf.mxu0
  %v824 = vadd.f32 0.0, %v823
  %825 = vmatmul.bf16.gmra.mxu0 %v485
  %v826 = vpop.f32.mrf.mxu0
  %v827 = vadd.f32 0.0, %v826
  %v828 = vpop.f32.mrf.mxu0
  %v829 = vadd.f32 0.0, %v828
  %830 = vmatmul.bf16.gmra.mxu0 %v486
  %v831 = vpop.f32.mrf.mxu0
  %v832 = vadd.f32 0.0, %v831
  %v833 = vpop.f32.mrf.mxu0
  %v834 = vadd.f32 0.0, %v833
  %835 = vmatmul.bf16.gmra.mxu0 %v487
  %v836 = vpop.f32.mrf.mxu0
  %v837 = vadd.f32 0.0, %v836
  %v838 = vpop.f32.mrf.mxu0
  %v839 = vadd.f32 0.0, %v838
  %840 = vmatmul.bf16.gmra.mxu0 %v488
  %v841 = vpop.f32.mrf.mxu0
  %v842 = vadd.f32 0.0, %v841
  %v843 = vpop.f32.mrf.mxu0
  %v844 = vadd.f32 0.0, %v843
  %845 = vmatmul.bf16.gmra.mxu0 %v489
  %v846 = vpop.f32.mrf.mxu0
  %v847 = vadd.f32 0.0, %v846
  %v848 = vpop.f32.mrf.mxu0
  %v849 = vadd.f32 0.0, %v848
  %850 = vmatmul.bf16.gmra.mxu0 %v490
  %v851 = vpop.f32.mrf.mxu0
  %v852 = vadd.f32 0.0, %v851
  %v853 = vpop.f32.mrf.mxu0
  %v854 = vadd.f32 0.0, %v853
  %855 = vmatmul.bf16.gmra.mxu0 %v491
  %v856 = vpop.f32.mrf.mxu0
  %v857 = vadd.f32 0.0, %v856
  %v858 = vpop.f32.mrf.mxu0
  %v859 = vadd.f32 0.0, %v858
  %860 = vmatmul.bf16.gmra.mxu0 %v492
  %v861 = vpop.f32.mrf.mxu0
  %v862 = vadd.f32 0.0, %v861
  %v863 = vpop.f32.mrf.mxu0
  %v864 = vadd.f32 0.0, %v863
  %865 = vmatmul.bf16.gmra.mxu0 %v493
  %v866 = vpop.f32.mrf.mxu0
  %v867 = vadd.f32 0.0, %v866
  %v868 = vpop.f32.mrf.mxu0
  %v869 = vadd.f32 0.0, %v868
  %870 = vmatmul.bf16.gmra.mxu0 %v494
  %v871 = vpop.f32.mrf.mxu0
  %v872 = vadd.f32 0.0, %v871
  %v873 = vpop.f32.mrf.mxu0
  %v874 = vadd.f32 0.0, %v873
  %875 = vmatmul.bf16.gmra.mxu0 %v495
  %v876 = vpop.f32.mrf.mxu0
  %v877 = vadd.f32 0.0, %v876
  %v878 = vpop.f32.mrf.mxu0
  %v879 = vadd.f32 0.0, %v878
  %880 = vmatmul.bf16.gmra.mxu0 %v496
  %v881 = vpop.f32.mrf.mxu0
  %v882 = vadd.f32 0.0, %v881
  %v883 = vpop.f32.mrf.mxu0
  %v884 = vadd.f32 0.0, %v883
  %885 = vmatmul.bf16.gmra.mxu0 %v497
  %v886 = vpop.f32.mrf.mxu0
  %v887 = vadd.f32 0.0, %v886
  %v888 = vpop.f32.mrf.mxu0
  %v889 = vadd.f32 0.0, %v888
  %890 = vmatmul.bf16.gmra.mxu0 %v498
  %v891 = vpop.f32.mrf.mxu0
  %v892 = vadd.f32 0.0, %v891
  %v893 = vpop.f32.mrf.mxu0
  %v894 = vadd.f32 0.0, %v893
  %895 = vmatmul.bf16.gmra.mxu0 %v499
  %v896 = vpop.f32.mrf.mxu0
  %v897 = vadd.f32 0.0, %v896
  %v898 = vpop.f32.mrf.mxu0
  %v899 = vadd.f32 0.0, %v898
  %900 = vmatmul.bf16.gmra.mxu0 %v500
  %v901 = vpop.f32.mrf.mxu0
  %v902 = vadd.f32 0.0, %v901
  %v903 = vpop.f32.mrf.mxu0
  %v904 = vadd.f32 0.0, %v903
  %905 = vmatmul.bf16.gmra.mxu0 %v501
  %v906 = vpop.f32.mrf.mxu0
  %v907 = vadd.f32 0.0, %v906
  %v908 = vpop.f32.mrf.mxu0
  %v909 = vadd.f32 0.0, %v908
  %910 = vmatmul.bf16.gmra.mxu0 %v502
  %v911 = vpop.f32.mrf.mxu0
  %v912 = vadd.f32 0.0, %v911
  %v913 = vpop.f32.mrf.mxu0
  %v914 = vadd.f32 0.0, %v913
  %915 = vmatmul.bf16.gmra.mxu0 %v503
  %v916 = vpop.f32.mrf.mxu0
  %v917 = vadd.f32 0.0, %v916
  %v918 = vpop.f32.mrf.mxu0
  %v919 = vadd.f32 0.0, %v918
  %920 = vmatmul.bf16.gmra.mxu0 %v504
  %v921 = vpop.f32.mrf.mxu0
  %v922 = vadd.f32 0.0, %v921
  %v923 = vpop.f32.mrf.mxu0
  %v924 = vadd.f32 0.0, %v923
  %925 = vmatmul.bf16.gmra.mxu0 %v505
  %v926 = vpop.f32.mrf.mxu0
  %v927 = vadd.f32 0.0, %v926
  %v928 = vpop.f32.mrf.mxu0
  %v929 = vadd.f32 0.0, %v928
  %930 = vmatmul.bf16.gmra.mxu0 %v506
  %v931 = vpop.f32.mrf.mxu0
  %v932 = vadd.f32 0.0, %v931
  %v933 = vpop.f32.mrf.mxu0
  %v934 = vadd.f32 0.0, %v933
  %935 = vmatmul.bf16.gmra.mxu0 %v507
  %v936 = vpop.f32.mrf.mxu0
  %v937 = vadd.f32 0.0, %v936
  %v938 = vpop.f32.mrf.mxu0
  %v939 = vadd.f32 0.0, %v938
  %940 = vmatmul.bf16.gmra.mxu0 %v508
  %v941 = vpop.f32.mrf.mxu0
  %v942 = vadd.f32 0.0, %v941
  %v943 = vpop.f32.mrf.mxu0
  %v944 = vadd.f32 0.0, %v943
  %945 = vmatmul.bf16.gmra.mxu0 %v509
  %v946 = vpop.f32.mrf.mxu0
  %v947 = vadd.f32 0.0, %v946
  %v948 = vpop.f32.mrf.mxu0
  %v949 = vadd.f32 0.0, %v948
  %950 = vdwg.mxu0
  %v951 = vld [vmem:[%s1] sm:$0xff]
  %v952 = vld [vmem:[%s1 + $0x8] sm:$0xff]
  %v953 = vld [vmem:[%s1 + $0x10] sm:$0xff]
  %v954 = vld [vmem:[%s1 + $0x18] sm:$0xff]
  %v955 = vadd.f32 %v632, %v951
  %v956 = vadd.f32 %v634, %v952
  %v957 = vadd.f32 %v637, %v953
  %v958 = vadd.f32 %v639, %v954
  %v959 = vadd.f32 %v642, %v951
  %v960 = vadd.f32 %v644, %v952
  %v961 = vadd.f32 %v647, %v953
  %v962 = vadd.f32 %v649, %v954
  %v963 = vadd.f32 %v652, %v951
  %v964 = vadd.f32 %v654, %v952
  %v965 = vadd.f32 %v657, %v953
  %v966 = vadd.f32 %v659, %v954
  %v967 = vadd.f32 %v662, %v951
  %v968 = vadd.f32 %v664, %v952
  %v969 = vadd.f32 %v667, %v953
  %v970 = vadd.f32 %v669, %v954
  %v971 = vadd.f32 %v672, %v951
  %v972 = vadd.f32 %v674, %v952
  %v973 = vadd.f32 %v677, %v953
  %v974 = vadd.f32 %v679, %v954
  %v975 = vadd.f32 %v682, %v951
  %v976 = vadd.f32 %v684, %v952
  %v977 = vadd.f32 %v687, %v953
  %v978 = vadd.f32 %v689, %v954
  %v979 = vadd.f32 %v692, %v951
  %v980 = vadd.f32 %v694, %v952
  %v981 = vadd.f32 %v697, %v953
  %v982 = vadd.f32 %v699, %v954
  %v983 = vadd.f32 %v702, %v951
  %v984 = vadd.f32 %v704, %v952
  %v985 = vadd.f32 %v707, %v953
  %v986 = vadd.f32 %v709, %v954
  %v987 = vadd.f32 %v712, %v951
  %v988 = vadd.f32 %v714, %v952
  %v989 = vadd.f32 %v717, %v953
  %v990 = vadd.f32 %v719, %v954
  %v991 = vadd.f32 %v722, %v951
  %v992 = vadd.f32 %v724, %v952
  %v993 = vadd.f32 %v727, %v953
  %v994 = vadd.f32 %v729, %v954
  %v995 = vadd.f32 %v732, %v951
  %v996 = vadd.f32 %v734, %v952
  %v997 = vadd.f32 %v737, %v953
  %v998 = vadd.f32 %v739, %v954
  %v999 = vadd.f32 %v742, %v951
  %v1000 = vadd.f32 %v744, %v952
  %v1001 = vadd.f32 %v747, %v953
  %v1002 = vadd.f32 %v749, %v954
  %v1003 = vadd.f32 %v752, %v951
  %v1004 = vadd.f32 %v754, %v952
  %v1005 = vadd.f32 %v757, %v953
  %v1006 = vadd.f32 %v759, %v954
  %v1007 = vadd.f32 %v762, %v951
  %v1008 = vadd.f32 %v764, %v952
  %v1009 = vadd.f32 %v767, %v953
  %v1010 = vadd.f32 %v769, %v954
  %v1011 = vadd.f32 %v772, %v951
  %v1012 = vadd.f32 %v774, %v952
  %v1013 = vadd.f32 %v777, %v953
  %v1014 = vadd.f32 %v779, %v954
  %v1015 = vadd.f32 %v782, %v951
  %v1016 = vadd.f32 %v784, %v952
  %v1017 = vadd.f32 %v787, %v953
  %v1018 = vadd.f32 %v789, %v954
  %v1019 = vadd.f32 %v792, %v951
  %v1020 = vadd.f32 %v794, %v952
  %v1021 = vadd.f32 %v797, %v953
  %v1022 = vadd.f32 %v799, %v954
  %v1023 = vadd.f32 %v802, %v951
  %v1024 = vadd.f32 %v804, %v952
  %v1025 = vadd.f32 %v807, %v953
  %v1026 = vadd.f32 %v809, %v954
  %v1027 = vadd.f32 %v812, %v951
  %v1028 = vadd.f32 %v814, %v952
  %v1029 = vadd.f32 %v817, %v953
  %v1030 = vadd.f32 %v819, %v954
  %v1031 = vadd.f32 %v822, %v951
  %v1032 = vadd.f32 %v824, %v952
  %v1033 = vadd.f32 %v827, %v953
  %v1034 = vadd.f32 %v829, %v954
  %v1035 = vadd.f32 %v832, %v951
  %v1036 = vadd.f32 %v834, %v952
  %v1037 = vadd.f32 %v837, %v953
  %v1038 = vadd.f32 %v839, %v954
  %v1039 = vadd.f32 %v842, %v951
  %v1040 = vadd.f32 %v844, %v952
  %v1041 = vadd.f32 %v847, %v953
  %v1042 = vadd.f32 %v849, %v954
  %v1043 = vadd.f32 %v852, %v951
  %v1044 = vadd.f32 %v854, %v952
  %v1045 = vadd.f32 %v857, %v953
  %v1046 = vadd.f32 %v859, %v954
  %v1047 = vadd.f32 %v862, %v951
  %v1048 = vadd.f32 %v864, %v952
  %v1049 = vadd.f32 %v867, %v953
  %v1050 = vadd.f32 %v869, %v954
  %v1051 = vadd.f32 %v872, %v951
  %v1052 = vadd.f32 %v874, %v952
  %v1053 = vadd.f32 %v877, %v953
  %v1054 = vadd.f32 %v879, %v954
  %v1055 = vadd.f32 %v882, %v951
  %v1056 = vadd.f32 %v884, %v952
  %v1057 = vadd.f32 %v887, %v953
  %v1058 = vadd.f32 %v889, %v954
  %v1059 = vadd.f32 %v892, %v951
  %v1060 = vadd.f32 %v894, %v952
  %v1061 = vadd.f32 %v897, %v953
  %v1062 = vadd.f32 %v899, %v954
  %v1063 = vadd.f32 %v902, %v951
  %v1064 = vadd.f32 %v904, %v952
  %v1065 = vadd.f32 %v907, %v953
  %v1066 = vadd.f32 %v909, %v954
  %v1067 = vadd.f32 %v912, %v951
  %v1068 = vadd.f32 %v914, %v952
  %v1069 = vadd.f32 %v917, %v953
  %v1070 = vadd.f32 %v919, %v954
  %v1071 = vadd.f32 %v922, %v951
  %v1072 = vadd.f32 %v924, %v952
  %v1073 = vadd.f32 %v927, %v953
  %v1074 = vadd.f32 %v929, %v954
  %v1075 = vadd.f32 %v932, %v951
  %v1076 = vadd.f32 %v934, %v952
  %v1077 = vadd.f32 %v937, %v953
  %v1078 = vadd.f32 %v939, %v954
  %v1079 = vadd.f32 %v942, %v951
  %v1080 = vadd.f32 %v944, %v952
  %v1081 = vadd.f32 %v947, %v953
  %v1082 = vadd.f32 %v949, %v954
  %v1083 = vld [vmem:[%s2] sm:$0xff]
  %v1084 = vld [vmem:[%s2 + $0x8] sm:$0xff]
  %v1085 = vld [vmem:[%s2 + $0x10] sm:$0xff]
  %v1086 = vld [vmem:[%s2 + $0x18] sm:$0xff]
  %v1091 = vrot.slane %v1083, 1
  %v1092 = vrot.slane %v1083, 2
  %v1093 = vrot.slane %v1083, 3
  %v1094 = vrot.slane %v1083, 4
  %v1095 = vrot.slane %v1083, 5
  %v1096 = vrot.slane %v1083, 6
  %v1097 = vrot.slane %v1083, 7
  %v1098 = vrot.slane %v1084, 1
  %v1099 = vrot.slane %v1084, 2
  %v1100 = vrot.slane %v1084, 3
  %v1101 = vrot.slane %v1084, 4
  %v1102 = vrot.slane %v1084, 5
  %v1103 = vrot.slane %v1084, 6
  %v1104 = vrot.slane %v1084, 7
  %v1105 = vrot.slane %v1085, 1
  %v1106 = vrot.slane %v1085, 2
  %v1107 = vrot.slane %v1085, 3
  %v1108 = vrot.slane %v1085, 4
  %v1109 = vrot.slane %v1085, 5
  %v1110 = vrot.slane %v1085, 6
  %v1111 = vrot.slane %v1085, 7
  %v1112 = vrot.slane %v1086, 1
  %v1113 = vrot.slane %v1086, 2
  %v1114 = vrot.slane %v1086, 3
  %v1115 = vrot.slane %v1086, 4
  %v1116 = vrot.slane %v1086, 5
  %v1117 = vrot.slane %v1086, 6
  %v1118 = vrot.slane %v1086, 7
  %v1119 = vperm.slane %v1083, 0
  %v1120 = vperm.slane %v1091, 0
  %v1121 = vperm.slane %v1092, 0
  %v1122 = vperm.slane %v1093, 0
  %v1123 = vperm.slane %v1094, 0
  %v1124 = vperm.slane %v1095, 0
  %v1125 = vperm.slane %v1096, 0
  %v1126 = vperm.slane %v1097, 0
  %v1127 = vperm.slane %v1084, 0
  %v1128 = vperm.slane %v1098, 0
  %v1129 = vperm.slane %v1099, 0
  %v1130 = vperm.slane %v1100, 0
  %v1131 = vperm.slane %v1101, 0
  %v1132 = vperm.slane %v1102, 0
  %v1133 = vperm.slane %v1103, 0
  %v1134 = vperm.slane %v1104, 0
  %v1135 = vperm.slane %v1085, 0
  %v1136 = vperm.slane %v1105, 0
  %v1137 = vperm.slane %v1106, 0
  %v1138 = vperm.slane %v1107, 0
  %v1139 = vperm.slane %v1108, 0
  %v1140 = vperm.slane %v1109, 0
  %v1141 = vperm.slane %v1110, 0
  %v1142 = vperm.slane %v1111, 0
  %v1143 = vperm.slane %v1086, 0
  %v1144 = vperm.slane %v1112, 0
  %v1145 = vperm.slane %v1113, 0
  %v1146 = vperm.slane %v1114, 0
  %v1147 = vperm.slane %v1115, 0
  %v1148 = vperm.slane %v1116, 0
  %v1149 = vperm.slane %v1117, 0
  %v1150 = vperm.slane %v1118, 0
  %v1183 = vadd.f32 %v955, %v1119
  %v1184 = vadd.f32 %v956, %v1119
  %v1185 = vadd.f32 %v957, %v1119
  %v1186 = vadd.f32 %v958, %v1119
  %v1187 = vadd.f32 %v959, %v1120
  %v1188 = vadd.f32 %v960, %v1120
  %v1189 = vadd.f32 %v961, %v1120
  %v1190 = vadd.f32 %v962, %v1120
  %v1191 = vadd.f32 %v963, %v1121
  %v1192 = vadd.f32 %v964, %v1121
  %v1193 = vadd.f32 %v965, %v1121
  %v1194 = vadd.f32 %v966, %v1121
  %v1195 = vadd.f32 %v967, %v1122
  %v1196 = vadd.f32 %v968, %v1122
  %v1197 = vadd.f32 %v969, %v1122
  %v1198 = vadd.f32 %v970, %v1122
  %v1199 = vadd.f32 %v971, %v1123
  %v1200 = vadd.f32 %v972, %v1123
  %v1201 = vadd.f32 %v973, %v1123
  %v1202 = vadd.f32 %v974, %v1123
  %v1203 = vadd.f32 %v975, %v1124
  %v1204 = vadd.f32 %v976, %v1124
  %v1205 = vadd.f32 %v977, %v1124
  %v1206 = vadd.f32 %v978, %v1124
  %v1207 = vadd.f32 %v979, %v1125
  %v1208 = vadd.f32 %v980, %v1125
  %v1209 = vadd.f32 %v981, %v1125
  %v1210 = vadd.f32 %v982, %v1125
  %v1211 = vadd.f32 %v983, %v1126
  %v1212 = vadd.f32 %v984, %v1126
  %v1213 = vadd.f32 %v985, %v1126
  %v1214 = vadd.f32 %v986, %v1126
  %v1215 = vadd.f32 %v987, %v1127
  %v1216 = vadd.f32 %v988, %v1127
  %v1217 = vadd.f32 %v989, %v1127
  %v1218 = vadd.f32 %v990, %v1127
  %v1219 = vadd.f32 %v991, %v1128
  %v1220 = vadd.f32 %v992, %v1128
  %v1221 = vadd.f32 %v993, %v1128
  %v1222 = vadd.f32 %v994, %v1128
  %v1223 = vadd.f32 %v995, %v1129
  %v1224 = vadd.f32 %v996, %v1129
  %v1225 = vadd.f32 %v997, %v1129
  %v1226 = vadd.f32 %v998, %v1129
  %v1227 = vadd.f32 %v999, %v1130
  %v1228 = vadd.f32 %v1000, %v1130
  %v1229 = vadd.f32 %v1001, %v1130
  %v1230 = vadd.f32 %v1002, %v1130
  %v1231 = vadd.f32 %v1003, %v1131
  %v1232 = vadd.f32 %v1004, %v1131
  %v1233 = vadd.f32 %v1005, %v1131
  %v1234 = vadd.f32 %v1006, %v1131
  %v1235 = vadd.f32 %v1007, %v1132
  %v1236 = vadd.f32 %v1008, %v1132
  %v1237 = vadd.f32 %v1009, %v1132
  %v1238 = vadd.f32 %v1010, %v1132
  %v1239 = vadd.f32 %v1011, %v1133
  %v1240 = vadd.f32 %v1012, %v1133
  %v1241 = vadd.f32 %v1013, %v1133
  %v1242 = vadd.f32 %v1014, %v1133
  %v1243 = vadd.f32 %v1015, %v1134
  %v1244 = vadd.f32 %v1016, %v1134
  %v1245 = vadd.f32 %v1017, %v1134
  %v1246 = vadd.f32 %v1018, %v1134
  %v1247 = vadd.f32 %v1019, %v1135
  %v1248 = vadd.f32 %v1020, %v1135
  %v1249 = vadd.f32 %v1021, %v1135
  %v1250 = vadd.f32 %v1022, %v1135
  %v1251 = vadd.f32 %v1023, %v1136
  %v1252 = vadd.f32 %v1024, %v1136
  %v1253 = vadd.f32 %v1025, %v1136
  %v1254 = vadd.f32 %v1026, %v1136
  %v1255 = vadd.f32 %v1027, %v1137
  %v1256 = vadd.f32 %v1028, %v1137
  %v1257 = vadd.f32 %v1029, %v1137
  %v1258 = vadd.f32 %v1030, %v1137
  %v1259 = vadd.f32 %v1031, %v1138
  %v1260 = vadd.f32 %v1032, %v1138
  %v1261 = vadd.f32 %v1033, %v1138
  %v1262 = vadd.f32 %v1034, %v1138
  %v1263 = vadd.f32 %v1035, %v1139
  %v1264 = vadd.f32 %v1036, %v1139
  %v1265 = vadd.f32 %v1037, %v1139
  %v1266 = vadd.f32 %v1038, %v1139
  %v1267 = vadd.f32 %v1039, %v1140
  %v1268 = vadd.f32 %v1040, %v1140
  %v1269 = vadd.f32 %v1041, %v1140
  %v1270 = vadd.f32 %v1042, %v1140
  %v1271 = vadd.f32 %v1043, %v1141
  %v1272 = vadd.f32 %v1044, %v1141
  %v1273 = vadd.f32 %v1045, %v1141
  %v1274 = vadd.f32 %v1046, %v1141
  %v1275 = vadd.f32 %v1047, %v1142
  %v1276 = vadd.f32 %v1048, %v1142
  %v1277 = vadd.f32 %v1049, %v1142
  %v1278 = vadd.f32 %v1050, %v1142
  %v1279 = vadd.f32 %v1051, %v1143
  %v1280 = vadd.f32 %v1052, %v1143
  %v1281 = vadd.f32 %v1053, %v1143
  %v1282 = vadd.f32 %v1054, %v1143
  %v1283 = vadd.f32 %v1055, %v1144
  %v1284 = vadd.f32 %v1056, %v1144
  %v1285 = vadd.f32 %v1057, %v1144
  %v1286 = vadd.f32 %v1058, %v1144
  %v1287 = vadd.f32 %v1059, %v1145
  %v1288 = vadd.f32 %v1060, %v1145
  %v1289 = vadd.f32 %v1061, %v1145
  %v1290 = vadd.f32 %v1062, %v1145
  %v1291 = vadd.f32 %v1063, %v1146
  %v1292 = vadd.f32 %v1064, %v1146
  %v1293 = vadd.f32 %v1065, %v1146
  %v1294 = vadd.f32 %v1066, %v1146
  %v1295 = vadd.f32 %v1067, %v1147
  %v1296 = vadd.f32 %v1068, %v1147
  %v1297 = vadd.f32 %v1069, %v1147
  %v1298 = vadd.f32 %v1070, %v1147
  %v1299 = vadd.f32 %v1071, %v1148
  %v1300 = vadd.f32 %v1072, %v1148
  %v1301 = vadd.f32 %v1073, %v1148
  %v1302 = vadd.f32 %v1074, %v1148
  %v1303 = vadd.f32 %v1075, %v1149
  %v1304 = vadd.f32 %v1076, %v1149
  %v1305 = vadd.f32 %v1077, %v1149
  %v1306 = vadd.f32 %v1078, %v1149
  %v1307 = vadd.f32 %v1079, %v1150
  %v1308 = vadd.f32 %v1080, %v1150
  %v1309 = vadd.f32 %v1081, %v1150
  %v1310 = vadd.f32 %v1082, %v1150
  %v1311 = vld [vmem:[#allocation2] sm:$0xff]
  %v1312 = vld [vmem:[#allocation2 + $0x8] sm:$0xff]
  %v1313 = vld [vmem:[#allocation2 + $0x10] sm:$0xff]
  %v1314 = vld [vmem:[#allocation2 + $0x18] sm:$0xff]
  %v1315 = vadd.f32 %v1183, %v1184
  %v1316 = vadd.f32 %v1315, %v1185
  %v1317 = vadd.f32 %v1316, %v1186
  %v1318 = vrot.slane %v1317, 4
  %v1319 = vadd.f32 %v1317, %v1318
  %v1320 = vrot.slane %v1319, 2
  %v1321 = vadd.f32 %v1319, %v1320
  %v1322 = vrot.slane %v1321, 1
  %v1323 = vadd.f32 %v1321, %v1322
  %v1324 = vadd.f32 %v1187, %v1188
  %v1325 = vadd.f32 %v1324, %v1189
  %v1326 = vadd.f32 %v1325, %v1190
  %v1327 = vrot.slane %v1326, 4
  %v1328 = vadd.f32 %v1326, %v1327
  %v1329 = vrot.slane %v1328, 2
  %v1330 = vadd.f32 %v1328, %v1329
  %v1331 = vrot.slane %v1330, 1
  %v1332 = vadd.f32 %v1330, %v1331
  %v1333 = vadd.f32 %v1191, %v1192
  %v1334 = vadd.f32 %v1333, %v1193
  %v1335 = vadd.f32 %v1334, %v1194
  %v1336 = vrot.slane %v1335, 4
  %v1337 = vadd.f32 %v1335, %v1336
  %v1338 = vrot.slane %v1337, 2
  %v1339 = vadd.f32 %v1337, %v1338
  %v1340 = vrot.slane %v1339, 1
  %v1341 = vadd.f32 %v1339, %v1340
  %v1342 = vadd.f32 %v1195, %v1196
  %v1343 = vadd.f32 %v1342, %v1197
  %v1344 = vadd.f32 %v1343, %v1198
  %v1345 = vrot.slane %v1344, 4
  %v1346 = vadd.f32 %v1344, %v1345
  %v1347 = vrot.slane %v1346, 2
  %v1348 = vadd.f32 %v1346, %v1347
  %v1349 = vrot.slane %v1348, 1
  %v1350 = vadd.f32 %v1348, %v1349
  %v1351 = vadd.f32 %v1199, %v1200
  %v1352 = vadd.f32 %v1351, %v1201
  %v1353 = vadd.f32 %v1352, %v1202
  %v1354 = vrot.slane %v1353, 4
  %v1355 = vadd.f32 %v1353, %v1354
  %v1356 = vrot.slane %v1355, 2
  %v1357 = vadd.f32 %v1355, %v1356
  %v1358 = vrot.slane %v1357, 1
  %v1359 = vadd.f32 %v1357, %v1358
  %v1360 = vadd.f32 %v1203, %v1204
  %v1361 = vadd.f32 %v1360, %v1205
  %v1362 = vadd.f32 %v1361, %v1206
  %v1363 = vrot.slane %v1362, 4
  %v1364 = vadd.f32 %v1362, %v1363
  %v1365 = vrot.slane %v1364, 2
  %v1366 = vadd.f32 %v1364, %v1365
  %v1367 = vrot.slane %v1366, 1
  %v1368 = vadd.f32 %v1366, %v1367
  %v1369 = vadd.f32 %v1207, %v1208
  %v1370 = vadd.f32 %v1369, %v1209
  %v1371 = vadd.f32 %v1370, %v1210
  %v1372 = vrot.slane %v1371, 4
  %v1373 = vadd.f32 %v1371, %v1372
  %v1374 = vrot.slane %v1373, 2
  %v1375 = vadd.f32 %v1373, %v1374
  %v1376 = vrot.slane %v1375, 1
  %v1377 = vadd.f32 %v1375, %v1376
  %v1378 = vadd.f32 %v1211, %v1212
  %v1379 = vadd.f32 %v1378, %v1213
  %v1380 = vadd.f32 %v1379, %v1214
  %v1381 = vrot.slane %v1380, 4
  %v1382 = vadd.f32 %v1380, %v1381
  %v1383 = vrot.slane %v1382, 2
  %v1384 = vadd.f32 %v1382, %v1383
  %v1385 = vrot.slane %v1384, 1
  %v1386 = vadd.f32 %v1384, %v1385
  %v1387 = vadd.f32 %v1215, %v1216
  %v1388 = vadd.f32 %v1387, %v1217
  %v1389 = vadd.f32 %v1388, %v1218
  %v1390 = vrot.slane %v1389, 4
  %v1391 = vadd.f32 %v1389, %v1390
  %v1392 = vrot.slane %v1391, 2
  %v1393 = vadd.f32 %v1391, %v1392
  %v1394 = vrot.slane %v1393, 1
  %v1395 = vadd.f32 %v1393, %v1394
  %v1396 = vadd.f32 %v1219, %v1220
  %v1397 = vadd.f32 %v1396, %v1221
  %v1398 = vadd.f32 %v1397, %v1222
  %v1399 = vrot.slane %v1398, 4
  %v1400 = vadd.f32 %v1398, %v1399
  %v1401 = vrot.slane %v1400, 2
  %v1402 = vadd.f32 %v1400, %v1401
  %v1403 = vrot.slane %v1402, 1
  %v1404 = vadd.f32 %v1402, %v1403
  %v1405 = vadd.f32 %v1223, %v1224
  %v1406 = vadd.f32 %v1405, %v1225
  %v1407 = vadd.f32 %v1406, %v1226
  %v1408 = vrot.slane %v1407, 4
  %v1409 = vadd.f32 %v1407, %v1408
  %v1410 = vrot.slane %v1409, 2
  %v1411 = vadd.f32 %v1409, %v1410
  %v1412 = vrot.slane %v1411, 1
  %v1413 = vadd.f32 %v1411, %v1412
  %v1414 = vadd.f32 %v1227, %v1228
  %v1415 = vadd.f32 %v1414, %v1229
  %v1416 = vadd.f32 %v1415, %v1230
  %v1417 = vrot.slane %v1416, 4
  %v1418 = vadd.f32 %v1416, %v1417
  %v1419 = vrot.slane %v1418, 2
  %v1420 = vadd.f32 %v1418, %v1419
  %v1421 = vrot.slane %v1420, 1
  %v1422 = vadd.f32 %v1420, %v1421
  %v1423 = vadd.f32 %v1231, %v1232
  %v1424 = vadd.f32 %v1423, %v1233
  %v1425 = vadd.f32 %v1424, %v1234
  %v1426 = vrot.slane %v1425, 4
  %v1427 = vadd.f32 %v1425, %v1426
  %v1428 = vrot.slane %v1427, 2
  %v1429 = vadd.f32 %v1427, %v1428
  %v1430 = vrot.slane %v1429, 1
  %v1431 = vadd.f32 %v1429, %v1430
  %v1432 = vadd.f32 %v1235, %v1236
  %v1433 = vadd.f32 %v1432, %v1237
  %v1434 = vadd.f32 %v1433, %v1238
  %v1435 = vrot.slane %v1434, 4
  %v1436 = vadd.f32 %v1434, %v1435
  %v1437 = vrot.slane %v1436, 2
  %v1438 = vadd.f32 %v1436, %v1437
  %v1439 = vrot.slane %v1438, 1
  %v1440 = vadd.f32 %v1438, %v1439
  %v1441 = vadd.f32 %v1239, %v1240
  %v1442 = vadd.f32 %v1441, %v1241
  %v1443 = vadd.f32 %v1442, %v1242
  %v1444 = vrot.slane %v1443, 4
  %v1445 = vadd.f32 %v1443, %v1444
  %v1446 = vrot.slane %v1445, 2
  %v1447 = vadd.f32 %v1445, %v1446
  %v1448 = vrot.slane %v1447, 1
  %v1449 = vadd.f32 %v1447, %v1448
  %v1450 = vadd.f32 %v1243, %v1244
  %v1451 = vadd.f32 %v1450, %v1245
  %v1452 = vadd.f32 %v1451, %v1246
  %v1453 = vrot.slane %v1452, 4
  %v1454 = vadd.f32 %v1452, %v1453
  %v1455 = vrot.slane %v1454, 2
  %v1456 = vadd.f32 %v1454, %v1455
  %v1457 = vrot.slane %v1456, 1
  %v1458 = vadd.f32 %v1456, %v1457
  %v1459 = vadd.f32 %v1247, %v1248
  %v1460 = vadd.f32 %v1459, %v1249
  %v1461 = vadd.f32 %v1460, %v1250
  %v1462 = vrot.slane %v1461, 4
  %v1463 = vadd.f32 %v1461, %v1462
  %v1464 = vrot.slane %v1463, 2
  %v1465 = vadd.f32 %v1463, %v1464
  %v1466 = vrot.slane %v1465, 1
  %v1467 = vadd.f32 %v1465, %v1466
  %v1468 = vadd.f32 %v1251, %v1252
  %v1469 = vadd.f32 %v1468, %v1253
  %v1470 = vadd.f32 %v1469, %v1254
  %v1471 = vrot.slane %v1470, 4
  %v1472 = vadd.f32 %v1470, %v1471
  %v1473 = vrot.slane %v1472, 2
  %v1474 = vadd.f32 %v1472, %v1473
  %v1475 = vrot.slane %v1474, 1
  %v1476 = vadd.f32 %v1474, %v1475
  %v1477 = vadd.f32 %v1255, %v1256
  %v1478 = vadd.f32 %v1477, %v1257
  %v1479 = vadd.f32 %v1478, %v1258
  %v1480 = vrot.slane %v1479, 4
  %v1481 = vadd.f32 %v1479, %v1480
  %v1482 = vrot.slane %v1481, 2
  %v1483 = vadd.f32 %v1481, %v1482
  %v1484 = vrot.slane %v1483, 1
  %v1485 = vadd.f32 %v1483, %v1484
  %v1486 = vadd.f32 %v1259, %v1260
  %v1487 = vadd.f32 %v1486, %v1261
  %v1488 = vadd.f32 %v1487, %v1262
  %v1489 = vrot.slane %v1488, 4
  %v1490 = vadd.f32 %v1488, %v1489
  %v1491 = vrot.slane %v1490, 2
  %v1492 = vadd.f32 %v1490, %v1491
  %v1493 = vrot.slane %v1492, 1
  %v1494 = vadd.f32 %v1492, %v1493
  %v1495 = vadd.f32 %v1263, %v1264
  %v1496 = vadd.f32 %v1495, %v1265
  %v1497 = vadd.f32 %v1496, %v1266
  %v1498 = vrot.slane %v1497, 4
  %v1499 = vadd.f32 %v1497, %v1498
  %v1500 = vrot.slane %v1499, 2
  %v1501 = vadd.f32 %v1499, %v1500
  %v1502 = vrot.slane %v1501, 1
  %v1503 = vadd.f32 %v1501, %v1502
  %v1504 = vadd.f32 %v1267, %v1268
  %v1505 = vadd.f32 %v1504, %v1269
  %v1506 = vadd.f32 %v1505, %v1270
  %v1507 = vrot.slane %v1506, 4
  %v1508 = vadd.f32 %v1506, %v1507
  %v1509 = vrot.slane %v1508, 2
  %v1510 = vadd.f32 %v1508, %v1509
  %v1511 = vrot.slane %v1510, 1
  %v1512 = vadd.f32 %v1510, %v1511
  %v1513 = vadd.f32 %v1271, %v1272
  %v1514 = vadd.f32 %v1513, %v1273
  %v1515 = vadd.f32 %v1514, %v1274
  %v1516 = vrot.slane %v1515, 4
  %v1517 = vadd.f32 %v1515, %v1516
  %v1518 = vrot.slane %v1517, 2
  %v1519 = vadd.f32 %v1517, %v1518
  %v1520 = vrot.slane %v1519, 1
  %v1521 = vadd.f32 %v1519, %v1520
  %v1522 = vadd.f32 %v1275, %v1276
  %v1523 = vadd.f32 %v1522, %v1277
  %v1524 = vadd.f32 %v1523, %v1278
  %v1525 = vrot.slane %v1524, 4
  %v1526 = vadd.f32 %v1524, %v1525
  %v1527 = vrot.slane %v1526, 2
  %v1528 = vadd.f32 %v1526, %v1527
  %v1529 = vrot.slane %v1528, 1
  %v1530 = vadd.f32 %v1528, %v1529
  %v1531 = vadd.f32 %v1279, %v1280
  %v1532 = vadd.f32 %v1531, %v1281
  %v1533 = vadd.f32 %v1532, %v1282
  %v1534 = vrot.slane %v1533, 4
  %v1535 = vadd.f32 %v1533, %v1534
  %v1536 = vrot.slane %v1535, 2
  %v1537 = vadd.f32 %v1535, %v1536
  %v1538 = vrot.slane %v1537, 1
  %v1539 = vadd.f32 %v1537, %v1538
  %v1540 = vadd.f32 %v1283, %v1284
  %v1541 = vadd.f32 %v1540, %v1285
  %v1542 = vadd.f32 %v1541, %v1286
  %v1543 = vrot.slane %v1542, 4
  %v1544 = vadd.f32 %v1542, %v1543
  %v1545 = vrot.slane %v1544, 2
  %v1546 = vadd.f32 %v1544, %v1545
  %v1547 = vrot.slane %v1546, 1
  %v1548 = vadd.f32 %v1546, %v1547
  %v1549 = vadd.f32 %v1287, %v1288
  %v1550 = vadd.f32 %v1549, %v1289
  %v1551 = vadd.f32 %v1550, %v1290
  %v1552 = vrot.slane %v1551, 4
  %v1553 = vadd.f32 %v1551, %v1552
  %v1554 = vrot.slane %v1553, 2
  %v1555 = vadd.f32 %v1553, %v1554
  %v1556 = vrot.slane %v1555, 1
  %v1557 = vadd.f32 %v1555, %v1556
  %v1558 = vadd.f32 %v1291, %v1292
  %v1559 = vadd.f32 %v1558, %v1293
  %v1560 = vadd.f32 %v1559, %v1294
  %v1561 = vrot.slane %v1560, 4
  %v1562 = vadd.f32 %v1560, %v1561
  %v1563 = vrot.slane %v1562, 2
  %v1564 = vadd.f32 %v1562, %v1563
  %v1565 = vrot.slane %v1564, 1
  %v1566 = vadd.f32 %v1564, %v1565
  %v1567 = vadd.f32 %v1295, %v1296
  %v1568 = vadd.f32 %v1567, %v1297
  %v1569 = vadd.f32 %v1568, %v1298
  %v1570 = vrot.slane %v1569, 4
  %v1571 = vadd.f32 %v1569, %v1570
  %v1572 = vrot.slane %v1571, 2
  %v1573 = vadd.f32 %v1571, %v1572
  %v1574 = vrot.slane %v1573, 1
  %v1575 = vadd.f32 %v1573, %v1574
  %v1576 = vadd.f32 %v1299, %v1300
  %v1577 = vadd.f32 %v1576, %v1301
  %v1578 = vadd.f32 %v1577, %v1302
  %v1579 = vrot.slane %v1578, 4
  %v1580 = vadd.f32 %v1578, %v1579
  %v1581 = vrot.slane %v1580, 2
  %v1582 = vadd.f32 %v1580, %v1581
  %v1583 = vrot.slane %v1582, 1
  %v1584 = vadd.f32 %v1582, %v1583
  %v1585 = vadd.f32 %v1303, %v1304
  %v1586 = vadd.f32 %v1585, %v1305
  %v1587 = vadd.f32 %v1586, %v1306
  %v1588 = vrot.slane %v1587, 4
  %v1589 = vadd.f32 %v1587, %v1588
  %v1590 = vrot.slane %v1589, 2
  %v1591 = vadd.f32 %v1589, %v1590
  %v1592 = vrot.slane %v1591, 1
  %v1593 = vadd.f32 %v1591, %v1592
  %v1594 = vadd.f32 %v1307, %v1308
  %v1595 = vadd.f32 %v1594, %v1309
  %v1596 = vadd.f32 %v1595, %v1310
  %v1597 = vrot.slane %v1596, 4
  %v1598 = vadd.f32 %v1596, %v1597
  %v1599 = vrot.slane %v1598, 2
  %v1600 = vadd.f32 %v1598, %v1599
  %v1601 = vrot.slane %v1600, 1
  %v1602 = vadd.f32 %v1600, %v1601
  %vm1635 = vcmask 1041409
  %v1636 = vsel %vm1635, %v1332, %v1323
  %vm1637 = vcmask 1042434
  %v1638 = vsel %vm1637, %v1341, %v1636
  %vm1639 = vcmask 1043459
  %v1640 = vsel %vm1639, %v1350, %v1638
  %vm1641 = vcmask 1044484
  %v1642 = vsel %vm1641, %v1359, %v1640
  %vm1643 = vcmask 1045509
  %v1644 = vsel %vm1643, %v1368, %v1642
  %vm1645 = vcmask 1046534
  %v1646 = vsel %vm1645, %v1377, %v1644
  %vm1647 = vcmask 1047559
  %v1648 = vsel %vm1647, %v1386, %v1646
  %v1649 = vsel %vm1635, %v1404, %v1395
  %v1650 = vsel %vm1637, %v1413, %v1649
  %v1651 = vsel %vm1639, %v1422, %v1650
  %v1652 = vsel %vm1641, %v1431, %v1651
  %v1653 = vsel %vm1643, %v1440, %v1652
  %v1654 = vsel %vm1645, %v1449, %v1653
  %v1655 = vsel %vm1647, %v1458, %v1654
  %v1656 = vsel %vm1635, %v1476, %v1467
  %v1657 = vsel %vm1637, %v1485, %v1656
  %v1658 = vsel %vm1639, %v1494, %v1657
  %v1659 = vsel %vm1641, %v1503, %v1658
  %v1660 = vsel %vm1643, %v1512, %v1659
  %v1661 = vsel %vm1645, %v1521, %v1660
  %v1662 = vsel %vm1647, %v1530, %v1661
  %v1663 = vsel %vm1635, %v1548, %v1539
  %v1664 = vsel %vm1637, %v1557, %v1663
  %v1665 = vsel %vm1639, %v1566, %v1664
  %v1666 = vsel %vm1641, %v1575, %v1665
  %v1667 = vsel %vm1643, %v1584, %v1666
  %v1668 = vsel %vm1645, %v1593, %v1667
  %v1669 = vsel %vm1647, %v1602, %v1668
  %v1674 = vadd.f32 %v1311, %v1648
  %v1675 = vadd.f32 %v1312, %v1655
  %v1676 = vadd.f32 %v1313, %v1662
  %v1677 = vadd.f32 %v1314, %v1669
  %1678 = vst [vmem:[#allocation2] sm:$0xff] %v1674
  %1679 = vst [vmem:[#allocation2 + $0x8] sm:$0xff] %v1675
  %1680 = vst [vmem:[#allocation2 + $0x10] sm:$0xff] %v1676
  %1681 = vst [vmem:[#allocation2 + $0x18] sm:$0xff] %v1677
  %v1682 = vld [vmem:[#allocation3] sm:$0xff]
  %v1683 = vld [vmem:[#allocation3 + $0x8] sm:$0xff]
  %v1684 = vld [vmem:[#allocation3 + $0x10] sm:$0xff]
  %v1685 = vld [vmem:[#allocation3 + $0x18] sm:$0xff]
  %v1686 = vmul.f32 %v1183, %v1183
  %v1687 = vmul.f32 %v1184, %v1184
  %v1688 = vmul.f32 %v1185, %v1185
  %v1689 = vmul.f32 %v1186, %v1186
  %v1690 = vmul.f32 %v1187, %v1187
  %v1691 = vmul.f32 %v1188, %v1188
  %v1692 = vmul.f32 %v1189, %v1189
  %v1693 = vmul.f32 %v1190, %v1190
  %v1694 = vmul.f32 %v1191, %v1191
  %v1695 = vmul.f32 %v1192, %v1192
  %v1696 = vmul.f32 %v1193, %v1193
  %v1697 = vmul.f32 %v1194, %v1194
  %v1698 = vmul.f32 %v1195, %v1195
  %v1699 = vmul.f32 %v1196, %v1196
  %v1700 = vmul.f32 %v1197, %v1197
  %v1701 = vmul.f32 %v1198, %v1198
  %v1702 = vmul.f32 %v1199, %v1199
  %v1703 = vmul.f32 %v1200, %v1200
  %v1704 = vmul.f32 %v1201, %v1201
  %v1705 = vmul.f32 %v1202, %v1202
  %v1706 = vmul.f32 %v1203, %v1203
  %v1707 = vmul.f32 %v1204, %v1204
  %v1708 = vmul.f32 %v1205, %v1205
  %v1709 = vmul.f32 %v1206, %v1206
  %v1710 = vmul.f32 %v1207, %v1207
  %v1711 = vmul.f32 %v1208, %v1208
  %v1712 = vmul.f32 %v1209, %v1209
  %v1713 = vmul.f32 %v1210, %v1210
  %v1714 = vmul.f32 %v1211, %v1211
  %v1715 = vmul.f32 %v1212, %v1212
  %v1716 = vmul.f32 %v1213, %v1213
  %v1717 = vmul.f32 %v1214, %v1214
  %v1718 = vmul.f32 %v1215, %v1215
  %v1719 = vmul.f32 %v1216, %v1216
  %v1720 = vmul.f32 %v1217, %v1217
  %v1721 = vmul.f32 %v1218, %v1218
  %v1722 = vmul.f32 %v1219, %v1219
  %v1723 = vmul.f32 %v1220, %v1220
  %v1724 = vmul.f32 %v1221, %v1221
  %v1725 = vmul.f32 %v1222, %v1222
  %v1726 = vmul.f32 %v1223, %v1223
  %v1727 = vmul.f32 %v1224, %v1224
  %v1728 = vmul.f32 %v1225, %v1225
  %v1729 = vmul.f32 %v1226, %v1226
  %v1730 = vmul.f32 %v1227, %v1227
  %v1731 = vmul.f32 %v1228, %v1228
  %v1732 = vmul.f32 %v1229, %v1229
  %v1733 = vmul.f32 %v1230, %v1230
  %v1734 = vmul.f32 %v1231, %v1231
  %v1735 = vmul.f32 %v1232, %v1232
  %v1736 = vmul.f32 %v1233, %v1233
  %v1737 = vmul.f32 %v1234, %v1234
  %v1738 = vmul.f32 %v1235, %v1235
  %v1739 = vmul.f32 %v1236, %v1236
  %v1740 = vmul.f32 %v1237, %v1237
  %v1741 = vmul.f32 %v1238, %v1238
  %v1742 = vmul.f32 %v1239, %v1239
  %v1743 = vmul.f32 %v1240, %v1240
  %v1744 = vmul.f32 %v1241, %v1241
  %v1745 = vmul.f32 %v1242, %v1242
  %v1746 = vmul.f32 %v1243, %v1243
  %v1747 = vmul.f32 %v1244, %v1244
  %v1748 = vmul.f32 %v1245, %v1245
  %v1749 = vmul.f32 %v1246, %v1246
  %v1750 = vmul.f32 %v1247, %v1247
  %v1751 = vmul.f32 %v1248, %v1248
  %v1752 = vmul.f32 %v1249, %v1249
  %v1753 = vmul.f32 %v1250, %v1250
  %v1754 = vmul.f32 %v1251, %v1251
  %v1755 = vmul.f32 %v1252, %v1252
  %v1756 = vmul.f32 %v1253, %v1253
  %v1757 = vmul.f32 %v1254, %v1254
  %v1758 = vmul.f32 %v1255, %v1255
  %v1759 = vmul.f32 %v1256, %v1256
  %v1760 = vmul.f32 %v1257, %v1257
  %v1761 = vmul.f32 %v1258, %v1258
  %v1762 = vmul.f32 %v1259, %v1259
  %v1763 = vmul.f32 %v1260, %v1260
  %v1764 = vmul.f32 %v1261, %v1261
  %v1765 = vmul.f32 %v1262, %v1262
  %v1766 = vmul.f32 %v1263, %v1263
  %v1767 = vmul.f32 %v1264, %v1264
  %v1768 = vmul.f32 %v1265, %v1265
  %v1769 = vmul.f32 %v1266, %v1266
  %v1770 = vmul.f32 %v1267, %v1267
  %v1771 = vmul.f32 %v1268, %v1268
  %v1772 = vmul.f32 %v1269, %v1269
  %v1773 = vmul.f32 %v1270, %v1270
  %v1774 = vmul.f32 %v1271, %v1271
  %v1775 = vmul.f32 %v1272, %v1272
  %v1776 = vmul.f32 %v1273, %v1273
  %v1777 = vmul.f32 %v1274, %v1274
  %v1778 = vmul.f32 %v1275, %v1275
  %v1779 = vmul.f32 %v1276, %v1276
  %v1780 = vmul.f32 %v1277, %v1277
  %v1781 = vmul.f32 %v1278, %v1278
  %v1782 = vmul.f32 %v1279, %v1279
  %v1783 = vmul.f32 %v1280, %v1280
  %v1784 = vmul.f32 %v1281, %v1281
  %v1785 = vmul.f32 %v1282, %v1282
  %v1786 = vmul.f32 %v1283, %v1283
  %v1787 = vmul.f32 %v1284, %v1284
  %v1788 = vmul.f32 %v1285, %v1285
  %v1789 = vmul.f32 %v1286, %v1286
  %v1790 = vmul.f32 %v1287, %v1287
  %v1791 = vmul.f32 %v1288, %v1288
  %v1792 = vmul.f32 %v1289, %v1289
  %v1793 = vmul.f32 %v1290, %v1290
  %v1794 = vmul.f32 %v1291, %v1291
  %v1795 = vmul.f32 %v1292, %v1292
  %v1796 = vmul.f32 %v1293, %v1293
  %v1797 = vmul.f32 %v1294, %v1294
  %v1798 = vmul.f32 %v1295, %v1295
  %v1799 = vmul.f32 %v1296, %v1296
  %v1800 = vmul.f32 %v1297, %v1297
  %v1801 = vmul.f32 %v1298, %v1298
  %v1802 = vmul.f32 %v1299, %v1299
  %v1803 = vmul.f32 %v1300, %v1300
  %v1804 = vmul.f32 %v1301, %v1301
  %v1805 = vmul.f32 %v1302, %v1302
  %v1806 = vmul.f32 %v1303, %v1303
  %v1807 = vmul.f32 %v1304, %v1304
  %v1808 = vmul.f32 %v1305, %v1305
  %v1809 = vmul.f32 %v1306, %v1306
  %v1810 = vmul.f32 %v1307, %v1307
  %v1811 = vmul.f32 %v1308, %v1308
  %v1812 = vmul.f32 %v1309, %v1309
  %v1813 = vmul.f32 %v1310, %v1310
  %v1814 = vadd.f32 %v1686, %v1687
  %v1815 = vadd.f32 %v1814, %v1688
  %v1816 = vadd.f32 %v1815, %v1689
  %v1817 = vrot.slane %v1816, 4
  %v1818 = vadd.f32 %v1816, %v1817
  %v1819 = vrot.slane %v1818, 2
  %v1820 = vadd.f32 %v1818, %v1819
  %v1821 = vrot.slane %v1820, 1
  %v1822 = vadd.f32 %v1820, %v1821
  %v1823 = vadd.f32 %v1690, %v1691
  %v1824 = vadd.f32 %v1823, %v1692
  %v1825 = vadd.f32 %v1824, %v1693
  %v1826 = vrot.slane %v1825, 4
  %v1827 = vadd.f32 %v1825, %v1826
  %v1828 = vrot.slane %v1827, 2
  %v1829 = vadd.f32 %v1827, %v1828
  %v1830 = vrot.slane %v1829, 1
  %v1831 = vadd.f32 %v1829, %v1830
  %v1832 = vadd.f32 %v1694, %v1695
  %v1833 = vadd.f32 %v1832, %v1696
  %v1834 = vadd.f32 %v1833, %v1697
  %v1835 = vrot.slane %v1834, 4
  %v1836 = vadd.f32 %v1834, %v1835
  %v1837 = vrot.slane %v1836, 2
  %v1838 = vadd.f32 %v1836, %v1837
  %v1839 = vrot.slane %v1838, 1
  %v1840 = vadd.f32 %v1838, %v1839
  %v1841 = vadd.f32 %v1698, %v1699
  %v1842 = vadd.f32 %v1841, %v1700
  %v1843 = vadd.f32 %v1842, %v1701
  %v1844 = vrot.slane %v1843, 4
  %v1845 = vadd.f32 %v1843, %v1844
  %v1846 = vrot.slane %v1845, 2
  %v1847 = vadd.f32 %v1845, %v1846
  %v1848 = vrot.slane %v1847, 1
  %v1849 = vadd.f32 %v1847, %v1848
  %v1850 = vadd.f32 %v1702, %v1703
  %v1851 = vadd.f32 %v1850, %v1704
  %v1852 = vadd.f32 %v1851, %v1705
  %v1853 = vrot.slane %v1852, 4
  %v1854 = vadd.f32 %v1852, %v1853
  %v1855 = vrot.slane %v1854, 2
  %v1856 = vadd.f32 %v1854, %v1855
  %v1857 = vrot.slane %v1856, 1
  %v1858 = vadd.f32 %v1856, %v1857
  %v1859 = vadd.f32 %v1706, %v1707
  %v1860 = vadd.f32 %v1859, %v1708
  %v1861 = vadd.f32 %v1860, %v1709
  %v1862 = vrot.slane %v1861, 4
  %v1863 = vadd.f32 %v1861, %v1862
  %v1864 = vrot.slane %v1863, 2
  %v1865 = vadd.f32 %v1863, %v1864
  %v1866 = vrot.slane %v1865, 1
  %v1867 = vadd.f32 %v1865, %v1866
  %v1868 = vadd.f32 %v1710, %v1711
  %v1869 = vadd.f32 %v1868, %v1712
  %v1870 = vadd.f32 %v1869, %v1713
  %v1871 = vrot.slane %v1870, 4
  %v1872 = vadd.f32 %v1870, %v1871
  %v1873 = vrot.slane %v1872, 2
  %v1874 = vadd.f32 %v1872, %v1873
  %v1875 = vrot.slane %v1874, 1
  %v1876 = vadd.f32 %v1874, %v1875
  %v1877 = vadd.f32 %v1714, %v1715
  %v1878 = vadd.f32 %v1877, %v1716
  %v1879 = vadd.f32 %v1878, %v1717
  %v1880 = vrot.slane %v1879, 4
  %v1881 = vadd.f32 %v1879, %v1880
  %v1882 = vrot.slane %v1881, 2
  %v1883 = vadd.f32 %v1881, %v1882
  %v1884 = vrot.slane %v1883, 1
  %v1885 = vadd.f32 %v1883, %v1884
  %v1886 = vadd.f32 %v1718, %v1719
  %v1887 = vadd.f32 %v1886, %v1720
  %v1888 = vadd.f32 %v1887, %v1721
  %v1889 = vrot.slane %v1888, 4
  %v1890 = vadd.f32 %v1888, %v1889
  %v1891 = vrot.slane %v1890, 2
  %v1892 = vadd.f32 %v1890, %v1891
  %v1893 = vrot.slane %v1892, 1
  %v1894 = vadd.f32 %v1892, %v1893
  %v1895 = vadd.f32 %v1722, %v1723
  %v1896 = vadd.f32 %v1895, %v1724
  %v1897 = vadd.f32 %v1896, %v1725
  %v1898 = vrot.slane %v1897, 4
  %v1899 = vadd.f32 %v1897, %v1898
  %v1900 = vrot.slane %v1899, 2
  %v1901 = vadd.f32 %v1899, %v1900
  %v1902 = vrot.slane %v1901, 1
  %v1903 = vadd.f32 %v1901, %v1902
  %v1904 = vadd.f32 %v1726, %v1727
  %v1905 = vadd.f32 %v1904, %v1728
  %v1906 = vadd.f32 %v1905, %v1729
  %v1907 = vrot.slane %v1906, 4
  %v1908 = vadd.f32 %v1906, %v1907
  %v1909 = vrot.slane %v1908, 2
  %v1910 = vadd.f32 %v1908, %v1909
  %v1911 = vrot.slane %v1910, 1
  %v1912 = vadd.f32 %v1910, %v1911
  %v1913 = vadd.f32 %v1730, %v1731
  %v1914 = vadd.f32 %v1913, %v1732
  %v1915 = vadd.f32 %v1914, %v1733
  %v1916 = vrot.slane %v1915, 4
  %v1917 = vadd.f32 %v1915, %v1916
  %v1918 = vrot.slane %v1917, 2
  %v1919 = vadd.f32 %v1917, %v1918
  %v1920 = vrot.slane %v1919, 1
  %v1921 = vadd.f32 %v1919, %v1920
  %v1922 = vadd.f32 %v1734, %v1735
  %v1923 = vadd.f32 %v1922, %v1736
  %v1924 = vadd.f32 %v1923, %v1737
  %v1925 = vrot.slane %v1924, 4
  %v1926 = vadd.f32 %v1924, %v1925
  %v1927 = vrot.slane %v1926, 2
  %v1928 = vadd.f32 %v1926, %v1927
  %v1929 = vrot.slane %v1928, 1
  %v1930 = vadd.f32 %v1928, %v1929
  %v1931 = vadd.f32 %v1738, %v1739
  %v1932 = vadd.f32 %v1931, %v1740
  %v1933 = vadd.f32 %v1932, %v1741
  %v1934 = vrot.slane %v1933, 4
  %v1935 = vadd.f32 %v1933, %v1934
  %v1936 = vrot.slane %v1935, 2
  %v1937 = vadd.f32 %v1935, %v1936
  %v1938 = vrot.slane %v1937, 1
  %v1939 = vadd.f32 %v1937, %v1938
  %v1940 = vadd.f32 %v1742, %v1743
  %v1941 = vadd.f32 %v1940, %v1744
  %v1942 = vadd.f32 %v1941, %v1745
  %v1943 = vrot.slane %v1942, 4
  %v1944 = vadd.f32 %v1942, %v1943
  %v1945 = vrot.slane %v1944, 2
  %v1946 = vadd.f32 %v1944, %v1945
  %v1947 = vrot.slane %v1946, 1
  %v1948 = vadd.f32 %v1946, %v1947
  %v1949 = vadd.f32 %v1746, %v1747
  %v1950 = vadd.f32 %v1949, %v1748
  %v1951 = vadd.f32 %v1950, %v1749
  %v1952 = vrot.slane %v1951, 4
  %v1953 = vadd.f32 %v1951, %v1952
  %v1954 = vrot.slane %v1953, 2
  %v1955 = vadd.f32 %v1953, %v1954
  %v1956 = vrot.slane %v1955, 1
  %v1957 = vadd.f32 %v1955, %v1956
  %v1958 = vadd.f32 %v1750, %v1751
  %v1959 = vadd.f32 %v1958, %v1752
  %v1960 = vadd.f32 %v1959, %v1753
  %v1961 = vrot.slane %v1960, 4
  %v1962 = vadd.f32 %v1960, %v1961
  %v1963 = vrot.slane %v1962, 2
  %v1964 = vadd.f32 %v1962, %v1963
  %v1965 = vrot.slane %v1964, 1
  %v1966 = vadd.f32 %v1964, %v1965
  %v1967 = vadd.f32 %v1754, %v1755
  %v1968 = vadd.f32 %v1967, %v1756
  %v1969 = vadd.f32 %v1968, %v1757
  %v1970 = vrot.slane %v1969, 4
  %v1971 = vadd.f32 %v1969, %v1970
  %v1972 = vrot.slane %v1971, 2
  %v1973 = vadd.f32 %v1971, %v1972
  %v1974 = vrot.slane %v1973, 1
  %v1975 = vadd.f32 %v1973, %v1974
  %v1976 = vadd.f32 %v1758, %v1759
  %v1977 = vadd.f32 %v1976, %v1760
  %v1978 = vadd.f32 %v1977, %v1761
  %v1979 = vrot.slane %v1978, 4
  %v1980 = vadd.f32 %v1978, %v1979
  %v1981 = vrot.slane %v1980, 2
  %v1982 = vadd.f32 %v1980, %v1981
  %v1983 = vrot.slane %v1982, 1
  %v1984 = vadd.f32 %v1982, %v1983
  %v1985 = vadd.f32 %v1762, %v1763
  %v1986 = vadd.f32 %v1985, %v1764
  %v1987 = vadd.f32 %v1986, %v1765
  %v1988 = vrot.slane %v1987, 4
  %v1989 = vadd.f32 %v1987, %v1988
  %v1990 = vrot.slane %v1989, 2
  %v1991 = vadd.f32 %v1989, %v1990
  %v1992 = vrot.slane %v1991, 1
  %v1993 = vadd.f32 %v1991, %v1992
  %v1994 = vadd.f32 %v1766, %v1767
  %v1995 = vadd.f32 %v1994, %v1768
  %v1996 = vadd.f32 %v1995, %v1769
  %v1997 = vrot.slane %v1996, 4
  %v1998 = vadd.f32 %v1996, %v1997
  %v1999 = vrot.slane %v1998, 2
  %v2000 = vadd.f32 %v1998, %v1999
  %v2001 = vrot.slane %v2000, 1
  %v2002 = vadd.f32 %v2000, %v2001
  %v2003 = vadd.f32 %v1770, %v1771
  %v2004 = vadd.f32 %v2003, %v1772
  %v2005 = vadd.f32 %v2004, %v1773
  %v2006 = vrot.slane %v2005, 4
  %v2007 = vadd.f32 %v2005, %v2006
  %v2008 = vrot.slane %v2007, 2
  %v2009 = vadd.f32 %v2007, %v2008
  %v2010 = vrot.slane %v2009, 1
  %v2011 = vadd.f32 %v2009, %v2010
  %v2012 = vadd.f32 %v1774, %v1775
  %v2013 = vadd.f32 %v2012, %v1776
  %v2014 = vadd.f32 %v2013, %v1777
  %v2015 = vrot.slane %v2014, 4
  %v2016 = vadd.f32 %v2014, %v2015
  %v2017 = vrot.slane %v2016, 2
  %v2018 = vadd.f32 %v2016, %v2017
  %v2019 = vrot.slane %v2018, 1
  %v2020 = vadd.f32 %v2018, %v2019
  %v2021 = vadd.f32 %v1778, %v1779
  %v2022 = vadd.f32 %v2021, %v1780
  %v2023 = vadd.f32 %v2022, %v1781
  %v2024 = vrot.slane %v2023, 4
  %v2025 = vadd.f32 %v2023, %v2024
  %v2026 = vrot.slane %v2025, 2
  %v2027 = vadd.f32 %v2025, %v2026
  %v2028 = vrot.slane %v2027, 1
  %v2029 = vadd.f32 %v2027, %v2028
  %v2030 = vadd.f32 %v1782, %v1783
  %v2031 = vadd.f32 %v2030, %v1784
  %v2032 = vadd.f32 %v2031, %v1785
  %v2033 = vrot.slane %v2032, 4
  %v2034 = vadd.f32 %v2032, %v2033
  %v2035 = vrot.slane %v2034, 2
  %v2036 = vadd.f32 %v2034, %v2035
  %v2037 = vrot.slane %v2036, 1
  %v2038 = vadd.f32 %v2036, %v2037
  %v2039 = vadd.f32 %v1786, %v1787
  %v2040 = vadd.f32 %v2039, %v1788
  %v2041 = vadd.f32 %v2040, %v1789
  %v2042 = vrot.slane %v2041, 4
  %v2043 = vadd.f32 %v2041, %v2042
  %v2044 = vrot.slane %v2043, 2
  %v2045 = vadd.f32 %v2043, %v2044
  %v2046 = vrot.slane %v2045, 1
  %v2047 = vadd.f32 %v2045, %v2046
  %v2048 = vadd.f32 %v1790, %v1791
  %v2049 = vadd.f32 %v2048, %v1792
  %v2050 = vadd.f32 %v2049, %v1793
  %v2051 = vrot.slane %v2050, 4
  %v2052 = vadd.f32 %v2050, %v2051
  %v2053 = vrot.slane %v2052, 2
  %v2054 = vadd.f32 %v2052, %v2053
  %v2055 = vrot.slane %v2054, 1
  %v2056 = vadd.f32 %v2054, %v2055
  %v2057 = vadd.f32 %v1794, %v1795
  %v2058 = vadd.f32 %v2057, %v1796
  %v2059 = vadd.f32 %v2058, %v1797
  %v2060 = vrot.slane %v2059, 4
  %v2061 = vadd.f32 %v2059, %v2060
  %v2062 = vrot.slane %v2061, 2
  %v2063 = vadd.f32 %v2061, %v2062
  %v2064 = vrot.slane %v2063, 1
  %v2065 = vadd.f32 %v2063, %v2064
  %v2066 = vadd.f32 %v1798, %v1799
  %v2067 = vadd.f32 %v2066, %v1800
  %v2068 = vadd.f32 %v2067, %v1801
  %v2069 = vrot.slane %v2068, 4
  %v2070 = vadd.f32 %v2068, %v2069
  %v2071 = vrot.slane %v2070, 2
  %v2072 = vadd.f32 %v2070, %v2071
  %v2073 = vrot.slane %v2072, 1
  %v2074 = vadd.f32 %v2072, %v2073
  %v2075 = vadd.f32 %v1802, %v1803
  %v2076 = vadd.f32 %v2075, %v1804
  %v2077 = vadd.f32 %v2076, %v1805
  %v2078 = vrot.slane %v2077, 4
  %v2079 = vadd.f32 %v2077, %v2078
  %v2080 = vrot.slane %v2079, 2
  %v2081 = vadd.f32 %v2079, %v2080
  %v2082 = vrot.slane %v2081, 1
  %v2083 = vadd.f32 %v2081, %v2082
  %v2084 = vadd.f32 %v1806, %v1807
  %v2085 = vadd.f32 %v2084, %v1808
  %v2086 = vadd.f32 %v2085, %v1809
  %v2087 = vrot.slane %v2086, 4
  %v2088 = vadd.f32 %v2086, %v2087
  %v2089 = vrot.slane %v2088, 2
  %v2090 = vadd.f32 %v2088, %v2089
  %v2091 = vrot.slane %v2090, 1
  %v2092 = vadd.f32 %v2090, %v2091
  %v2093 = vadd.f32 %v1810, %v1811
  %v2094 = vadd.f32 %v2093, %v1812
  %v2095 = vadd.f32 %v2094, %v1813
  %v2096 = vrot.slane %v2095, 4
  %v2097 = vadd.f32 %v2095, %v2096
  %v2098 = vrot.slane %v2097, 2
  %v2099 = vadd.f32 %v2097, %v2098
  %v2100 = vrot.slane %v2099, 1
  %v2101 = vadd.f32 %v2099, %v2100
  %v2134 = vsel %vm1635, %v1831, %v1822
  %v2135 = vsel %vm1637, %v1840, %v2134
  %v2136 = vsel %vm1639, %v1849, %v2135
  %v2137 = vsel %vm1641, %v1858, %v2136
  %v2138 = vsel %vm1643, %v1867, %v2137
  %v2139 = vsel %vm1645, %v1876, %v2138
  %v2140 = vsel %vm1647, %v1885, %v2139
  %v2141 = vsel %vm1635, %v1903, %v1894
  %v2142 = vsel %vm1637, %v1912, %v2141
  %v2143 = vsel %vm1639, %v1921, %v2142
  %v2144 = vsel %vm1641, %v1930, %v2143
  %v2145 = vsel %vm1643, %v1939, %v2144
  %v2146 = vsel %vm1645, %v1948, %v2145
  %v2147 = vsel %vm1647, %v1957, %v2146
  %v2148 = vsel %vm1635, %v1975, %v1966
  %v2149 = vsel %vm1637, %v1984, %v2148
  %v2150 = vsel %vm1639, %v1993, %v2149
  %v2151 = vsel %vm1641, %v2002, %v2150
  %v2152 = vsel %vm1643, %v2011, %v2151
  %v2153 = vsel %vm1645, %v2020, %v2152
  %v2154 = vsel %vm1647, %v2029, %v2153
  %v2155 = vsel %vm1635, %v2047, %v2038
  %v2156 = vsel %vm1637, %v2056, %v2155
  %v2157 = vsel %vm1639, %v2065, %v2156
  %v2158 = vsel %vm1641, %v2074, %v2157
  %v2159 = vsel %vm1643, %v2083, %v2158
  %v2160 = vsel %vm1645, %v2092, %v2159
  %v2161 = vsel %vm1647, %v2101, %v2160
  %v2166 = vadd.f32 %v1682, %v2140
  %v2167 = vadd.f32 %v1683, %v2147
  %v2168 = vadd.f32 %v1684, %v2154
  %v2169 = vadd.f32 %v1685, %v2161
  %2170 = vst [vmem:[#allocation3] sm:$0xff] %v2166
  %2171 = vst [vmem:[#allocation3 + $0x8] sm:$0xff] %v2167
  %2172 = vst [vmem:[#allocation3 + $0x10] sm:$0xff] %v2168
  %2173 = vst [vmem:[#allocation3 + $0x18] sm:$0xff] %v2169
  %v2174 = vld [vmem:[#allocation4] sm:$0xff]
  %v2175 = vld [vmem:[#allocation4 + $0x8] sm:$0xff]
  %v2176 = vld [vmem:[#allocation4 + $0x10] sm:$0xff]
  %v2177 = vld [vmem:[#allocation4 + $0x18] sm:$0xff]
  %v2178 = vmax.f32 %v1183, %v1184
  %v2179 = vmax.f32 %v2178, %v1185
  %v2180 = vmax.f32 %v2179, %v1186
  %v2181 = vrot.slane %v2180, 4
  %v2182 = vmax.f32 %v2180, %v2181
  %v2183 = vrot.slane %v2182, 2
  %v2184 = vmax.f32 %v2182, %v2183
  %v2185 = vrot.slane %v2184, 1
  %v2186 = vmax.f32 %v2184, %v2185
  %v2187 = vmax.f32 %v1187, %v1188
  %v2188 = vmax.f32 %v2187, %v1189
  %v2189 = vmax.f32 %v2188, %v1190
  %v2190 = vrot.slane %v2189, 4
  %v2191 = vmax.f32 %v2189, %v2190
  %v2192 = vrot.slane %v2191, 2
  %v2193 = vmax.f32 %v2191, %v2192
  %v2194 = vrot.slane %v2193, 1
  %v2195 = vmax.f32 %v2193, %v2194
  %v2196 = vmax.f32 %v1191, %v1192
  %v2197 = vmax.f32 %v2196, %v1193
  %v2198 = vmax.f32 %v2197, %v1194
  %v2199 = vrot.slane %v2198, 4
  %v2200 = vmax.f32 %v2198, %v2199
  %v2201 = vrot.slane %v2200, 2
  %v2202 = vmax.f32 %v2200, %v2201
  %v2203 = vrot.slane %v2202, 1
  %v2204 = vmax.f32 %v2202, %v2203
  %v2205 = vmax.f32 %v1195, %v1196
  %v2206 = vmax.f32 %v2205, %v1197
  %v2207 = vmax.f32 %v2206, %v1198
  %v2208 = vrot.slane %v2207, 4
  %v2209 = vmax.f32 %v2207, %v2208
  %v2210 = vrot.slane %v2209, 2
  %v2211 = vmax.f32 %v2209, %v2210
  %v2212 = vrot.slane %v2211, 1
  %v2213 = vmax.f32 %v2211, %v2212
  %v2214 = vmax.f32 %v1199, %v1200
  %v2215 = vmax.f32 %v2214, %v1201
  %v2216 = vmax.f32 %v2215, %v1202
  %v2217 = vrot.slane %v2216, 4
  %v2218 = vmax.f32 %v2216, %v2217
  %v2219 = vrot.slane %v2218, 2
  %v2220 = vmax.f32 %v2218, %v2219
  %v2221 = vrot.slane %v2220, 1
  %v2222 = vmax.f32 %v2220, %v2221
  %v2223 = vmax.f32 %v1203, %v1204
  %v2224 = vmax.f32 %v2223, %v1205
  %v2225 = vmax.f32 %v2224, %v1206
  %v2226 = vrot.slane %v2225, 4
  %v2227 = vmax.f32 %v2225, %v2226
  %v2228 = vrot.slane %v2227, 2
  %v2229 = vmax.f32 %v2227, %v2228
  %v2230 = vrot.slane %v2229, 1
  %v2231 = vmax.f32 %v2229, %v2230
  %v2232 = vmax.f32 %v1207, %v1208
  %v2233 = vmax.f32 %v2232, %v1209
  %v2234 = vmax.f32 %v2233, %v1210
  %v2235 = vrot.slane %v2234, 4
  %v2236 = vmax.f32 %v2234, %v2235
  %v2237 = vrot.slane %v2236, 2
  %v2238 = vmax.f32 %v2236, %v2237
  %v2239 = vrot.slane %v2238, 1
  %v2240 = vmax.f32 %v2238, %v2239
  %v2241 = vmax.f32 %v1211, %v1212
  %v2242 = vmax.f32 %v2241, %v1213
  %v2243 = vmax.f32 %v2242, %v1214
  %v2244 = vrot.slane %v2243, 4
  %v2245 = vmax.f32 %v2243, %v2244
  %v2246 = vrot.slane %v2245, 2
  %v2247 = vmax.f32 %v2245, %v2246
  %v2248 = vrot.slane %v2247, 1
  %v2249 = vmax.f32 %v2247, %v2248
  %v2250 = vmax.f32 %v1215, %v1216
  %v2251 = vmax.f32 %v2250, %v1217
  %v2252 = vmax.f32 %v2251, %v1218
  %v2253 = vrot.slane %v2252, 4
  %v2254 = vmax.f32 %v2252, %v2253
  %v2255 = vrot.slane %v2254, 2
  %v2256 = vmax.f32 %v2254, %v2255
  %v2257 = vrot.slane %v2256, 1
  %v2258 = vmax.f32 %v2256, %v2257
  %v2259 = vmax.f32 %v1219, %v1220
  %v2260 = vmax.f32 %v2259, %v1221
  %v2261 = vmax.f32 %v2260, %v1222
  %v2262 = vrot.slane %v2261, 4
  %v2263 = vmax.f32 %v2261, %v2262
  %v2264 = vrot.slane %v2263, 2
  %v2265 = vmax.f32 %v2263, %v2264
  %v2266 = vrot.slane %v2265, 1
  %v2267 = vmax.f32 %v2265, %v2266
  %v2268 = vmax.f32 %v1223, %v1224
  %v2269 = vmax.f32 %v2268, %v1225
  %v2270 = vmax.f32 %v2269, %v1226
  %v2271 = vrot.slane %v2270, 4
  %v2272 = vmax.f32 %v2270, %v2271
  %v2273 = vrot.slane %v2272, 2
  %v2274 = vmax.f32 %v2272, %v2273
  %v2275 = vrot.slane %v2274, 1
  %v2276 = vmax.f32 %v2274, %v2275
  %v2277 = vmax.f32 %v1227, %v1228
  %v2278 = vmax.f32 %v2277, %v1229
  %v2279 = vmax.f32 %v2278, %v1230
  %v2280 = vrot.slane %v2279, 4
  %v2281 = vmax.f32 %v2279, %v2280
  %v2282 = vrot.slane %v2281, 2
  %v2283 = vmax.f32 %v2281, %v2282
  %v2284 = vrot.slane %v2283, 1
  %v2285 = vmax.f32 %v2283, %v2284
  %v2286 = vmax.f32 %v1231, %v1232
  %v2287 = vmax.f32 %v2286, %v1233
  %v2288 = vmax.f32 %v2287, %v1234
  %v2289 = vrot.slane %v2288, 4
  %v2290 = vmax.f32 %v2288, %v2289
  %v2291 = vrot.slane %v2290, 2
  %v2292 = vmax.f32 %v2290, %v2291
  %v2293 = vrot.slane %v2292, 1
  %v2294 = vmax.f32 %v2292, %v2293
  %v2295 = vmax.f32 %v1235, %v1236
  %v2296 = vmax.f32 %v2295, %v1237
  %v2297 = vmax.f32 %v2296, %v1238
  %v2298 = vrot.slane %v2297, 4
  %v2299 = vmax.f32 %v2297, %v2298
  %v2300 = vrot.slane %v2299, 2
  %v2301 = vmax.f32 %v2299, %v2300
  %v2302 = vrot.slane %v2301, 1
  %v2303 = vmax.f32 %v2301, %v2302
  %v2304 = vmax.f32 %v1239, %v1240
  %v2305 = vmax.f32 %v2304, %v1241
  %v2306 = vmax.f32 %v2305, %v1242
  %v2307 = vrot.slane %v2306, 4
  %v2308 = vmax.f32 %v2306, %v2307
  %v2309 = vrot.slane %v2308, 2
  %v2310 = vmax.f32 %v2308, %v2309
  %v2311 = vrot.slane %v2310, 1
  %v2312 = vmax.f32 %v2310, %v2311
  %v2313 = vmax.f32 %v1243, %v1244
  %v2314 = vmax.f32 %v2313, %v1245
  %v2315 = vmax.f32 %v2314, %v1246
  %v2316 = vrot.slane %v2315, 4
  %v2317 = vmax.f32 %v2315, %v2316
  %v2318 = vrot.slane %v2317, 2
  %v2319 = vmax.f32 %v2317, %v2318
  %v2320 = vrot.slane %v2319, 1
  %v2321 = vmax.f32 %v2319, %v2320
  %v2322 = vmax.f32 %v1247, %v1248
  %v2323 = vmax.f32 %v2322, %v1249
  %v2324 = vmax.f32 %v2323, %v1250
  %v2325 = vrot.slane %v2324, 4
  %v2326 = vmax.f32 %v2324, %v2325
  %v2327 = vrot.slane %v2326, 2
  %v2328 = vmax.f32 %v2326, %v2327
  %v2329 = vrot.slane %v2328, 1
  %v2330 = vmax.f32 %v2328, %v2329
  %v2331 = vmax.f32 %v1251, %v1252
  %v2332 = vmax.f32 %v2331, %v1253
  %v2333 = vmax.f32 %v2332, %v1254
  %v2334 = vrot.slane %v2333, 4
  %v2335 = vmax.f32 %v2333, %v2334
  %v2336 = vrot.slane %v2335, 2
  %v2337 = vmax.f32 %v2335, %v2336
  %v2338 = vrot.slane %v2337, 1
  %v2339 = vmax.f32 %v2337, %v2338
  %v2340 = vmax.f32 %v1255, %v1256
  %v2341 = vmax.f32 %v2340, %v1257
  %v2342 = vmax.f32 %v2341, %v1258
  %v2343 = vrot.slane %v2342, 4
  %v2344 = vmax.f32 %v2342, %v2343
  %v2345 = vrot.slane %v2344, 2
  %v2346 = vmax.f32 %v2344, %v2345
  %v2347 = vrot.slane %v2346, 1
  %v2348 = vmax.f32 %v2346, %v2347
  %v2349 = vmax.f32 %v1259, %v1260
  %v2350 = vmax.f32 %v2349, %v1261
  %v2351 = vmax.f32 %v2350, %v1262
  %v2352 = vrot.slane %v2351, 4
  %v2353 = vmax.f32 %v2351, %v2352
  %v2354 = vrot.slane %v2353, 2
  %v2355 = vmax.f32 %v2353, %v2354
  %v2356 = vrot.slane %v2355, 1
  %v2357 = vmax.f32 %v2355, %v2356
  %v2358 = vmax.f32 %v1263, %v1264
  %v2359 = vmax.f32 %v2358, %v1265
  %v2360 = vmax.f32 %v2359, %v1266
  %v2361 = vrot.slane %v2360, 4
  %v2362 = vmax.f32 %v2360, %v2361
  %v2363 = vrot.slane %v2362, 2
  %v2364 = vmax.f32 %v2362, %v2363
  %v2365 = vrot.slane %v2364, 1
  %v2366 = vmax.f32 %v2364, %v2365
  %v2367 = vmax.f32 %v1267, %v1268
  %v2368 = vmax.f32 %v2367, %v1269
  %v2369 = vmax.f32 %v2368, %v1270
  %v2370 = vrot.slane %v2369, 4
  %v2371 = vmax.f32 %v2369, %v2370
  %v2372 = vrot.slane %v2371, 2
  %v2373 = vmax.f32 %v2371, %v2372
  %v2374 = vrot.slane %v2373, 1
  %v2375 = vmax.f32 %v2373, %v2374
  %v2376 = vmax.f32 %v1271, %v1272
  %v2377 = vmax.f32 %v2376, %v1273
  %v2378 = vmax.f32 %v2377, %v1274
  %v2379 = vrot.slane %v2378, 4
  %v2380 = vmax.f32 %v2378, %v2379
  %v2381 = vrot.slane %v2380, 2
  %v2382 = vmax.f32 %v2380, %v2381
  %v2383 = vrot.slane %v2382, 1
  %v2384 = vmax.f32 %v2382, %v2383
  %v2385 = vmax.f32 %v1275, %v1276
  %v2386 = vmax.f32 %v2385, %v1277
  %v2387 = vmax.f32 %v2386, %v1278
  %v2388 = vrot.slane %v2387, 4
  %v2389 = vmax.f32 %v2387, %v2388
  %v2390 = vrot.slane %v2389, 2
  %v2391 = vmax.f32 %v2389, %v2390
  %v2392 = vrot.slane %v2391, 1
  %v2393 = vmax.f32 %v2391, %v2392
  %v2394 = vmax.f32 %v1279, %v1280
  %v2395 = vmax.f32 %v2394, %v1281
  %v2396 = vmax.f32 %v2395, %v1282
  %v2397 = vrot.slane %v2396, 4
  %v2398 = vmax.f32 %v2396, %v2397
  %v2399 = vrot.slane %v2398, 2
  %v2400 = vmax.f32 %v2398, %v2399
  %v2401 = vrot.slane %v2400, 1
  %v2402 = vmax.f32 %v2400, %v2401
  %v2403 = vmax.f32 %v1283, %v1284
  %v2404 = vmax.f32 %v2403, %v1285
  %v2405 = vmax.f32 %v2404, %v1286
  %v2406 = vrot.slane %v2405, 4
  %v2407 = vmax.f32 %v2405, %v2406
  %v2408 = vrot.slane %v2407, 2
  %v2409 = vmax.f32 %v2407, %v2408
  %v2410 = vrot.slane %v2409, 1
  %v2411 = vmax.f32 %v2409, %v2410
  %v2412 = vmax.f32 %v1287, %v1288
  %v2413 = vmax.f32 %v2412, %v1289
  %v2414 = vmax.f32 %v2413, %v1290
  %v2415 = vrot.slane %v2414, 4
  %v2416 = vmax.f32 %v2414, %v2415
  %v2417 = vrot.slane %v2416, 2
  %v2418 = vmax.f32 %v2416, %v2417
  %v2419 = vrot.slane %v2418, 1
  %v2420 = vmax.f32 %v2418, %v2419
  %v2421 = vmax.f32 %v1291, %v1292
  %v2422 = vmax.f32 %v2421, %v1293
  %v2423 = vmax.f32 %v2422, %v1294
  %v2424 = vrot.slane %v2423, 4
  %v2425 = vmax.f32 %v2423, %v2424
  %v2426 = vrot.slane %v2425, 2
  %v2427 = vmax.f32 %v2425, %v2426
  %v2428 = vrot.slane %v2427, 1
  %v2429 = vmax.f32 %v2427, %v2428
  %v2430 = vmax.f32 %v1295, %v1296
  %v2431 = vmax.f32 %v2430, %v1297
  %v2432 = vmax.f32 %v2431, %v1298
  %v2433 = vrot.slane %v2432, 4
  %v2434 = vmax.f32 %v2432, %v2433
  %v2435 = vrot.slane %v2434, 2
  %v2436 = vmax.f32 %v2434, %v2435
  %v2437 = vrot.slane %v2436, 1
  %v2438 = vmax.f32 %v2436, %v2437
  %v2439 = vmax.f32 %v1299, %v1300
  %v2440 = vmax.f32 %v2439, %v1301
  %v2441 = vmax.f32 %v2440, %v1302
  %v2442 = vrot.slane %v2441, 4
  %v2443 = vmax.f32 %v2441, %v2442
  %v2444 = vrot.slane %v2443, 2
  %v2445 = vmax.f32 %v2443, %v2444
  %v2446 = vrot.slane %v2445, 1
  %v2447 = vmax.f32 %v2445, %v2446
  %v2448 = vmax.f32 %v1303, %v1304
  %v2449 = vmax.f32 %v2448, %v1305
  %v2450 = vmax.f32 %v2449, %v1306
  %v2451 = vrot.slane %v2450, 4
  %v2452 = vmax.f32 %v2450, %v2451
  %v2453 = vrot.slane %v2452, 2
  %v2454 = vmax.f32 %v2452, %v2453
  %v2455 = vrot.slane %v2454, 1
  %v2456 = vmax.f32 %v2454, %v2455
  %v2457 = vmax.f32 %v1307, %v1308
  %v2458 = vmax.f32 %v2457, %v1309
  %v2459 = vmax.f32 %v2458, %v1310
  %v2460 = vrot.slane %v2459, 4
  %v2461 = vmax.f32 %v2459, %v2460
  %v2462 = vrot.slane %v2461, 2
  %v2463 = vmax.f32 %v2461, %v2462
  %v2464 = vrot.slane %v2463, 1
  %v2465 = vmax.f32 %v2463, %v2464
  %v2498 = vsel %vm1635, %v2195, %v2186
  %v2499 = vsel %vm1637, %v2204, %v2498
  %v2500 = vsel %vm1639, %v2213, %v2499
  %v2501 = vsel %vm1641, %v2222, %v2500
  %v2502 = vsel %vm1643, %v2231, %v2501
  %v2503 = vsel %vm1645, %v2240, %v2502
  %v2504 = vsel %vm1647, %v2249, %v2503
  %v2505 = vsel %vm1635, %v2267, %v2258
  %v2506 = vsel %vm1637, %v2276, %v2505
  %v2507 = vsel %vm1639, %v2285, %v2506
  %v2508 = vsel %vm1641, %v2294, %v2507
  %v2509 = vsel %vm1643, %v2303, %v2508
  %v2510 = vsel %vm1645, %v2312, %v2509
  %v2511 = vsel %vm1647, %v2321, %v2510
  %v2512 = vsel %vm1635, %v2339, %v2330
  %v2513 = vsel %vm1637, %v2348, %v2512
  %v2514 = vsel %vm1639, %v2357, %v2513
  %v2515 = vsel %vm1641, %v2366, %v2514
  %v2516 = vsel %vm1643, %v2375, %v2515
  %v2517 = vsel %vm1645, %v2384, %v2516
  %v2518 = vsel %vm1647, %v2393, %v2517
  %v2519 = vsel %vm1635, %v2411, %v2402
  %v2520 = vsel %vm1637, %v2420, %v2519
  %v2521 = vsel %vm1639, %v2429, %v2520
  %v2522 = vsel %vm1641, %v2438, %v2521
  %v2523 = vsel %vm1643, %v2447, %v2522
  %v2524 = vsel %vm1645, %v2456, %v2523
  %v2525 = vsel %vm1647, %v2465, %v2524
  %v2530 = vmax.f32 %v2174, %v2504
  %v2531 = vmax.f32 %v2175, %v2511
  %v2532 = vmax.f32 %v2176, %v2518
  %v2533 = vmax.f32 %v2177, %v2525
  %2534 = vst [vmem:[#allocation4] sm:$0xff] %v2530
  %2535 = vst [vmem:[#allocation4 + $0x8] sm:$0xff] %v2531
  %2536 = vst [vmem:[#allocation4 + $0x10] sm:$0xff] %v2532
  %2537 = vst [vmem:[#allocation4 + $0x18] sm:$0xff] %v2533
  %v2538 = vld [vmem:[#allocation5] sm:$0xff]
  %v2539 = vld [vmem:[#allocation5 + $0x8] sm:$0xff]
  %v2540 = vld [vmem:[#allocation5 + $0x10] sm:$0xff]
  %v2541 = vld [vmem:[#allocation5 + $0x18] sm:$0xff]
  %v2542 = vmin.f32 %v1183, %v1184
  %v2543 = vmin.f32 %v2542, %v1185
  %v2544 = vmin.f32 %v2543, %v1186
  %v2545 = vrot.slane %v2544, 4
  %v2546 = vmin.f32 %v2544, %v2545
  %v2547 = vrot.slane %v2546, 2
  %v2548 = vmin.f32 %v2546, %v2547
  %v2549 = vrot.slane %v2548, 1
  %v2550 = vmin.f32 %v2548, %v2549
  %v2551 = vmin.f32 %v1187, %v1188
  %v2552 = vmin.f32 %v2551, %v1189
  %v2553 = vmin.f32 %v2552, %v1190
  %v2554 = vrot.slane %v2553, 4
  %v2555 = vmin.f32 %v2553, %v2554
  %v2556 = vrot.slane %v2555, 2
  %v2557 = vmin.f32 %v2555, %v2556
  %v2558 = vrot.slane %v2557, 1
  %v2559 = vmin.f32 %v2557, %v2558
  %v2560 = vmin.f32 %v1191, %v1192
  %v2561 = vmin.f32 %v2560, %v1193
  %v2562 = vmin.f32 %v2561, %v1194
  %v2563 = vrot.slane %v2562, 4
  %v2564 = vmin.f32 %v2562, %v2563
  %v2565 = vrot.slane %v2564, 2
  %v2566 = vmin.f32 %v2564, %v2565
  %v2567 = vrot.slane %v2566, 1
  %v2568 = vmin.f32 %v2566, %v2567
  %v2569 = vmin.f32 %v1195, %v1196
  %v2570 = vmin.f32 %v2569, %v1197
  %v2571 = vmin.f32 %v2570, %v1198
  %v2572 = vrot.slane %v2571, 4
  %v2573 = vmin.f32 %v2571, %v2572
  %v2574 = vrot.slane %v2573, 2
  %v2575 = vmin.f32 %v2573, %v2574
  %v2576 = vrot.slane %v2575, 1
  %v2577 = vmin.f32 %v2575, %v2576
  %v2578 = vmin.f32 %v1199, %v1200
  %v2579 = vmin.f32 %v2578, %v1201
  %v2580 = vmin.f32 %v2579, %v1202
  %v2581 = vrot.slane %v2580, 4
  %v2582 = vmin.f32 %v2580, %v2581
  %v2583 = vrot.slane %v2582, 2
  %v2584 = vmin.f32 %v2582, %v2583
  %v2585 = vrot.slane %v2584, 1
  %v2586 = vmin.f32 %v2584, %v2585
  %v2587 = vmin.f32 %v1203, %v1204
  %v2588 = vmin.f32 %v2587, %v1205
  %v2589 = vmin.f32 %v2588, %v1206
  %v2590 = vrot.slane %v2589, 4
  %v2591 = vmin.f32 %v2589, %v2590
  %v2592 = vrot.slane %v2591, 2
  %v2593 = vmin.f32 %v2591, %v2592
  %v2594 = vrot.slane %v2593, 1
  %v2595 = vmin.f32 %v2593, %v2594
  %v2596 = vmin.f32 %v1207, %v1208
  %v2597 = vmin.f32 %v2596, %v1209
  %v2598 = vmin.f32 %v2597, %v1210
  %v2599 = vrot.slane %v2598, 4
  %v2600 = vmin.f32 %v2598, %v2599
  %v2601 = vrot.slane %v2600, 2
  %v2602 = vmin.f32 %v2600, %v2601
  %v2603 = vrot.slane %v2602, 1
  %v2604 = vmin.f32 %v2602, %v2603
  %v2605 = vmin.f32 %v1211, %v1212
  %v2606 = vmin.f32 %v2605, %v1213
  %v2607 = vmin.f32 %v2606, %v1214
  %v2608 = vrot.slane %v2607, 4
  %v2609 = vmin.f32 %v2607, %v2608
  %v2610 = vrot.slane %v2609, 2
  %v2611 = vmin.f32 %v2609, %v2610
  %v2612 = vrot.slane %v2611, 1
  %v2613 = vmin.f32 %v2611, %v2612
  %v2614 = vmin.f32 %v1215, %v1216
  %v2615 = vmin.f32 %v2614, %v1217
  %v2616 = vmin.f32 %v2615, %v1218
  %v2617 = vrot.slane %v2616, 4
  %v2618 = vmin.f32 %v2616, %v2617
  %v2619 = vrot.slane %v2618, 2
  %v2620 = vmin.f32 %v2618, %v2619
  %v2621 = vrot.slane %v2620, 1
  %v2622 = vmin.f32 %v2620, %v2621
  %v2623 = vmin.f32 %v1219, %v1220
  %v2624 = vmin.f32 %v2623, %v1221
  %v2625 = vmin.f32 %v2624, %v1222
  %v2626 = vrot.slane %v2625, 4
  %v2627 = vmin.f32 %v2625, %v2626
  %v2628 = vrot.slane %v2627, 2
  %v2629 = vmin.f32 %v2627, %v2628
  %v2630 = vrot.slane %v2629, 1
  %v2631 = vmin.f32 %v2629, %v2630
  %v2632 = vmin.f32 %v1223, %v1224
  %v2633 = vmin.f32 %v2632, %v1225
  %v2634 = vmin.f32 %v2633, %v1226
  %v2635 = vrot.slane %v2634, 4
  %v2636 = vmin.f32 %v2634, %v2635
  %v2637 = vrot.slane %v2636, 2
  %v2638 = vmin.f32 %v2636, %v2637
  %v2639 = vrot.slane %v2638, 1
  %v2640 = vmin.f32 %v2638, %v2639
  %v2641 = vmin.f32 %v1227, %v1228
  %v2642 = vmin.f32 %v2641, %v1229
  %v2643 = vmin.f32 %v2642, %v1230
  %v2644 = vrot.slane %v2643, 4
  %v2645 = vmin.f32 %v2643, %v2644
  %v2646 = vrot.slane %v2645, 2
  %v2647 = vmin.f32 %v2645, %v2646
  %v2648 = vrot.slane %v2647, 1
  %v2649 = vmin.f32 %v2647, %v2648
  %v2650 = vmin.f32 %v1231, %v1232
  %v2651 = vmin.f32 %v2650, %v1233
  %v2652 = vmin.f32 %v2651, %v1234
  %v2653 = vrot.slane %v2652, 4
  %v2654 = vmin.f32 %v2652, %v2653
  %v2655 = vrot.slane %v2654, 2
  %v2656 = vmin.f32 %v2654, %v2655
  %v2657 = vrot.slane %v2656, 1
  %v2658 = vmin.f32 %v2656, %v2657
  %v2659 = vmin.f32 %v1235, %v1236
  %v2660 = vmin.f32 %v2659, %v1237
  %v2661 = vmin.f32 %v2660, %v1238
  %v2662 = vrot.slane %v2661, 4
  %v2663 = vmin.f32 %v2661, %v2662
  %v2664 = vrot.slane %v2663, 2
  %v2665 = vmin.f32 %v2663, %v2664
  %v2666 = vrot.slane %v2665, 1
  %v2667 = vmin.f32 %v2665, %v2666
  %v2668 = vmin.f32 %v1239, %v1240
  %v2669 = vmin.f32 %v2668, %v1241
  %v2670 = vmin.f32 %v2669, %v1242
  %v2671 = vrot.slane %v2670, 4
  %v2672 = vmin.f32 %v2670, %v2671
  %v2673 = vrot.slane %v2672, 2
  %v2674 = vmin.f32 %v2672, %v2673
  %v2675 = vrot.slane %v2674, 1
  %v2676 = vmin.f32 %v2674, %v2675
  %v2677 = vmin.f32 %v1243, %v1244
  %v2678 = vmin.f32 %v2677, %v1245
  %v2679 = vmin.f32 %v2678, %v1246
  %v2680 = vrot.slane %v2679, 4
  %v2681 = vmin.f32 %v2679, %v2680
  %v2682 = vrot.slane %v2681, 2
  %v2683 = vmin.f32 %v2681, %v2682
  %v2684 = vrot.slane %v2683, 1
  %v2685 = vmin.f32 %v2683, %v2684
  %v2686 = vmin.f32 %v1247, %v1248
  %v2687 = vmin.f32 %v2686, %v1249
  %v2688 = vmin.f32 %v2687, %v1250
  %v2689 = vrot.slane %v2688, 4
  %v2690 = vmin.f32 %v2688, %v2689
  %v2691 = vrot.slane %v2690, 2
  %v2692 = vmin.f32 %v2690, %v2691
  %v2693 = vrot.slane %v2692, 1
  %v2694 = vmin.f32 %v2692, %v2693
  %v2695 = vmin.f32 %v1251, %v1252
  %v2696 = vmin.f32 %v2695, %v1253
  %v2697 = vmin.f32 %v2696, %v1254
  %v2698 = vrot.slane %v2697, 4
  %v2699 = vmin.f32 %v2697, %v2698
  %v2700 = vrot.slane %v2699, 2
  %v2701 = vmin.f32 %v2699, %v2700
  %v2702 = vrot.slane %v2701, 1
  %v2703 = vmin.f32 %v2701, %v2702
  %v2704 = vmin.f32 %v1255, %v1256
  %v2705 = vmin.f32 %v2704, %v1257
  %v2706 = vmin.f32 %v2705, %v1258
  %v2707 = vrot.slane %v2706, 4
  %v2708 = vmin.f32 %v2706, %v2707
  %v2709 = vrot.slane %v2708, 2
  %v2710 = vmin.f32 %v2708, %v2709
  %v2711 = vrot.slane %v2710, 1
  %v2712 = vmin.f32 %v2710, %v2711
  %v2713 = vmin.f32 %v1259, %v1260
  %v2714 = vmin.f32 %v2713, %v1261
  %v2715 = vmin.f32 %v2714, %v1262
  %v2716 = vrot.slane %v2715, 4
  %v2717 = vmin.f32 %v2715, %v2716
  %v2718 = vrot.slane %v2717, 2
  %v2719 = vmin.f32 %v2717, %v2718
  %v2720 = vrot.slane %v2719, 1
  %v2721 = vmin.f32 %v2719, %v2720
  %v2722 = vmin.f32 %v1263, %v1264
  %v2723 = vmin.f32 %v2722, %v1265
  %v2724 = vmin.f32 %v2723, %v1266
  %v2725 = vrot.slane %v2724, 4
  %v2726 = vmin.f32 %v2724, %v2725
  %v2727 = vrot.slane %v2726, 2
  %v2728 = vmin.f32 %v2726, %v2727
  %v2729 = vrot.slane %v2728, 1
  %v2730 = vmin.f32 %v2728, %v2729
  %v2731 = vmin.f32 %v1267, %v1268
  %v2732 = vmin.f32 %v2731, %v1269
  %v2733 = vmin.f32 %v2732, %v1270
  %v2734 = vrot.slane %v2733, 4
  %v2735 = vmin.f32 %v2733, %v2734
  %v2736 = vrot.slane %v2735, 2
  %v2737 = vmin.f32 %v2735, %v2736
  %v2738 = vrot.slane %v2737, 1
  %v2739 = vmin.f32 %v2737, %v2738
  %v2740 = vmin.f32 %v1271, %v1272
  %v2741 = vmin.f32 %v2740, %v1273
  %v2742 = vmin.f32 %v2741, %v1274
  %v2743 = vrot.slane %v2742, 4
  %v2744 = vmin.f32 %v2742, %v2743
  %v2745 = vrot.slane %v2744, 2
  %v2746 = vmin.f32 %v2744, %v2745
  %v2747 = vrot.slane %v2746, 1
  %v2748 = vmin.f32 %v2746, %v2747
  %v2749 = vmin.f32 %v1275, %v1276
  %v2750 = vmin.f32 %v2749, %v1277
  %v2751 = vmin.f32 %v2750, %v1278
  %v2752 = vrot.slane %v2751, 4
  %v2753 = vmin.f32 %v2751, %v2752
  %v2754 = vrot.slane %v2753, 2
  %v2755 = vmin.f32 %v2753, %v2754
  %v2756 = vrot.slane %v2755, 1
  %v2757 = vmin.f32 %v2755, %v2756
  %v2758 = vmin.f32 %v1279, %v1280
  %v2759 = vmin.f32 %v2758, %v1281
  %v2760 = vmin.f32 %v2759, %v1282
  %v2761 = vrot.slane %v2760, 4
  %v2762 = vmin.f32 %v2760, %v2761
  %v2763 = vrot.slane %v2762, 2
  %v2764 = vmin.f32 %v2762, %v2763
  %v2765 = vrot.slane %v2764, 1
  %v2766 = vmin.f32 %v2764, %v2765
  %v2767 = vmin.f32 %v1283, %v1284
  %v2768 = vmin.f32 %v2767, %v1285
  %v2769 = vmin.f32 %v2768, %v1286
  %v2770 = vrot.slane %v2769, 4
  %v2771 = vmin.f32 %v2769, %v2770
  %v2772 = vrot.slane %v2771, 2
  %v2773 = vmin.f32 %v2771, %v2772
  %v2774 = vrot.slane %v2773, 1
  %v2775 = vmin.f32 %v2773, %v2774
  %v2776 = vmin.f32 %v1287, %v1288
  %v2777 = vmin.f32 %v2776, %v1289
  %v2778 = vmin.f32 %v2777, %v1290
  %v2779 = vrot.slane %v2778, 4
  %v2780 = vmin.f32 %v2778, %v2779
  %v2781 = vrot.slane %v2780, 2
  %v2782 = vmin.f32 %v2780, %v2781
  %v2783 = vrot.slane %v2782, 1
  %v2784 = vmin.f32 %v2782, %v2783
  %v2785 = vmin.f32 %v1291, %v1292
  %v2786 = vmin.f32 %v2785, %v1293
  %v2787 = vmin.f32 %v2786, %v1294
  %v2788 = vrot.slane %v2787, 4
  %v2789 = vmin.f32 %v2787, %v2788
  %v2790 = vrot.slane %v2789, 2
  %v2791 = vmin.f32 %v2789, %v2790
  %v2792 = vrot.slane %v2791, 1
  %v2793 = vmin.f32 %v2791, %v2792
  %v2794 = vmin.f32 %v1295, %v1296
  %v2795 = vmin.f32 %v2794, %v1297
  %v2796 = vmin.f32 %v2795, %v1298
  %v2797 = vrot.slane %v2796, 4
  %v2798 = vmin.f32 %v2796, %v2797
  %v2799 = vrot.slane %v2798, 2
  %v2800 = vmin.f32 %v2798, %v2799
  %v2801 = vrot.slane %v2800, 1
  %v2802 = vmin.f32 %v2800, %v2801
  %v2803 = vmin.f32 %v1299, %v1300
  %v2804 = vmin.f32 %v2803, %v1301
  %v2805 = vmin.f32 %v2804, %v1302
  %v2806 = vrot.slane %v2805, 4
  %v2807 = vmin.f32 %v2805, %v2806
  %v2808 = vrot.slane %v2807, 2
  %v2809 = vmin.f32 %v2807, %v2808
  %v2810 = vrot.slane %v2809, 1
  %v2811 = vmin.f32 %v2809, %v2810
  %v2812 = vmin.f32 %v1303, %v1304
  %v2813 = vmin.f32 %v2812, %v1305
  %v2814 = vmin.f32 %v2813, %v1306
  %v2815 = vrot.slane %v2814, 4
  %v2816 = vmin.f32 %v2814, %v2815
  %v2817 = vrot.slane %v2816, 2
  %v2818 = vmin.f32 %v2816, %v2817
  %v2819 = vrot.slane %v2818, 1
  %v2820 = vmin.f32 %v2818, %v2819
  %v2821 = vmin.f32 %v1307, %v1308
  %v2822 = vmin.f32 %v2821, %v1309
  %v2823 = vmin.f32 %v2822, %v1310
  %v2824 = vrot.slane %v2823, 4
  %v2825 = vmin.f32 %v2823, %v2824
  %v2826 = vrot.slane %v2825, 2
  %v2827 = vmin.f32 %v2825, %v2826
  %v2828 = vrot.slane %v2827, 1
  %v2829 = vmin.f32 %v2827, %v2828
  %v2862 = vsel %vm1635, %v2559, %v2550
  %v2863 = vsel %vm1637, %v2568, %v2862
  %v2864 = vsel %vm1639, %v2577, %v2863
  %v2865 = vsel %vm1641, %v2586, %v2864
  %v2866 = vsel %vm1643, %v2595, %v2865
  %v2867 = vsel %vm1645, %v2604, %v2866
  %v2868 = vsel %vm1647, %v2613, %v2867
  %v2869 = vsel %vm1635, %v2631, %v2622
  %v2870 = vsel %vm1637, %v2640, %v2869
  %v2871 = vsel %vm1639, %v2649, %v2870
  %v2872 = vsel %vm1641, %v2658, %v2871
  %v2873 = vsel %vm1643, %v2667, %v2872
  %v2874 = vsel %vm1645, %v2676, %v2873
  %v2875 = vsel %vm1647, %v2685, %v2874
  %v2876 = vsel %vm1635, %v2703, %v2694
  %v2877 = vsel %vm1637, %v2712, %v2876
  %v2878 = vsel %vm1639, %v2721, %v2877
  %v2879 = vsel %vm1641, %v2730, %v2878
  %v2880 = vsel %vm1643, %v2739, %v2879
  %v2881 = vsel %vm1645, %v2748, %v2880
  %v2882 = vsel %vm1647, %v2757, %v2881
  %v2883 = vsel %vm1635, %v2775, %v2766
  %v2884 = vsel %vm1637, %v2784, %v2883
  %v2885 = vsel %vm1639, %v2793, %v2884
  %v2886 = vsel %vm1641, %v2802, %v2885
  %v2887 = vsel %vm1643, %v2811, %v2886
  %v2888 = vsel %vm1645, %v2820, %v2887
  %v2889 = vsel %vm1647, %v2829, %v2888
  %v2894 = vmin.f32 %v2538, %v2868
  %v2895 = vmin.f32 %v2539, %v2875
  %v2896 = vmin.f32 %v2540, %v2882
  %v2897 = vmin.f32 %v2541, %v2889
  %2898 = vst [vmem:[#allocation5] sm:$0xff] %v2894
  %2899 = vst [vmem:[#allocation5 + $0x8] sm:$0xff] %v2895
  %2900 = vst [vmem:[#allocation5 + $0x10] sm:$0xff] %v2896
  %2901 = vst [vmem:[#allocation5 + $0x18] sm:$0xff] %v2897
  // Predicated region
  $region34: #{pna_forward.6} parent=0 // pred_check
    %p2902 = pneg %p26
  $region35: #{pna_forward.6} parent=0 // pred_check_branch
    %2904 = sbr.rel (%p2902) target = $region37
  $region36: #{pna_forward.6} parent=0 // pred_region
    %v2905 = vld [vmem:[#allocation2] sm:$0xff]
    %v2906 = vld [vmem:[#allocation2 + $0x8] sm:$0xff]
    %v2907 = vld [vmem:[#allocation2 + $0x10] sm:$0xff]
    %v2908 = vld [vmem:[#allocation2 + $0x18] sm:$0xff]
    %v2909 = vmul.f32 %v2905, 0.03125
    %v2910 = vmul.f32 %v2906, 0.03125
    %v2911 = vmul.f32 %v2907, 0.03125
    %v2912 = vmul.f32 %v2908, 0.03125
    %v2913 = vld [vmem:[#allocation3] sm:$0xff]
    %v2914 = vld [vmem:[#allocation3 + $0x8] sm:$0xff]
    %v2915 = vld [vmem:[#allocation3 + $0x10] sm:$0xff]
    %v2916 = vld [vmem:[#allocation3 + $0x18] sm:$0xff]
    %v2917 = vmul.f32 %v2913, 0.03125
    %v2918 = vmul.f32 %v2914, 0.03125
    %v2919 = vmul.f32 %v2915, 0.03125
    %v2920 = vmul.f32 %v2916, 0.03125
    %v2921 = vmul.f32 %v2909, %v2909
    %v2922 = vmul.f32 %v2910, %v2910
    %v2923 = vmul.f32 %v2911, %v2911
    %v2924 = vmul.f32 %v2912, %v2912
    %v2925 = vsub.f32 %v2917, %v2921
    %v2926 = vsub.f32 %v2918, %v2922
    %v2927 = vsub.f32 %v2919, %v2923
    %v2928 = vsub.f32 %v2920, %v2924
    %v2929 = vmax.f32 %v2925, 0.0
    %v2930 = vmax.f32 %v2926, 0.0
    %v2931 = vmax.f32 %v2927, 0.0
    %v2932 = vmax.f32 %v2928, 0.0
    %v2933 = vadd.f32 %v2929, 1e-05
    %v2934 = vadd.f32 %v2930, 1e-05
    %v2935 = vadd.f32 %v2931, 1e-05
    %v2936 = vadd.f32 %v2932, 1e-05
    %v2937 = vrsqrt.pop %v2933
    %v2938 = vmul.f32 %v2937, %v2933
    %v2939 = vmul.f32 %v2938, %v2937
    %v2940 = vmul.f32 0.5, %v2939
    %v2941 = vsub.f32 1.5, %v2940
    %v2942 = vmul.f32 %v2937, %v2941
    %v2943 = vmul.f32 %v2933, %v2942
    %vm2944 = vcmp.eq.f32.partialorder %v2933, inf
    %v2945 = vsel %vm2944, %v2933, %v2943
    %vm2946 = vcmp.eq.f32.partialorder %v2933, 0.0
    %v2947 = vand.u32 %v2933, 2147483648
    %v2948 = vsel %vm2946, %v2947, %v2945
    %v2949 = vrsqrt.pop %v2934
    %v2950 = vmul.f32 %v2949, %v2934
    %v2951 = vmul.f32 %v2950, %v2949
    %v2952 = vmul.f32 0.5, %v2951
    %v2953 = vsub.f32 1.5, %v2952
    %v2954 = vmul.f32 %v2949, %v2953
    %v2955 = vmul.f32 %v2934, %v2954
    %vm2956 = vcmp.eq.f32.partialorder %v2934, inf
    %v2957 = vsel %vm2956, %v2934, %v2955
    %vm2958 = vcmp.eq.f32.partialorder %v2934, 0.0
    %v2959 = vand.u32 %v2934, 2147483648
    %v2960 = vsel %vm2958, %v2959, %v2957
    %v2961 = vrsqrt.pop %v2935
    %v2962 = vmul.f32 %v2961, %v2935
    %v2963 = vmul.f32 %v2962, %v2961
    %v2964 = vmul.f32 0.5, %v2963
    %v2965 = vsub.f32 1.5, %v2964
    %v2966 = vmul.f32 %v2961, %v2965
    %v2967 = vmul.f32 %v2935, %v2966
    %vm2968 = vcmp.eq.f32.partialorder %v2935, inf
    %v2969 = vsel %vm2968, %v2935, %v2967
    %vm2970 = vcmp.eq.f32.partialorder %v2935, 0.0
    %v2971 = vand.u32 %v2935, 2147483648
    %v2972 = vsel %vm2970, %v2971, %v2969
    %v2973 = vrsqrt.pop %v2936
    %v2974 = vmul.f32 %v2973, %v2936
    %v2975 = vmul.f32 %v2974, %v2973
    %v2976 = vmul.f32 0.5, %v2975
    %v2977 = vsub.f32 1.5, %v2976
    %v2978 = vmul.f32 %v2973, %v2977
    %v2979 = vmul.f32 %v2936, %v2978
    %vm2980 = vcmp.eq.f32.partialorder %v2936, inf
    %v2981 = vsel %vm2980, %v2936, %v2979
    %vm2982 = vcmp.eq.f32.partialorder %v2936, 0.0
    %v2983 = vand.u32 %v2936, 2147483648
    %v2984 = vsel %vm2982, %v2983, %v2981
    %v2985 = vld [vmem:[#allocation4] sm:$0xff]
    %v2986 = vld [vmem:[#allocation4 + $0x8] sm:$0xff]
    %v2987 = vld [vmem:[#allocation4 + $0x10] sm:$0xff]
    %v2988 = vld [vmem:[#allocation4 + $0x18] sm:$0xff]
    %v2989 = vld [vmem:[#allocation5] sm:$0xff]
    %v2990 = vld [vmem:[#allocation5 + $0x8] sm:$0xff]
    %v2991 = vld [vmem:[#allocation5 + $0x10] sm:$0xff]
    %v2992 = vld [vmem:[#allocation5 + $0x18] sm:$0xff]
    %v2993 = vld [vmem:[%s0] sm:$0xff]
    %v2994 = vld [vmem:[%s0 + $0x8] sm:$0xff]
    %v2995 = vld [vmem:[%s0 + $0x10] sm:$0xff]
    %v2996 = vld [vmem:[%s0 + $0x18] sm:$0xff]
    %v2997 = vpack.c.bf16 %v2993, %v2993
    %v2998 = vpack.c.bf16 %v2994, %v2994
    %v2999 = vpack.c.bf16 %v2995, %v2995
    %v3000 = vpack.c.bf16 %v2996, %v2996
    %v3001 = vpack.c.bf16 %v2909, %v2909
    %v3002 = vpack.c.bf16 %v2910, %v2910
    %v3003 = vpack.c.bf16 %v2911, %v2911
    %v3004 = vpack.c.bf16 %v2912, %v2912
    %v3005 = vpack.c.bf16 %v2985, %v2985
    %v3006 = vpack.c.bf16 %v2986, %v2986
    %v3007 = vpack.c.bf16 %v2987, %v2987
    %v3008 = vpack.c.bf16 %v2988, %v2988
    %v3009 = vpack.c.bf16 %v2989, %v2989
    %v3010 = vpack.c.bf16 %v2990, %v2990
    %v3011 = vpack.c.bf16 %v2991, %v2991
    %v3012 = vpack.c.bf16 %v2992, %v2992
    %v3013 = vpack.c.bf16 %v2948, %v2948
    %v3014 = vpack.c.bf16 %v2960, %v2960
    %v3015 = vpack.c.bf16 %v2972, %v2972
    %v3016 = vpack.c.bf16 %v2984, %v2984
    %v3021 = vunpack.c.l.b16 %v2997
    %v3022 = vunpack.c.l.b16 %v2998
    %v3023 = vunpack.c.l.b16 %v2999
    %v3024 = vunpack.c.l.b16 %v3000
    %v3025 = vpack.c.b16 %v3022, %v3021
    %v3026 = vpack.c.b16 %v3024, %v3023
    %v3033 = vunpack.c.l.b16 %v3001
    %v3034 = vunpack.c.l.b16 %v3002
    %v3035 = vunpack.c.l.b16 %v3003
    %v3036 = vunpack.c.l.b16 %v3004
    %v3037 = vpack.c.b16 %v3034, %v3033
    %v3038 = vpack.c.b16 %v3036, %v3035
    %v3045 = vunpack.c.l.b16 %v3005
    %v3046 = vunpack.c.l.b16 %v3006
    %v3047 = vunpack.c.l.b16 %v3007
    %v3048 = vunpack.c.l.b16 %v3008
    %v3049 = vpack.c.b16 %v3046, %v3045
    %v3050 = vpack.c.b16 %v3048, %v3047
    %v3057 = vunpack.c.l.b16 %v3009
    %v3058 = vunpack.c.l.b16 %v3010
    %v3059 = vunpack.c.l.b16 %v3011
    %v3060 = vunpack.c.l.b16 %v3012
    %v3061 = vpack.c.b16 %v3058, %v3057
    %v3062 = vpack.c.b16 %v3060, %v3059
    %v3069 = vunpack.c.l.b16 %v3013
    %v3070 = vunpack.c.l.b16 %v3014
    %v3071 = vunpack.c.l.b16 %v3015
    %v3072 = vunpack.c.l.b16 %v3016
    %v3073 = vpack.c.b16 %v3070, %v3069
    %v3074 = vpack.c.b16 %v3072, %v3071
    %v3077 = vld [vmem:[%s5] sm:$0xf]
    %v3078 = vld [vmem:[%s5 + $0x4] sm:$0xf]
    %v3079 = vld [vmem:[%s5 + $0x8] sm:$0xf]
    %v3080 = vld [vmem:[%s5 + $0xc] sm:$0xf]
    %v3081 = vld [vmem:[%s5 + $0x10] sm:$0xf]
    %v3082 = vld [vmem:[%s5 + $0x14] sm:$0xf]
    %v3083 = vld [vmem:[%s5 + $0x18] sm:$0xf]
    %v3084 = vld [vmem:[%s5 + $0x1c] sm:$0xf]
    %v3085 = vld [vmem:[%s5 + $0x20] sm:$0xf]
    %v3086 = vld [vmem:[%s5 + $0x24] sm:$0xf]
    %v3087 = vld [vmem:[%s5 + $0x28] sm:$0xf]
    %v3088 = vld [vmem:[%s5 + $0x2c] sm:$0xf]
    %v3089 = vld [vmem:[%s5 + $0x30] sm:$0xf]
    %v3090 = vld [vmem:[%s5 + $0x34] sm:$0xf]
    %v3091 = vld [vmem:[%s5 + $0x38] sm:$0xf]
    %v3092 = vld [vmem:[%s5 + $0x3c] sm:$0xf]
    %v3093 = vld [vmem:[%s5 + $0x40] sm:$0xf]
    %v3094 = vld [vmem:[%s5 + $0x44] sm:$0xf]
    %v3095 = vld [vmem:[%s5 + $0x48] sm:$0xf]
    %v3096 = vld [vmem:[%s5 + $0x4c] sm:$0xf]
    %v3097 = vld [vmem:[%s5 + $0x50] sm:$0xf]
    %v3098 = vld [vmem:[%s5 + $0x54] sm:$0xf]
    %v3099 = vld [vmem:[%s5 + $0x58] sm:$0xf]
    %v3100 = vld [vmem:[%s5 + $0x5c] sm:$0xf]
    %v3101 = vld [vmem:[%s5 + $0x60] sm:$0xf]
    %v3102 = vld [vmem:[%s5 + $0x64] sm:$0xf]
    %v3103 = vld [vmem:[%s5 + $0x68] sm:$0xf]
    %v3104 = vld [vmem:[%s5 + $0x6c] sm:$0xf]
    %v3105 = vld [vmem:[%s5 + $0x70] sm:$0xf]
    %v3106 = vld [vmem:[%s5 + $0x74] sm:$0xf]
    %v3107 = vld [vmem:[%s5 + $0x78] sm:$0xf]
    %v3108 = vld [vmem:[%s5 + $0x7c] sm:$0xf]
    %v3109 = vld [vmem:[%s5 + $0x80] sm:$0xf]
    %v3110 = vld [vmem:[%s5 + $0x84] sm:$0xf]
    %v3111 = vld [vmem:[%s5 + $0x88] sm:$0xf]
    %v3112 = vld [vmem:[%s5 + $0x8c] sm:$0xf]
    %v3113 = vld [vmem:[%s5 + $0x90] sm:$0xf]
    %v3114 = vld [vmem:[%s5 + $0x94] sm:$0xf]
    %v3115 = vld [vmem:[%s5 + $0x98] sm:$0xf]
    %v3116 = vld [vmem:[%s5 + $0x9c] sm:$0xf]
    %v3117 = vld [vmem:[%s5 + $0xa0] sm:$0xf]
    %v3118 = vld [vmem:[%s5 + $0xa4] sm:$0xf]
    %v3119 = vld [vmem:[%s5 + $0xa8] sm:$0xf]
    %v3120 = vld [vmem:[%s5 + $0xac] sm:$0xf]
    %v3121 = vld [vmem:[%s5 + $0xb0] sm:$0xf]
    %v3122 = vld [vmem:[%s5 + $0xb4] sm:$0xf]
    %v3123 = vld [vmem:[%s5 + $0xb8] sm:$0xf]
    %v3124 = vld [vmem:[%s5 + $0xbc] sm:$0xf]
    %v3125 = vld [vmem:[%s5 + $0xc0] sm:$0xf]
    %v3126 = vld [vmem:[%s5 + $0xc4] sm:$0xf]
    %v3127 = vld [vmem:[%s5 + $0xc8] sm:$0xf]
    %v3128 = vld [vmem:[%s5 + $0xcc] sm:$0xf]
    %v3129 = vld [vmem:[%s5 + $0xd0] sm:$0xf]
    %v3130 = vld [vmem:[%s5 + $0xd4] sm:$0xf]
    %v3131 = vld [vmem:[%s5 + $0xd8] sm:$0xf]
    %v3132 = vld [vmem:[%s5 + $0xdc] sm:$0xf]
    %v3133 = vld [vmem:[%s5 + $0xe0] sm:$0xf]
    %v3134 = vld [vmem:[%s5 + $0xe4] sm:$0xf]
    %v3135 = vld [vmem:[%s5 + $0xe8] sm:$0xf]
    %v3136 = vld [vmem:[%s5 + $0xec] sm:$0xf]
    %v3137 = vld [vmem:[%s5 + $0xf0] sm:$0xf]
    %v3138 = vld [vmem:[%s5 + $0xf4] sm:$0xf]
    %v3139 = vld [vmem:[%s5 + $0xf8] sm:$0xf]
    %v3140 = vld [vmem:[%s5 + $0xfc] sm:$0xf]
    %v3141 = vld [vmem:[%s5 + $0x100] sm:$0xf]
    %v3142 = vld [vmem:[%s5 + $0x104] sm:$0xf]
    %v3143 = vld [vmem:[%s5 + $0x108] sm:$0xf]
    %v3144 = vld [vmem:[%s5 + $0x10c] sm:$0xf]
    %v3145 = vld [vmem:[%s5 + $0x110] sm:$0xf]
    %v3146 = vld [vmem:[%s5 + $0x114] sm:$0xf]
    %v3147 = vld [vmem:[%s5 + $0x118] sm:$0xf]
    %v3148 = vld [vmem:[%s5 + $0x11c] sm:$0xf]
    %v3149 = vld [vmem:[%s5 + $0x120] sm:$0xf]
    %v3150 = vld [vmem:[%s5 + $0x124] sm:$0xf]
    %v3151 = vld [vmem:[%s5 + $0x128] sm:$0xf]
    %v3152 = vld [vmem:[%s5 + $0x12c] sm:$0xf]
    %v3153 = vld [vmem:[%s5 + $0x130] sm:$0xf]
    %v3154 = vld [vmem:[%s5 + $0x134] sm:$0xf]
    %v3155 = vld [vmem:[%s5 + $0x138] sm:$0xf]
    %v3156 = vld [vmem:[%s5 + $0x13c] sm:$0xf]
    %v3157 = vld [vmem:[%s6] sm:$0x1]
    %v3159 = vperm.slane %v3157, 0
    %v3241 = vunpack.c.l.b16 %v3077
    %v3242 = vunpack.c.l.b16 %v3078
    %v3243 = vunpack.c.l.b16 %v3079
    %v3244 = vunpack.c.l.b16 %v3080
    %v3245 = vunpack.c.l.b16 %v3081
    %v3246 = vunpack.c.l.b16 %v3082
    %v3247 = vunpack.c.l.b16 %v3083
    %v3248 = vunpack.c.l.b16 %v3084
    %v3249 = vunpack.c.l.b16 %v3085
    %v3250 = vunpack.c.l.b16 %v3086
    %v3251 = vunpack.c.l.b16 %v3087
    %v3252 = vunpack.c.l.b16 %v3088
    %v3253 = vunpack.c.l.b16 %v3089
    %v3254 = vunpack.c.l.b16 %v3090
    %v3255 = vunpack.c.l.b16 %v3091
    %v3256 = vunpack.c.l.b16 %v3092
    %v3257 = vunpack.c.l.b16 %v3093
    %v3258 = vunpack.c.l.b16 %v3094
    %v3259 = vunpack.c.l.b16 %v3095
    %v3260 = vunpack.c.l.b16 %v3096
    %v3261 = vunpack.c.l.b16 %v3097
    %v3262 = vunpack.c.l.b16 %v3098
    %v3263 = vunpack.c.l.b16 %v3099
    %v3264 = vunpack.c.l.b16 %v3100
    %v3265 = vunpack.c.l.b16 %v3101
    %v3266 = vunpack.c.l.b16 %v3102
    %v3267 = vunpack.c.l.b16 %v3103
    %v3268 = vunpack.c.l.b16 %v3104
    %v3269 = vunpack.c.l.b16 %v3105
    %v3270 = vunpack.c.l.b16 %v3106
    %v3271 = vunpack.c.l.b16 %v3107
    %v3272 = vunpack.c.l.b16 %v3108
    %v3273 = vunpack.c.l.b16 %v3109
    %v3274 = vunpack.c.l.b16 %v3110
    %v3275 = vunpack.c.l.b16 %v3111
    %v3276 = vunpack.c.l.b16 %v3112
    %v3277 = vunpack.c.l.b16 %v3113
    %v3278 = vunpack.c.l.b16 %v3114
    %v3279 = vunpack.c.l.b16 %v3115
    %v3280 = vunpack.c.l.b16 %v3116
    %v3281 = vunpack.c.l.b16 %v3117
    %v3282 = vunpack.c.l.b16 %v3118
    %v3283 = vunpack.c.l.b16 %v3119
    %v3284 = vunpack.c.l.b16 %v3120
    %v3285 = vunpack.c.l.b16 %v3121
    %v3286 = vunpack.c.l.b16 %v3122
    %v3287 = vunpack.c.l.b16 %v3123
    %v3288 = vunpack.c.l.b16 %v3124
    %v3289 = vunpack.c.l.b16 %v3125
    %v3290 = vunpack.c.l.b16 %v3126
    %v3291 = vunpack.c.l.b16 %v3127
    %v3292 = vunpack.c.l.b16 %v3128
    %v3293 = vunpack.c.l.b16 %v3129
    %v3294 = vunpack.c.l.b16 %v3130
    %v3295 = vunpack.c.l.b16 %v3131
    %v3296 = vunpack.c.l.b16 %v3132
    %v3297 = vunpack.c.l.b16 %v3133
    %v3298 = vunpack.c.l.b16 %v3134
    %v3299 = vunpack.c.l.b16 %v3135
    %v3300 = vunpack.c.l.b16 %v3136
    %v3301 = vunpack.c.l.b16 %v3137
    %v3302 = vunpack.c.l.b16 %v3138
    %v3303 = vunpack.c.l.b16 %v3139
    %v3304 = vunpack.c.l.b16 %v3140
    %v3305 = vunpack.c.l.b16 %v3141
    %v3306 = vunpack.c.l.b16 %v3142
    %v3307 = vunpack.c.l.b16 %v3143
    %v3308 = vunpack.c.l.b16 %v3144
    %v3309 = vunpack.c.l.b16 %v3145
    %v3310 = vunpack.c.l.b16 %v3146
    %v3311 = vunpack.c.l.b16 %v3147
    %v3312 = vunpack.c.l.b16 %v3148
    %v3313 = vunpack.c.l.b16 %v3149
    %v3314 = vunpack.c.l.b16 %v3150
    %v3315 = vunpack.c.l.b16 %v3151
    %v3316 = vunpack.c.l.b16 %v3152
    %v3317 = vunpack.c.l.b16 %v3153
    %v3318 = vunpack.c.l.b16 %v3154
    %v3319 = vunpack.c.l.b16 %v3155
    %v3320 = vunpack.c.l.b16 %v3156
    %v3321 = vpack.c.b16 %v3242, %v3241
    %v3322 = vpack.c.b16 %v3244, %v3243
    %v3323 = vpack.c.b16 %v3246, %v3245
    %v3324 = vpack.c.b16 %v3248, %v3247
    %v3325 = vpack.c.b16 %v3250, %v3249
    %v3326 = vpack.c.b16 %v3252, %v3251
    %v3327 = vpack.c.b16 %v3254, %v3253
    %v3328 = vpack.c.b16 %v3256, %v3255
    %v3329 = vpack.c.b16 %v3258, %v3257
    %v3330 = vpack.c.b16 %v3260, %v3259
    %v3331 = vpack.c.b16 %v3262, %v3261
    %v3332 = vpack.c.b16 %v3264, %v3263
    %v3333 = vpack.c.b16 %v3266, %v3265
    %v3334 = vpack.c.b16 %v3268, %v3267
    %v3335 = vpack.c.b16 %v3270, %v3269
    %v3336 = vpack.c.b16 %v3272, %v3271
    %v3337 = vpack.c.b16 %v3274, %v3273
    %v3338 = vpack.c.b16 %v3276, %v3275
    %v3339 = vpack.c.b16 %v3278, %v3277
    %v3340 = vpack.c.b16 %v3280, %v3279
    %v3341 = vpack.c.b16 %v3282, %v3281
    %v3342 = vpack.c.b16 %v3284, %v3283
    %v3343 = vpack.c.b16 %v3286, %v3285
    %v3344 = vpack.c.b16 %v3288, %v3287
    %v3345 = vpack.c.b16 %v3290, %v3289
    %v3346 = vpack.c.b16 %v3292, %v3291
    %v3347 = vpack.c.b16 %v3294, %v3293
    %v3348 = vpack.c.b16 %v3296, %v3295
    %v3349 = vpack.c.b16 %v3298, %v3297
    %v3350 = vpack.c.b16 %v3300, %v3299
    %v3351 = vpack.c.b16 %v3302, %v3301
    %v3352 = vpack.c.b16 %v3304, %v3303
    %v3353 = vpack.c.b16 %v3306, %v3305
    %v3354 = vpack.c.b16 %v3308, %v3307
    %v3355 = vpack.c.b16 %v3310, %v3309
    %v3356 = vpack.c.b16 %v3312, %v3311
    %v3357 = vpack.c.b16 %v3314, %v3313
    %v3358 = vpack.c.b16 %v3316, %v3315
    %v3359 = vpack.c.b16 %v3318, %v3317
    %v3360 = vpack.c.b16 %v3320, %v3319
    %3401 = vmatpush.bf16.msra.mxu0 %v3328
    %3402 = vmatpush.bf16.msra.mxu0 %v3327
    %3403 = vmatpush.bf16.msra.mxu0 %v3326
    %3404 = vmatpush.bf16.msra.mxu0 %v3325
    %3405 = vmatpush.bf16.msra.mxu0 %v3324
    %3406 = vmatpush.bf16.msra.mxu0 %v3323
    %3407 = vmatpush.bf16.msra.mxu0 %v3322
    %3408 = vmatpush.bf16.msra.mxu0 %v3321
    %3409 = vmatmul.bf16.gmra.mxu0 %v3025
    %v3410 = vpop.f32.mrf.mxu0
    %v3411 = vadd.f32 %v3159, %v3410
    %v3412 = vpop.f32.mrf.mxu0
    %v3413 = vadd.f32 %v3159, %v3412
    %3414 = vmatmul.bf16.gmra.mxu0 %v3026
    %v3415 = vpop.f32.mrf.mxu0
    %v3416 = vadd.f32 %v3159, %v3415
    %v3417 = vpop.f32.mrf.mxu0
    %v3418 = vadd.f32 %v3159, %v3417
    %3419 = vdwg.mxu0
    %3420 = vmatpush.bf16.msra.mxu0 %v3336
    %3421 = vmatpush.bf16.msra.mxu0 %v3335
    %3422 = vmatpush.bf16.msra.mxu0 %v3334
    %3423 = vmatpush.bf16.msra.mxu0 %v3333
    %3424 = vmatpush.bf16.msra.mxu0 %v3332
    %3425 = vmatpush.bf16.msra.mxu0 %v3331
    %3426 = vmatpush.bf16.msra.mxu0 %v3330
    %3427 = vmatpush.bf16.msra.mxu0 %v3329
    %3428 = vmatmul.bf16.gmra.mxu0 %v3037
    %v3429 = vpop.f32.mrf.mxu0
    %v3430 = vadd.f32 %v3411, %v3429
    %v3431 = vpop.f32.mrf.mxu0
    %v3432 = vadd.f32 %v3413, %v3431
    %3433 = vmatmul.bf16.gmra.mxu0 %v3038
    %v3434 = vpop.f32.mrf.mxu0
    %v3435 = vadd.f32 %v3416, %v3434
    %v3436 = vpop.f32.mrf.mxu0
    %v3437 = vadd.f32 %v3418, %v3436
    %3438 = vdwg.mxu0
    %3439 = vmatpush.bf16.msra.mxu0 %v3344
    %3440 = vmatpush.bf16.msra.mxu0 %v3343
    %3441 = vmatpush.bf16.msra.mxu0 %v3342
    %3442 = vmatpush.bf16.msra.mxu0 %v3341
    %3443 = vmatpush.bf16.msra.mxu0 %v3340
    %3444 = vmatpush.bf16.msra.mxu0 %v3339
    %3445 = vmatpush.bf16.msra.mxu0 %v3338
    %3446 = vmatpush.bf16.msra.mxu0 %v3337
    %3447 = vmatmul.bf16.gmra.mxu0 %v3049
    %v3448 = vpop.f32.mrf.mxu0
    %v3449 = vadd.f32 %v3430, %v3448
    %v3450 = vpop.f32.mrf.mxu0
    %v3451 = vadd.f32 %v3432, %v3450
    %3452 = vmatmul.bf16.gmra.mxu0 %v3050
    %v3453 = vpop.f32.mrf.mxu0
    %v3454 = vadd.f32 %v3435, %v3453
    %v3455 = vpop.f32.mrf.mxu0
    %v3456 = vadd.f32 %v3437, %v3455
    %3457 = vdwg.mxu0
    %3458 = vmatpush.bf16.msra.mxu0 %v3352
    %3459 = vmatpush.bf16.msra.mxu0 %v3351
    %3460 = vmatpush.bf16.msra.mxu0 %v3350
    %3461 = vmatpush.bf16.msra.mxu0 %v3349
    %3462 = vmatpush.bf16.msra.mxu0 %v3348
    %3463 = vmatpush.bf16.msra.mxu0 %v3347
    %3464 = vmatpush.bf16.msra.mxu0 %v3346
    %3465 = vmatpush.bf16.msra.mxu0 %v3345
    %3466 = vmatmul.bf16.gmra.mxu0 %v3061
    %v3467 = vpop.f32.mrf.mxu0
    %v3468 = vadd.f32 %v3449, %v3467
    %v3469 = vpop.f32.mrf.mxu0
    %v3470 = vadd.f32 %v3451, %v3469
    %3471 = vmatmul.bf16.gmra.mxu0 %v3062
    %v3472 = vpop.f32.mrf.mxu0
    %v3473 = vadd.f32 %v3454, %v3472
    %v3474 = vpop.f32.mrf.mxu0
    %v3475 = vadd.f32 %v3456, %v3474
    %3476 = vdwg.mxu0
    %3477 = vmatpush.bf16.msra.mxu0 %v3360
    %3478 = vmatpush.bf16.msra.mxu0 %v3359
    %3479 = vmatpush.bf16.msra.mxu0 %v3358
    %3480 = vmatpush.bf16.msra.mxu0 %v3357
    %3481 = vmatpush.bf16.msra.mxu0 %v3356
    %3482 = vmatpush.bf16.msra.mxu0 %v3355
    %3483 = vmatpush.bf16.msra.mxu0 %v3354
    %3484 = vmatpush.bf16.msra.mxu0 %v3353
    %3485 = vmatmul.bf16.gmra.mxu0 %v3073
    %v3486 = vpop.f32.mrf.mxu0
    %v3487 = vadd.f32 %v3468, %v3486
    %v3488 = vpop.f32.mrf.mxu0
    %v3489 = vadd.f32 %v3470, %v3488
    %3490 = vmatmul.bf16.gmra.mxu0 %v3074
    %v3491 = vpop.f32.mrf.mxu0
    %v3492 = vadd.f32 %v3473, %v3491
    %v3493 = vpop.f32.mrf.mxu0
    %v3494 = vadd.f32 %v3475, %v3493
    %3495 = vdwg.mxu0
    %v3496 = vadd.f32 %v3487, %v2993
    %v3497 = vadd.f32 %v3489, %v2994
    %v3498 = vadd.f32 %v3492, %v2995
    %v3499 = vadd.f32 %v3494, %v2996
    %3500 = vst [vmem:[%s7] sm:$0xff] %v3496
    %3501 = vst [vmem:[%s7 + $0x8] sm:$0xff] %v3497
    %3502 = vst [vmem:[%s7 + $0x10] sm:$0xff] %v3498
    %3503 = vst [vmem:[%s7 + $0x18] sm:$0xff] %v3499
  $region37: #{pna_forward.6} parent=0 // pred_fallthru
    _
  // Predicated region
  $region38: #{pna_forward.6} parent=0 // pred_check
    _
  $region39: #{pna_forward.6} parent=0 // pred_check_branch
    %3505 = sbr.rel (0) target = $region41
  $region40: #{pna_forward.6} parent=0 // pred_region
    _
  $region41: #{pna_forward.6} parent=0 // pred_fallthru
    _
  // Predicated region
  $region42: #{pna_forward.6} parent=0 // pred_check
    _
  $region43: #{pna_forward.6} parent=0 // pred_check_branch
    %3507 = sbr.rel (0) target = $region45
  $region44: #{pna_forward.6} parent=0 // pred_region
    _
  $region45: #{pna_forward.6} parent=0 // pred_fallthru
    _

</llo_original>
